<compile_context>
chip_gen: v7x
topology: tpu7x:2x2x1
jax: 0.10.0
libtpu: 0.0.40
codegen_flags: <defaults>
</compile_context>

<pallas_src>
import functools

import jax
import jax.numpy as jnp
from jax.experimental import pallas as pl
from jax.experimental.pallas import tpu as pltpu

EPS = 1e-12
_MXU_DTYPE = jnp.float32  # set to jnp.bfloat16 on v5e/v6e/v7x for peak MXU rate


# ----------------------------------------------------------------------------
# Pallas kernels
# ----------------------------------------------------------------------------
def _cln_kernel(x_ref, g_ref, b_ref, o_ref):
    """Channel-wise norm of one (batch, time-tile): gamma*(x-mu)/(sqrt(var)+eps)+beta.

    x_ref: (1, C, Tt)   g_ref/b_ref: (C, 1)   o_ref: (1, C, Tt)
    """
    x = x_ref[0]                                           # (C, Tt)
    mean = jnp.mean(x, axis=0, keepdims=True)              # (1, Tt)
    var = jnp.mean(x * x, axis=0, keepdims=True) - mean * mean
    var = jnp.maximum(var, 0.0)                            # guard sqrt(negative)
    o_ref[0] = g_ref[...] * (x - mean) / (jnp.sqrt(var) + EPS) + b_ref[...]


def _bilstm_kernel(gf_ref, gb_ref, whh_ref, hf_ref, hb_ref,
                   hf_c, cf_c, hb_c, cb_c):
    """Fused bidirectional LSTM recurrence over one time chunk.

    gf_ref/gb_ref : (Tc, B, 4H)  precomputed x @ W_ih + b per direction
                    (gate columns in (i, f, o, g) order)
    whh_ref       : (2, H, 4H)   recurrent weights (fwd, bwd), same gate order
    hf_ref/hb_ref : (Tc, B, H)   per-direction hidden-state output chunks
    *_c           : (B, H) f32   VMEM scratch carries, persistent across chunks
    """
    Tc, B, H4 = gf_ref.shape
    H = H4 // 4

    @pl.when(pl.program_id(0) == 0)
    def _():
        z = jnp.zeros((B, H), jnp.float32)
        hf_c[...] = z
        cf_c[...] = z
        hb_c[...] = z
        cb_c[...] = z

    # Hoist recurrent-weight loads (and MXU-dtype cast) out of the serial loop.
    w_f = whh_ref[0].astype(_MXU_DTYPE)
    w_b = whh_ref[1].astype(_MXU_DTYPE)

    def cell(g_pre, h, c, whh):
        gates = g_pre.astype(jnp.float32) + jnp.dot(
            h.astype(_MXU_DTYPE), whh, preferred_element_type=jnp.float32)
        # One wide sigmoid (i, f, o) + one tanh (g): fewer EUP launches on the
        # latency-critical serial chain.  Post-matmul math stays f32.
        sig = jax.nn.sigmoid(gates[:, :3 * H])
        g = jnp.tanh(gates[:, 3 * H:])
        i = sig[:, :H]
        f = sig[:, H:2 * H]
        o = sig[:, 2 * H:3 * H]
        c_new = f * c + i * g
        h_new = o * jnp.tanh(c_new)
        return h_new, c_new

    def body(s, carry):
        hf, cf, hb, cb = carry
        # forward direction consumes local step s
        hf, cf = cell(gf_ref[s], hf, cf, w_f)
        # backward direction consumes local step Tc-1-s of its (reversed-index)
        # chunk: no [::-1] HBM copies anywhere
        t = Tc - 1 - s
        hb, cb = cell(gb_ref[t], hb, cb, w_b)
        hf_ref[s] = hf
        hb_ref[t] = hb
        return hf, cf, hb, cb

    carry0 = (hf_c[...], cf_c[...], hb_c[...], cb_c[...])
    hf, cf, hb, cb = jax.lax.fori_loop(
        0, Tc, body, carry0, unroll=True if Tc <= 32 else 8)
    hf_c[...] = hf
    cf_c[...] = cf
    hb_c[...] = hb
    cb_c[...] = cb


# ----------------------------------------------------------------------------
# pallas_call wrappers
# ----------------------------------------------------------------------------
def channel_norm(x, gamma, beta, t_tile=512):
    """x: (B, C, T), gamma/beta: (C, 1) -> (B, C, T).  Tiled over (B, T)."""
    B, C, T = x.shape
    Tt = T if T <= t_tile else t_tile
    nt = pl.cdiv(T, Tt)
    return pl.pallas_call(
        _cln_kernel,
        out_shape=jax.ShapeDtypeStruct((B, C, T), jnp.float32),
        grid=(B, nt),
        in_specs=[
            pl.BlockSpec((1, C, Tt), lambda b, t: (b, 0, t)),
            pl.BlockSpec((C, 1), lambda b, t: (0, 0)),
            pl.BlockSpec((C, 1), lambda b, t: (0, 0)),
        ],
        out_specs=pl.BlockSpec((1, C, Tt), lambda b, t: (b, 0, t)),
        compiler_params=pltpu.CompilerParams(
            dimension_semantics=("parallel", "parallel")),
    )(x.astype(jnp.float32), gamma, beta)


def bilstm_recurrence(gates, w_hh, *, t_chunk=128):
    """Fused fwd+bwd LSTM recurrence, chunked over time.

    gates: (2, T, B, 4H)  pre-activation gates per direction (fwd=0, bwd=1)
    w_hh : (2, H, 4H)
    Returns (hf, hb): (T, B, H) each.
    """
    _, T, B, H4 = gates.shape
    H = H4 // 4
    # T_CHUNK budget: VMEM-resident ~ 2x(double-buffer) * (2 gate + 2 out chunks).
    # Re-derive per chip (v7x has 64 MiB physical VMEM) for production shapes.
    Tc = min(t_chunk, T)
    n_chunks = pl.cdiv(T, Tc)
    T_pad = n_chunks * Tc
    if T_pad != T:
        # Zero pre-activation gate rows keep the zero (h, c) state exactly intact,
        # so the backward direction (which consumes the pad first) stays correct.
        gates = jnp.pad(gates, ((0, 0), (0, T_pad - T), (0, 0), (0, 0)))

    hf, hb = pl.pallas_call(
        _bilstm_kernel,
        out_shape=(
            jax.ShapeDtypeStruct((T_pad, B, H), jnp.float32),
            jax.ShapeDtypeStruct((T_pad, B, H), jnp.float32),
        ),
        grid=(n_chunks,),
        in_specs=[
            # forward gates: chunk i of direction 0
            pl.BlockSpec((None, Tc, B, H4), lambda i: (0, i, 0, 0)),
            # backward gates: chunk num_chunks-1-i of direction 1 (reversed walk)
            pl.BlockSpec((None, Tc, B, H4), lambda i: (1, n_chunks - 1 - i, 0, 0)),
            pl.BlockSpec((2, H, H4), lambda i: (0, 0, 0)),
        ],
        out_specs=(
            pl.BlockSpec((Tc, B, H), lambda i: (i, 0, 0)),
            pl.BlockSpec((Tc, B, H), lambda i: (n_chunks - 1 - i, 0, 0)),
        ),
        scratch_shapes=[pltpu.VMEM((B, H), jnp.float32) for _ in range(4)],
        compiler_params=pltpu.CompilerParams(
            dimension_semantics=("arbitrary",)),
    )(gates, gates, w_hh)

    if T_pad != T:
        hf, hb = hf[:T], hb[:T]
    return hf, hb


# ----------------------------------------------------------------------------
# LSTMLayer / LSTMBlock / Separator (bidirectional, causal=False)
# ----------------------------------------------------------------------------
def _permute_gate_cols(w):
    """PyTorch gate order (i,f,g,o) -> (i,f,o,g) along the last (4H) dim."""
    H = w.shape[-1] // 4
    return jnp.concatenate(
        [w[..., :2 * H], w[..., 3 * H:], w[..., 2 * H:3 * H]], axis=-1)


def lstm_layer_apply(p, x_tbc):
    """Matches LSTMLayer.forward, in (T, B, C) layout: (T,B,C_in) -> (T,B,C_out)."""
    x = x_tbc.astype(jnp.float32)

    # Hoisted input projection for BOTH directions in one batched GEMM, gate
    # columns pre-permuted to the kernel's (i,f,o,g) order.
    w_ih = jnp.stack([_permute_gate_cols(p["w_ih_f"]),
                      _permute_gate_cols(p["w_ih_b"])])            # (2, C_in, 4H)
    b = jnp.stack([_permute_gate_cols(p["b_f"]),
                   _permute_gate_cols(p["b_b"])])[:, None]          # (2, 1, 1, 4H)
    w_hh = jnp.stack([_permute_gate_cols(p["w_hh_f"]),
                      _permute_gate_cols(p["w_hh_b"])])             # (2, H, 4H)

    gates = jnp.einsum("tbc,dch->dtbh", x, w_ih,
                       preferred_element_type=jnp.float32) + b      # (2, T, B, 4H)

    hf, hb = bilstm_recurrence(gates, w_hh)                         # (T, B, H) x2

    # fc(concat(hf, hb)) with split weights: avoids the concat HBM pass.
    H = hf.shape[-1]
    y = (jnp.einsum("tbh,hd->tbd", hf, p["w_fc"][:H])
         + jnp.einsum("tbh,hd->tbd", hb, p["w_fc"][H:])
         + p["b_fc"])                                               # (T, B, C_out)
    return y


def lstm_block_apply(layer_params, x_tbc):
    out = x_tbc
    for p in layer_params:
        out = lstm_layer_apply(p, out)
    return out


def separator_apply(params, x, n_sources):
    """Matches Separator.forward: (B, n_bases, T) -> (B, n_sources, n_bases, T)."""
    B, _, T = x.shape
    xn = channel_norm(x.astype(jnp.float32), params["gamma"], params["beta"])
    # Single boundary transpose into the internal (T, B, C) layout.
    out = jnp.transpose(xn, (2, 0, 1))
    skip = None
    for block_params in params["blocks"]:
        out = lstm_block_apply(block_params, out)
        skip = out if skip is None else out + skip
    # Single boundary transpose back + final reshape.
    y = jnp.transpose(skip, (1, 2, 0))                              # (B, 2N, T)
    return y.reshape(B, n_sources, -1, T)


# ----------------------------------------------------------------------------
# Deterministic parameter construction (shapes match nn.LSTM / nn.Linear)
# ----------------------------------------------------------------------------
def make_layer_params(key, in_channels, out_channels):
    H = out_channels // 2                      # bidirectional: hidden per direction
    k_lstm = 1.0 / jnp.sqrt(H)
    k_fc = 1.0 / jnp.sqrt(out_channels)
    keys = jax.random.split(key, 10)

    def u(k, shape, scale):
        return jax.random.uniform(k, shape, jnp.float32, -scale, scale)

    p = {}
    # forward direction (PyTorch W_ih: (4H, C_in); stored transposed, torch gate order)
    p["w_ih_f"] = u(keys[0], (in_channels, 4 * H), k_lstm)
    p["w_hh_f"] = u(keys[1], (H, 4 * H), k_lstm)
    p["b_f"] = u(keys[2], (1, 4 * H), k_lstm) + u(keys[3], (1, 4 * H), k_lstm)
    # backward direction
    p["w_ih_b"] = u(keys[4], (in_channels, 4 * H), k_lstm)
    p["w_hh_b"] = u(keys[5], (H, 4 * H), k_lstm)
    p["b_b"] = u(keys[6], (1, 4 * H), k_lstm) + u(keys[7], (1, 4 * H), k_lstm)
    # fc: Linear(out_channels, out_channels), stored transposed
    p["w_fc"] = u(keys[8], (out_channels, out_channels), k_fc)
    p["b_fc"] = u(keys[9], (1, out_channels), k_fc)
    return p


def make_block_params(key, in_channels, out_channels, hidden_channels=None,
                      num_layers=2):
    if hidden_channels is None:
        hidden_channels = out_channels
    keys = jax.random.split(key, num_layers)
    params = []
    for idx in range(num_layers):
        if idx == 0:
            params.append(make_layer_params(keys[idx], in_channels, hidden_channels))
        elif idx == num_layers - 1:
            params.append(make_layer_params(keys[idx], hidden_channels, out_channels))
        else:
            params.append(make_layer_params(keys[idx], hidden_channels, hidden_channels))
    return params


def make_separator_params(key, n_bases, num_blocks, num_layers, n_sources=2):
    hidden_channels = n_sources * n_bases      # Separator.__init__ overrides it
    keys = jax.random.split(key, num_blocks)
    blocks = []
    for idx in range(num_blocks):
        in_ch = n_bases if idx == 0 else n_sources * n_bases
        blocks.append(make_block_params(keys[idx], in_ch, n_sources * n_bases,
                                        hidden_channels, num_layers))
    return {
        "gamma": jnp.ones((n_bases, 1), jnp.float32),   # _reset_parameters: 1
        "beta": jnp.zeros((n_bases, 1), jnp.float32),   # _reset_parameters: 0
        "blocks": blocks,
    }


# ----------------------------------------------------------------------------
# Pure-JAX reference (straightforward PyTorch-style formulation)
# ----------------------------------------------------------------------------
def _ref_lstm_dir(x_tbc, w_ih_t, w_hh_t, b):
    B = x_tbc.shape[1]
    H = w_hh_t.shape[0]

    def step(carry, x_t):
        h, c = carry
        gates = x_t @ w_ih_t + h @ w_hh_t + b[0]
        i, f, g, o = jnp.split(gates, 4, axis=-1)
        c = jax.nn.sigmoid(f) * c + jax.nn.sigmoid(i) * jnp.tanh(g)
        h = jax.nn.sigmoid(o) * jnp.tanh(c)
        return (h, c), h

    init = (jnp.zeros((B, H), jnp.float32), jnp.zeros((B, H), jnp.float32))
    _, hs = jax.lax.scan(step, init, x_tbc)
    return hs


def _ref_layer(p, x_bct):
    x_tbc = jnp.transpose(x_bct, (2, 0, 1))
    h_f = _ref_lstm_dir(x_tbc, p["w_ih_f"], p["w_hh_f"], p["b_f"])
    h_b = _ref_lstm_dir(x_tbc[::-1], p["w_ih_b"], p["w_hh_b"], p["b_b"])[::-1]
    h = jnp.concatenate([h_f, h_b], axis=-1)
    y = h @ p["w_fc"] + p["b_fc"][0]
    return jnp.transpose(y, (1, 2, 0))


def _ref_block(layer_params, x_bct):
    out = x_bct
    for p in layer_params:
        out = _ref_layer(p, out)
    return out


def _ref_separator(params, x, n_sources):
    B, _, T = x.shape
    mean = x.mean(axis=1, keepdims=True)
    var = jnp.maximum((x * x).mean(axis=1, keepdims=True) - mean * mean, 0.0)
    xn = params["gamma"][None] * (x - mean) / (jnp.sqrt(var) + EPS) + params["beta"][None]
    skip = 0.0
    out = xn
    for bp in params["blocks"]:
        out = _ref_block(bp, out)
        skip = out + skip
    return skip.reshape(B, n_sources, -1, T)


# ----------------------------------------------------------------------------
if __name__ == "__main__":
    B, N_BASES, T = 2, 16, 16
    N_SOURCES, NUM_BLOCKS, NUM_LAYERS = 2, 2, 2

    key = jax.random.PRNGKey(0)
    k_x, k_p = jax.random.split(key)
    x = jax.random.normal(k_x, (B, N_BASES, T), dtype=jnp.float32)
    params = make_separator_params(k_p, N_BASES, NUM_BLOCKS, NUM_LAYERS, N_SOURCES)

    fn = jax.jit(functools.partial(separator_apply, params, n_sources=N_SOURCES))
    out = jax.block_until_ready(fn(x))
    assert out.shape == (B, N_SOURCES, N_BASES, T), out.shape

    ref = jax.block_until_ready(_ref_separator(params, x, N_SOURCES))
    max_err = float(jnp.max(jnp.abs(out - ref)))
    assert jnp.allclose(out, ref, atol=1e-4, rtol=1e-4), max_err

    print("KERNEL_OK")
</pallas_src>

<mosaic_0001>
module attributes {stable_mosaic.version = 11 : i64} {
  func.func @_cln_kernel(%arg0: i32, %arg1: i32, %arg2: memref<1x16x16xf32, #tpu.memory_space<vmem>>, %arg3: memref<16x1xf32, #tpu.memory_space<vmem>>, %arg4: memref<16x1xf32, #tpu.memory_space<vmem>>, %arg5: memref<1x16x16xf32, #tpu.memory_space<vmem>>) attributes {dimension_semantics = [#tpu.dimension_semantics<parallel>, #tpu.dimension_semantics<parallel>], iteration_bounds = array<i64: 2, 1>, scalar_prefetch = 0 : i64, scratch_operands = 0 : i64, tpu.core_type = #tpu.core_type<tc>, window_params = [{transform_indices = @transform_0, window_bounds = array<i64: 1, 16, 16>}, {pipeline_mode = #tpu.pipeline_mode<synchronous>, transform_indices = @transform_1, window_bounds = array<i64: 16, 1>}, {pipeline_mode = #tpu.pipeline_mode<synchronous>, transform_indices = @transform_2, window_bounds = array<i64: 16, 1>}, {transform_indices = @transform_3, window_bounds = array<i64: 1, 16, 16>}]} {
    %c0 = arith.constant 0 : index
    %c0_0 = arith.constant 0 : index
    %c0_1 = arith.constant 0 : index
    %0 = vector.load %arg2[%c0, %c0_0, %c0_1] : memref<1x16x16xf32, #tpu.memory_space<vmem>>, vector<1x16x16xf32>
    %1 = vector.shape_cast %0 : vector<1x16x16xf32> to vector<16x16xf32>
    %cst = arith.constant dense<0.000000e+00> : vector<16xf32>
    %2 = vector.multi_reduction <add>, %1, %cst [0] : vector<16x16xf32> to vector<16xf32>
    %3 = vector.shape_cast %2 : vector<16xf32> to vector<1x16xf32>
    %cst_2 = arith.constant 1.600000e+01 : f32
    %4 = vector.broadcast %cst_2 : f32 to vector<1x16xf32>
    %5 = arith.divf %3, %4 : vector<1x16xf32>
    %6 = arith.mulf %1, %1 : vector<16x16xf32>
    %cst_3 = arith.constant dense<0.000000e+00> : vector<16xf32>
    %7 = vector.multi_reduction <add>, %6, %cst_3 [0] : vector<16x16xf32> to vector<16xf32>
    %8 = vector.shape_cast %7 : vector<16xf32> to vector<1x16xf32>
    %cst_4 = arith.constant 1.600000e+01 : f32
    %9 = vector.broadcast %cst_4 : f32 to vector<1x16xf32>
    %10 = arith.divf %8, %9 : vector<1x16xf32>
    %11 = arith.mulf %5, %5 : vector<1x16xf32>
    %12 = arith.subf %10, %11 : vector<1x16xf32>
    %cst_5 = arith.constant 0.000000e+00 : f32
    %13 = vector.broadcast %cst_5 : f32 to vector<1x16xf32>
    %14 = arith.maximumf %12, %13 : vector<1x16xf32>
    %c0_6 = arith.constant 0 : index
    %c0_7 = arith.constant 0 : index
    %15 = vector.load %arg3[%c0_6, %c0_7] : memref<16x1xf32, #tpu.memory_space<vmem>>, vector<16x1xf32>
    %16 = vector.broadcast %5 : vector<1x16xf32> to vector<16x16xf32>
    %17 = arith.subf %1, %16 : vector<16x16xf32>
    %18 = vector.broadcast %15 : vector<16x1xf32> to vector<16x16xf32>
    %19 = arith.mulf %18, %17 : vector<16x16xf32>
    %20 = math.sqrt %14 : vector<1x16xf32>
    %cst_8 = arith.constant 9.99999996E-13 : f32
    %21 = vector.broadcast %cst_8 : f32 to vector<1x16xf32>
    %22 = arith.addf %20, %21 : vector<1x16xf32>
    %23 = vector.broadcast %22 : vector<1x16xf32> to vector<16x16xf32>
    %24 = arith.divf %19, %23 : vector<16x16xf32>
    %c0_9 = arith.constant 0 : index
    %c0_10 = arith.constant 0 : index
    %25 = vector.load %arg4[%c0_9, %c0_10] : memref<16x1xf32, #tpu.memory_space<vmem>>, vector<16x1xf32>
    %26 = vector.broadcast %25 : vector<16x1xf32> to vector<16x16xf32>
    %27 = arith.addf %24, %26 : vector<16x16xf32>
    %c0_11 = arith.constant 0 : index
    %c0_12 = arith.constant 0 : index
    %c0_13 = arith.constant 0 : index
    %28 = vector.load %arg5[%c0_11, %c0_12, %c0_13] : memref<1x16x16xf32, #tpu.memory_space<vmem>>, vector<1x16x16xf32>
    %29 = vector.shape_cast %28 : vector<1x16x16xf32> to vector<16x16xf32>
    %30 = vector.shape_cast %27 : vector<16x16xf32> to vector<1x16x16xf32>
    tpu.vector_store %arg5[%c0_11, %c0_12, %c0_13], %30 {strides = array<i32>} : memref<1x16x16xf32, #tpu.memory_space<vmem>>, vector<1x16x16xf32>,
    return
  }
  func.func @transform_0(%arg0: i32, %arg1: i32) -> (i32, i32, i32) {
    %c0_i32 = arith.constant 0 : i32
    %c0_i32_0 = arith.constant 0 : i32
    return %arg0, %c0_i32, %arg1 : i32, i32, i32
  }
  func.func @transform_1(%arg0: i32, %arg1: i32) -> (i32, i32) {
    %c0_i32 = arith.constant 0 : i32
    %c0_i32_0 = arith.constant 0 : i32
    %c0_i32_1 = arith.constant 0 : i32
    return %c0_i32, %c0_i32_0 : i32, i32
  }
  func.func @transform_2(%arg0: i32, %arg1: i32) -> (i32, i32) {
    %c0_i32 = arith.constant 0 : i32
    %c0_i32_0 = arith.constant 0 : i32
    %c0_i32_1 = arith.constant 0 : i32
    return %c0_i32, %c0_i32_0 : i32, i32
  }
  func.func @transform_3(%arg0: i32, %arg1: i32) -> (i32, i32, i32) {
    %c0_i32 = arith.constant 0 : i32
    %c0_i32_0 = arith.constant 0 : i32
    return %arg0, %c0_i32, %arg1 : i32, i32, i32
  }
}

module attributes {stable_mosaic.version = 11 : i64} {
  func.func @_bilstm_kernel(%arg0: i32, %arg1: memref<1x16x2x64xf32, #tpu.memory_space<vmem>>, %arg2: memref<1x16x2x64xf32, #tpu.memory_space<vmem>>, %arg3: memref<2x16x64xf32, #tpu.memory_space<vmem>>, %arg4: memref<16x2x16xf32, #tpu.memory_space<vmem>>, %arg5: memref<16x2x16xf32, #tpu.memory_space<vmem>>, %arg6: memref<2x16xf32, #tpu.memory_space<vmem>>, %arg7: memref<2x16xf32, #tpu.memory_space<vmem>>, %arg8: memref<2x16xf32, #tpu.memory_space<vmem>>, %arg9: memref<2x16xf32, #tpu.memory_space<vmem>>) attributes {dimension_semantics = [#tpu.dimension_semantics<arbitrary>], iteration_bounds = array<i64: 1>, scalar_prefetch = 0 : i64, scratch_operands = 4 : i64, tpu.core_type = #tpu.core_type<tc>, window_params = [{transform_indices = @transform_0, window_bounds = array<i64: 1, 16, 2, 64>}, {transform_indices = @transform_1, window_bounds = array<i64: 1, 16, 2, 64>}, {pipeline_mode = #tpu.pipeline_mode<synchronous>, transform_indices = @transform_2, window_bounds = array<i64: 2, 16, 64>}, {transform_indices = @transform_3, window_bounds = array<i64: 16, 2, 16>}, {transform_indices = @transform_4, window_bounds = array<i64: 16, 2, 16>}]} {
    %c0_i32 = arith.constant 0 : i32
    %0 = arith.cmpi eq, %arg0, %c0_i32 : i32
    %1 = arith.extui %0 : i1 to i32
    %c0_i32_0 = arith.constant 0 : i32
    %2 = arith.cmpi ne, %1, %c0_i32_0 : i32
    scf.if %2 {
      %cst_261 = arith.constant 0.000000e+00 : f32
      %831 = vector.broadcast %cst_261 : f32 to vector<2x16xf32>
      %c0_262 = arith.constant 0 : index
      %c0_263 = arith.constant 0 : index
      %832 = vector.load %arg6[%c0_262, %c0_263] : memref<2x16xf32, #tpu.memory_space<vmem>>, vector<2x16xf32>
      tpu.vector_store %arg6[%c0_262, %c0_263], %831 {strides = array<i32>} : memref<2x16xf32, #tpu.memory_space<vmem>>, vector<2x16xf32>,
      %c0_264 = arith.constant 0 : index
      %c0_265 = arith.constant 0 : index
      %833 = vector.load %arg7[%c0_264, %c0_265] : memref<2x16xf32, #tpu.memory_space<vmem>>, vector<2x16xf32>
      tpu.vector_store %arg7[%c0_264, %c0_265], %831 {strides = array<i32>} : memref<2x16xf32, #tpu.memory_space<vmem>>, vector<2x16xf32>,
      %c0_266 = arith.constant 0 : index
      %c0_267 = arith.constant 0 : index
      %834 = vector.load %arg8[%c0_266, %c0_267] : memref<2x16xf32, #tpu.memory_space<vmem>>, vector<2x16xf32>
      tpu.vector_store %arg8[%c0_266, %c0_267], %831 {strides = array<i32>} : memref<2x16xf32, #tpu.memory_space<vmem>>, vector<2x16xf32>,
      %c0_268 = arith.constant 0 : index
      %c0_269 = arith.constant 0 : index
      %835 = vector.load %arg9[%c0_268, %c0_269] : memref<2x16xf32, #tpu.memory_space<vmem>>, vector<2x16xf32>
      tpu.vector_store %arg9[%c0_268, %c0_269], %831 {strides = array<i32>} : memref<2x16xf32, #tpu.memory_space<vmem>>, vector<2x16xf32>,
    } else {
    }
    %c0 = arith.constant 0 : index
    %c0_1 = arith.constant 0 : index
    %c0_2 = arith.constant 0 : index
    %3 = vector.load %arg3[%c0, %c0_1, %c0_2] : memref<2x16x64xf32, #tpu.memory_space<vmem>>, vector<1x16x64xf32>
    %4 = vector.shape_cast %3 : vector<1x16x64xf32> to vector<16x64xf32>
    %c1 = arith.constant 1 : index
    %c0_3 = arith.constant 0 : index
    %c0_4 = arith.constant 0 : index
    %5 = vector.load %arg3[%c1, %c0_3, %c0_4] : memref<2x16x64xf32, #tpu.memory_space<vmem>>, vector<1x16x64xf32>
    %6 = vector.shape_cast %5 : vector<1x16x64xf32> to vector<16x64xf32>
    %c0_5 = arith.constant 0 : index
    %c0_6 = arith.constant 0 : index
    %7 = vector.load %arg6[%c0_5, %c0_6] : memref<2x16xf32, #tpu.memory_space<vmem>>, vector<2x16xf32>
    %c0_7 = arith.constant 0 : index
    %c0_8 = arith.constant 0 : index
    %8 = vector.load %arg7[%c0_7, %c0_8] : memref<2x16xf32, #tpu.memory_space<vmem>>, vector<2x16xf32>
    %c0_9 = arith.constant 0 : index
    %c0_10 = arith.constant 0 : index
    %9 = vector.load %arg8[%c0_9, %c0_10] : memref<2x16xf32, #tpu.memory_space<vmem>>, vector<2x16xf32>
    %c0_11 = arith.constant 0 : index
    %c0_12 = arith.constant 0 : index
    %10 = vector.load %arg9[%c0_11, %c0_12] : memref<2x16xf32, #tpu.memory_space<vmem>>, vector<2x16xf32>
    %c0_i32_13 = arith.constant 0 : i32
    %c0_14 = arith.constant 0 : index
    %11 = arith.index_cast %c0_i32_13 : i32 to index
    %c0_15 = arith.constant 0 : index
    %c0_16 = arith.constant 0 : index
    %12 = vector.load %arg1[%c0_14, %11, %c0_15, %c0_16] : memref<1x16x2x64xf32, #tpu.memory_space<vmem>>, vector<1x1x2x64xf32>
    %13 = vector.shape_cast %12 : vector<1x1x2x64xf32> to vector<2x64xf32>
    %cst = arith.constant dense<0.000000e+00> : vector<2x64xf32>
    %14 = tpu.matmul %7, %4, %cst {dimension_numbers = #tpu.dot_dimension_numbers<[1], [0], [0], [1], [0, 0, 1, 1], [], []>} : vector<2x16xf32>, vector<16x64xf32>, vector<2x64xf32> -> vector<2x64xf32>
    %15 = arith.addf %13, %14 : vector<2x64xf32>
    %16 = vector.extract_strided_slice %15 {offsets = [0, 0], sizes = [2, 48], strides = [1, 1]} : vector<2x64xf32> to vector<2x48xf32>
    %17 = arith.negf %16 : vector<2x48xf32>
    %18 = math.exp %17 : vector<2x48xf32>
    %cst_17 = arith.constant 1.000000e+00 : f32
    %19 = vector.broadcast %cst_17 : f32 to vector<2x48xf32>
    %20 = arith.addf %19, %18 : vector<2x48xf32>
    %21 = arith.divf %19, %20 : vector<2x48xf32>
    %22 = vector.extract_strided_slice %15 {offsets = [0, 48], sizes = [2, 16], strides = [1, 1]} : vector<2x64xf32> to vector<2x16xf32>
    %23 = math.tanh %22 : vector<2x16xf32>
    %24 = vector.extract_strided_slice %21 {offsets = [0, 0], sizes = [2, 16], strides = [1, 1]} : vector<2x48xf32> to vector<2x16xf32>
    %25 = vector.extract_strided_slice %21 {offsets = [0, 16], sizes = [2, 16], strides = [1, 1]} : vector<2x48xf32> to vector<2x16xf32>
    %26 = vector.extract_strided_slice %21 {offsets = [0, 32], sizes = [2, 16], strides = [1, 1]} : vector<2x48xf32> to vector<2x16xf32>
    %27 = arith.mulf %25, %8 : vector<2x16xf32>
    %28 = arith.mulf %24, %23 : vector<2x16xf32>
    %29 = arith.addf %27, %28 : vector<2x16xf32>
    %30 = math.tanh %29 : vector<2x16xf32>
    %31 = arith.mulf %26, %30 : vector<2x16xf32>
    %c15_i32 = arith.constant 15 : i32
    %32 = arith.subi %c15_i32, %c0_i32_13 : i32
    %c0_18 = arith.constant 0 : index
    %33 = arith.index_cast %32 : i32 to index
    %c0_19 = arith.constant 0 : index
    %c0_20 = arith.constant 0 : index
    %34 = vector.load %arg2[%c0_18, %33, %c0_19, %c0_20] : memref<1x16x2x64xf32, #tpu.memory_space<vmem>>, vector<1x1x2x64xf32>
    %35 = vector.shape_cast %34 : vector<1x1x2x64xf32> to vector<2x64xf32>
    %cst_21 = arith.constant dense<0.000000e+00> : vector<2x64xf32>
    %36 = tpu.matmul %9, %6, %cst_21 {dimension_numbers = #tpu.dot_dimension_numbers<[1], [0], [0], [1], [0, 0, 1, 1], [], []>} : vector<2x16xf32>, vector<16x64xf32>, vector<2x64xf32> -> vector<2x64xf32>
    %37 = arith.addf %35, %36 : vector<2x64xf32>
    %38 = vector.extract_strided_slice %37 {offsets = [0, 0], sizes = [2, 48], strides = [1, 1]} : vector<2x64xf32> to vector<2x48xf32>
    %39 = arith.negf %38 : vector<2x48xf32>
    %40 = math.exp %39 : vector<2x48xf32>
    %cst_22 = arith.constant 1.000000e+00 : f32
    %41 = vector.broadcast %cst_22 : f32 to vector<2x48xf32>
    %42 = arith.addf %41, %40 : vector<2x48xf32>
    %43 = arith.divf %41, %42 : vector<2x48xf32>
    %44 = vector.extract_strided_slice %37 {offsets = [0, 48], sizes = [2, 16], strides = [1, 1]} : vector<2x64xf32> to vector<2x16xf32>
    %45 = math.tanh %44 : vector<2x16xf32>
    %46 = vector.extract_strided_slice %43 {offsets = [0, 0], sizes = [2, 16], strides = [1, 1]} : vector<2x48xf32> to vector<2x16xf32>
    %47 = vector.extract_strided_slice %43 {offsets = [0, 16], sizes = [2, 16], strides = [1, 1]} : vector<2x48xf32> to vector<2x16xf32>
    %48 = vector.extract_strided_slice %43 {offsets = [0, 32], sizes = [2, 16], strides = [1, 1]} : vector<2x48xf32> to vector<2x16xf32>
    %49 = arith.mulf %47, %10 : vector<2x16xf32>
    %50 = arith.mulf %46, %45 : vector<2x16xf32>
    %51 = arith.addf %49, %50 : vector<2x16xf32>
    %52 = math.tanh %51 : vector<2x16xf32>
    %53 = arith.mulf %48, %52 : vector<2x16xf32>
    %54 = arith.index_cast %c0_i32_13 : i32 to index
    %c0_23 = arith.constant 0 : index
    %c0_24 = arith.constant 0 : index
    %55 = vector.load %arg4[%54, %c0_23, %c0_24] : memref<16x2x16xf32, #tpu.memory_space<vmem>>, vector<1x2x16xf32>
    %56 = vector.shape_cast %55 : vector<1x2x16xf32> to vector<2x16xf32>
    %57 = vector.shape_cast %31 : vector<2x16xf32> to vector<1x2x16xf32>
    tpu.vector_store %arg4[%54, %c0_23, %c0_24], %57 {strides = array<i32>} : memref<16x2x16xf32, #tpu.memory_space<vmem>>, vector<1x2x16xf32>,
    %58 = arith.index_cast %32 : i32 to index
    %c0_25 = arith.constant 0 : index
    %c0_26 = arith.constant 0 : index
    %59 = vector.load %arg5[%58, %c0_25, %c0_26] : memref<16x2x16xf32, #tpu.memory_space<vmem>>, vector<1x2x16xf32>
    %60 = vector.shape_cast %59 : vector<1x2x16xf32> to vector<2x16xf32>
    %61 = vector.shape_cast %53 : vector<2x16xf32> to vector<1x2x16xf32>
    tpu.vector_store %arg5[%58, %c0_25, %c0_26], %61 {strides = array<i32>} : memref<16x2x16xf32, #tpu.memory_space<vmem>>, vector<1x2x16xf32>,
    %c1_i32 = arith.constant 1 : i32
    %c0_27 = arith.constant 0 : index
    %62 = arith.index_cast %c1_i32 : i32 to index
    %c0_28 = arith.constant 0 : index
    %c0_29 = arith.constant 0 : index
    %63 = vector.load %arg1[%c0_27, %62, %c0_28, %c0_29] : memref<1x16x2x64xf32, #tpu.memory_space<vmem>>, vector<1x1x2x64xf32>
    %64 = vector.shape_cast %63 : vector<1x1x2x64xf32> to vector<2x64xf32>
    %cst_30 = arith.constant dense<0.000000e+00> : vector<2x64xf32>
    %65 = tpu.matmul %31, %4, %cst_30 {dimension_numbers = #tpu.dot_dimension_numbers<[1], [0], [0], [1], [0, 0, 1, 1], [], []>} : vector<2x16xf32>, vector<16x64xf32>, vector<2x64xf32> -> vector<2x64xf32>
    %66 = arith.addf %64, %65 : vector<2x64xf32>
    %67 = vector.extract_strided_slice %66 {offsets = [0, 0], sizes = [2, 48], strides = [1, 1]} : vector<2x64xf32> to vector<2x48xf32>
    %68 = arith.negf %67 : vector<2x48xf32>
    %69 = math.exp %68 : vector<2x48xf32>
    %cst_31 = arith.constant 1.000000e+00 : f32
    %70 = vector.broadcast %cst_31 : f32 to vector<2x48xf32>
    %71 = arith.addf %70, %69 : vector<2x48xf32>
    %72 = arith.divf %70, %71 : vector<2x48xf32>
    %73 = vector.extract_strided_slice %66 {offsets = [0, 48], sizes = [2, 16], strides = [1, 1]} : vector<2x64xf32> to vector<2x16xf32>
    %74 = math.tanh %73 : vector<2x16xf32>
    %75 = vector.extract_strided_slice %72 {offsets = [0, 0], sizes = [2, 16], strides = [1, 1]} : vector<2x48xf32> to vector<2x16xf32>
    %76 = vector.extract_strided_slice %72 {offsets = [0, 16], sizes = [2, 16], strides = [1, 1]} : vector<2x48xf32> to vector<2x16xf32>
    %77 = vector.extract_strided_slice %72 {offsets = [0, 32], sizes = [2, 16], strides = [1, 1]} : vector<2x48xf32> to vector<2x16xf32>
    %78 = arith.mulf %76, %29 : vector<2x16xf32>
    %79 = arith.mulf %75, %74 : vector<2x16xf32>
    %80 = arith.addf %78, %79 : vector<2x16xf32>
    %81 = math.tanh %80 : vector<2x16xf32>
    %82 = arith.mulf %77, %81 : vector<2x16xf32>
    %c15_i32_32 = arith.constant 15 : i32
    %83 = arith.subi %c15_i32_32, %c1_i32 : i32
    %c0_33 = arith.constant 0 : index
    %84 = arith.index_cast %83 : i32 to index
    %c0_34 = arith.constant 0 : index
    %c0_35 = arith.constant 0 : index
    %85 = vector.load %arg2[%c0_33, %84, %c0_34, %c0_35] : memref<1x16x2x64xf32, #tpu.memory_space<vmem>>, vector<1x1x2x64xf32>
    %86 = vector.shape_cast %85 : vector<1x1x2x64xf32> to vector<2x64xf32>
    %cst_36 = arith.constant dense<0.000000e+00> : vector<2x64xf32>
    %87 = tpu.matmul %53, %6, %cst_36 {dimension_numbers = #tpu.dot_dimension_numbers<[1], [0], [0], [1], [0, 0, 1, 1], [], []>} : vector<2x16xf32>, vector<16x64xf32>, vector<2x64xf32> -> vector<2x64xf32>
    %88 = arith.addf %86, %87 : vector<2x64xf32>
    %89 = vector.extract_strided_slice %88 {offsets = [0, 0], sizes = [2, 48], strides = [1, 1]} : vector<2x64xf32> to vector<2x48xf32>
    %90 = arith.negf %89 : vector<2x48xf32>
    %91 = math.exp %90 : vector<2x48xf32>
    %cst_37 = arith.constant 1.000000e+00 : f32
    %92 = vector.broadcast %cst_37 : f32 to vector<2x48xf32>
    %93 = arith.addf %92, %91 : vector<2x48xf32>
    %94 = arith.divf %92, %93 : vector<2x48xf32>
    %95 = vector.extract_strided_slice %88 {offsets = [0, 48], sizes = [2, 16], strides = [1, 1]} : vector<2x64xf32> to vector<2x16xf32>
    %96 = math.tanh %95 : vector<2x16xf32>
    %97 = vector.extract_strided_slice %94 {offsets = [0, 0], sizes = [2, 16], strides = [1, 1]} : vector<2x48xf32> to vector<2x16xf32>
    %98 = vector.extract_strided_slice %94 {offsets = [0, 16], sizes = [2, 16], strides = [1, 1]} : vector<2x48xf32> to vector<2x16xf32>
    %99 = vector.extract_strided_slice %94 {offsets = [0, 32], sizes = [2, 16], strides = [1, 1]} : vector<2x48xf32> to vector<2x16xf32>
    %100 = arith.mulf %98, %51 : vector<2x16xf32>
    %101 = arith.mulf %97, %96 : vector<2x16xf32>
    %102 = arith.addf %100, %101 : vector<2x16xf32>
    %103 = math.tanh %102 : vector<2x16xf32>
    %104 = arith.mulf %99, %103 : vector<2x16xf32>
    %105 = arith.index_cast %c1_i32 : i32 to index
    %c0_38 = arith.constant 0 : index
    %c0_39 = arith.constant 0 : index
    %106 = vector.load %arg4[%105, %c0_38, %c0_39] : memref<16x2x16xf32, #tpu.memory_space<vmem>>, vector<1x2x16xf32>
    %107 = vector.shape_cast %106 : vector<1x2x16xf32> to vector<2x16xf32>
    %108 = vector.shape_cast %82 : vector<2x16xf32> to vector<1x2x16xf32>
    tpu.vector_store %arg4[%105, %c0_38, %c0_39], %108 {strides = array<i32>} : memref<16x2x16xf32, #tpu.memory_space<vmem>>, vector<1x2x16xf32>,
    %109 = arith.index_cast %83 : i32 to index
    %c0_40 = arith.constant 0 : index
    %c0_41 = arith.constant 0 : index
    %110 = vector.load %arg5[%109, %c0_40, %c0_41] : memref<16x2x16xf32, #tpu.memory_space<vmem>>, vector<1x2x16xf32>
    %111 = vector.shape_cast %110 : vector<1x2x16xf32> to vector<2x16xf32>
    %112 = vector.shape_cast %104 : vector<2x16xf32> to vector<1x2x16xf32>
    tpu.vector_store %arg5[%109, %c0_40, %c0_41], %112 {strides = array<i32>} : memref<16x2x16xf32, #tpu.memory_space<vmem>>, vector<1x2x16xf32>,
    %c2_i32 = arith.constant 2 : i32
    %c0_42 = arith.constant 0 : index
    %113 = arith.index_cast %c2_i32 : i32 to index
    %c0_43 = arith.constant 0 : index
    %c0_44 = arith.constant 0 : index
    %114 = vector.load %arg1[%c0_42, %113, %c0_43, %c0_44] : memref<1x16x2x64xf32, #tpu.memory_space<vmem>>, vector<1x1x2x64xf32>
    %115 = vector.shape_cast %114 : vector<1x1x2x64xf32> to vector<2x64xf32>
    %cst_45 = arith.constant dense<0.000000e+00> : vector<2x64xf32>
    %116 = tpu.matmul %82, %4, %cst_45 {dimension_numbers = #tpu.dot_dimension_numbers<[1], [0], [0], [1], [0, 0, 1, 1], [], []>} : vector<2x16xf32>, vector<16x64xf32>, vector<2x64xf32> -> vector<2x64xf32>
    %117 = arith.addf %115, %116 : vector<2x64xf32>
    %118 = vector.extract_strided_slice %117 {offsets = [0, 0], sizes = [2, 48], strides = [1, 1]} : vector<2x64xf32> to vector<2x48xf32>
    %119 = arith.negf %118 : vector<2x48xf32>
    %120 = math.exp %119 : vector<2x48xf32>
    %cst_46 = arith.constant 1.000000e+00 : f32
    %121 = vector.broadcast %cst_46 : f32 to vector<2x48xf32>
    %122 = arith.addf %121, %120 : vector<2x48xf32>
    %123 = arith.divf %121, %122 : vector<2x48xf32>
    %124 = vector.extract_strided_slice %117 {offsets = [0, 48], sizes = [2, 16], strides = [1, 1]} : vector<2x64xf32> to vector<2x16xf32>
    %125 = math.tanh %124 : vector<2x16xf32>
    %126 = vector.extract_strided_slice %123 {offsets = [0, 0], sizes = [2, 16], strides = [1, 1]} : vector<2x48xf32> to vector<2x16xf32>
    %127 = vector.extract_strided_slice %123 {offsets = [0, 16], sizes = [2, 16], strides = [1, 1]} : vector<2x48xf32> to vector<2x16xf32>
    %128 = vector.extract_strided_slice %123 {offsets = [0, 32], sizes = [2, 16], strides = [1, 1]} : vector<2x48xf32> to vector<2x16xf32>
    %129 = arith.mulf %127, %80 : vector<2x16xf32>
    %130 = arith.mulf %126, %125 : vector<2x16xf32>
    %131 = arith.addf %129, %130 : vector<2x16xf32>
    %132 = math.tanh %131 : vector<2x16xf32>
    %133 = arith.mulf %128, %132 : vector<2x16xf32>
    %c15_i32_47 = arith.constant 15 : i32
    %134 = arith.subi %c15_i32_47, %c2_i32 : i32
    %c0_48 = arith.constant 0 : index
    %135 = arith.index_cast %134 : i32 to index
    %c0_49 = arith.constant 0 : index
    %c0_50 = arith.constant 0 : index
    %136 = vector.load %arg2[%c0_48, %135, %c0_49, %c0_50] : memref<1x16x2x64xf32, #tpu.memory_space<vmem>>, vector<1x1x2x64xf32>
    %137 = vector.shape_cast %136 : vector<1x1x2x64xf32> to vector<2x64xf32>
    %cst_51 = arith.constant dense<0.000000e+00> : vector<2x64xf32>
    %138 = tpu.matmul %104, %6, %cst_51 {dimension_numbers = #tpu.dot_dimension_numbers<[1], [0], [0], [1], [0, 0, 1, 1], [], []>} : vector<2x16xf32>, vector<16x64xf32>, vector<2x64xf32> -> vector<2x64xf32>
    %139 = arith.addf %137, %138 : vector<2x64xf32>
    %140 = vector.extract_strided_slice %139 {offsets = [0, 0], sizes = [2, 48], strides = [1, 1]} : vector<2x64xf32> to vector<2x48xf32>
    %141 = arith.negf %140 : vector<2x48xf32>
    %142 = math.exp %141 : vector<2x48xf32>
    %cst_52 = arith.constant 1.000000e+00 : f32
    %143 = vector.broadcast %cst_52 : f32 to vector<2x48xf32>
    %144 = arith.addf %143, %142 : vector<2x48xf32>
    %145 = arith.divf %143, %144 : vector<2x48xf32>
    %146 = vector.extract_strided_slice %139 {offsets = [0, 48], sizes = [2, 16], strides = [1, 1]} : vector<2x64xf32> to vector<2x16xf32>
    %147 = math.tanh %146 : vector<2x16xf32>
    %148 = vector.extract_strided_slice %145 {offsets = [0, 0], sizes = [2, 16], strides = [1, 1]} : vector<2x48xf32> to vector<2x16xf32>
    %149 = vector.extract_strided_slice %145 {offsets = [0, 16], sizes = [2, 16], strides = [1, 1]} : vector<2x48xf32> to vector<2x16xf32>
    %150 = vector.extract_strided_slice %145 {offsets = [0, 32], sizes = [2, 16], strides = [1, 1]} : vector<2x48xf32> to vector<2x16xf32>
    %151 = arith.mulf %149, %102 : vector<2x16xf32>
    %152 = arith.mulf %148, %147 : vector<2x16xf32>
    %153 = arith.addf %151, %152 : vector<2x16xf32>
    %154 = math.tanh %153 : vector<2x16xf32>
    %155 = arith.mulf %150, %154 : vector<2x16xf32>
    %156 = arith.index_cast %c2_i32 : i32 to index
    %c0_53 = arith.constant 0 : index
    %c0_54 = arith.constant 0 : index
    %157 = vector.load %arg4[%156, %c0_53, %c0_54] : memref<16x2x16xf32, #tpu.memory_space<vmem>>, vector<1x2x16xf32>
    %158 = vector.shape_cast %157 : vector<1x2x16xf32> to vector<2x16xf32>
    %159 = vector.shape_cast %133 : vector<2x16xf32> to vector<1x2x16xf32>
    tpu.vector_store %arg4[%156, %c0_53, %c0_54], %159 {strides = array<i32>} : memref<16x2x16xf32, #tpu.memory_space<vmem>>, vector<1x2x16xf32>,
    %160 = arith.index_cast %134 : i32 to index
    %c0_55 = arith.constant 0 : index
    %c0_56 = arith.constant 0 : index
    %161 = vector.load %arg5[%160, %c0_55, %c0_56] : memref<16x2x16xf32, #tpu.memory_space<vmem>>, vector<1x2x16xf32>
    %162 = vector.shape_cast %161 : vector<1x2x16xf32> to vector<2x16xf32>
    %163 = vector.shape_cast %155 : vector<2x16xf32> to vector<1x2x16xf32>
    tpu.vector_store %arg5[%160, %c0_55, %c0_56], %163 {strides = array<i32>} : memref<16x2x16xf32, #tpu.memory_space<vmem>>, vector<1x2x16xf32>,
    %c3_i32 = arith.constant 3 : i32
    %c0_57 = arith.constant 0 : index
    %164 = arith.index_cast %c3_i32 : i32 to index
    %c0_58 = arith.constant 0 : index
    %c0_59 = arith.constant 0 : index
    %165 = vector.load %arg1[%c0_57, %164, %c0_58, %c0_59] : memref<1x16x2x64xf32, #tpu.memory_space<vmem>>, vector<1x1x2x64xf32>
    %166 = vector.shape_cast %165 : vector<1x1x2x64xf32> to vector<2x64xf32>
    %cst_60 = arith.constant dense<0.000000e+00> : vector<2x64xf32>
    %167 = tpu.matmul %133, %4, %cst_60 {dimension_numbers = #tpu.dot_dimension_numbers<[1], [0], [0], [1], [0, 0, 1, 1], [], []>} : vector<2x16xf32>, vector<16x64xf32>, vector<2x64xf32> -> vector<2x64xf32>
    %168 = arith.addf %166, %167 : vector<2x64xf32>
    %169 = vector.extract_strided_slice %168 {offsets = [0, 0], sizes = [2, 48], strides = [1, 1]} : vector<2x64xf32> to vector<2x48xf32>
    %170 = arith.negf %169 : vector<2x48xf32>
    %171 = math.exp %170 : vector<2x48xf32>
    %cst_61 = arith.constant 1.000000e+00 : f32
    %172 = vector.broadcast %cst_61 : f32 to vector<2x48xf32>
    %173 = arith.addf %172, %171 : vector<2x48xf32>
    %174 = arith.divf %172, %173 : vector<2x48xf32>
    %175 = vector.extract_strided_slice %168 {offsets = [0, 48], sizes = [2, 16], strides = [1, 1]} : vector<2x64xf32> to vector<2x16xf32>
    %176 = math.tanh %175 : vector<2x16xf32>
    %177 = vector.extract_strided_slice %174 {offsets = [0, 0], sizes = [2, 16], strides = [1, 1]} : vector<2x48xf32> to vector<2x16xf32>
    %178 = vector.extract_strided_slice %174 {offsets = [0, 16], sizes = [2, 16], strides = [1, 1]} : vector<2x48xf32> to vector<2x16xf32>
    %179 = vector.extract_strided_slice %174 {offsets = [0, 32], sizes = [2, 16], strides = [1, 1]} : vector<2x48xf32> to vector<2x16xf32>
    %180 = arith.mulf %178, %131 : vector<2x16xf32>
    %181 = arith.mulf %177, %176 : vector<2x16xf32>
    %182 = arith.addf %180, %181 : vector<2x16xf32>
    %183 = math.tanh %182 : vector<2x16xf32>
    %184 = arith.mulf %179, %183 : vector<2x16xf32>
    %c15_i32_62 = arith.constant 15 : i32
    %185 = arith.subi %c15_i32_62, %c3_i32 : i32
    %c0_63 = arith.constant 0 : index
    %186 = arith.index_cast %185 : i32 to index
    %c0_64 = arith.constant 0 : index
    %c0_65 = arith.constant 0 : index
    %187 = vector.load %arg2[%c0_63, %186, %c0_64, %c0_65] : memref<1x16x2x64xf32, #tpu.memory_space<vmem>>, vector<1x1x2x64xf32>
    %188 = vector.shape_cast %187 : vector<1x1x2x64xf32> to vector<2x64xf32>
    %cst_66 = arith.constant dense<0.000000e+00> : vector<2x64xf32>
    %189 = tpu.matmul %155, %6, %cst_66 {dimension_numbers = #tpu.dot_dimension_numbers<[1], [0], [0], [1], [0, 0, 1, 1], [], []>} : vector<2x16xf32>, vector<16x64xf32>, vector<2x64xf32> -> vector<2x64xf32>
    %190 = arith.addf %188, %189 : vector<2x64xf32>
    %191 = vector.extract_strided_slice %190 {offsets = [0, 0], sizes = [2, 48], strides = [1, 1]} : vector<2x64xf32> to vector<2x48xf32>
    %192 = arith.negf %191 : vector<2x48xf32>
    %193 = math.exp %192 : vector<2x48xf32>
    %cst_67 = arith.constant 1.000000e+00 : f32
    %194 = vector.broadcast %cst_67 : f32 to vector<2x48xf32>
    %195 = arith.addf %194, %193 : vector<2x48xf32>
    %196 = arith.divf %194, %195 : vector<2x48xf32>
    %197 = vector.extract_strided_slice %190 {offsets = [0, 48], sizes = [2, 16], strides = [1, 1]} : vector<2x64xf32> to vector<2x16xf32>
    %198 = math.tanh %197 : vector<2x16xf32>
    %199 = vector.extract_strided_slice %196 {offsets = [0, 0], sizes = [2, 16], strides = [1, 1]} : vector<2x48xf32> to vector<2x16xf32>
    %200 = vector.extract_strided_slice %196 {offsets = [0, 16], sizes = [2, 16], strides = [1, 1]} : vector<2x48xf32> to vector<2x16xf32>
    %201 = vector.extract_strided_slice %196 {offsets = [0, 32], sizes = [2, 16], strides = [1, 1]} : vector<2x48xf32> to vector<2x16xf32>
    %202 = arith.mulf %200, %153 : vector<2x16xf32>
    %203 = arith.mulf %199, %198 : vector<2x16xf32>
    %204 = arith.addf %202, %203 : vector<2x16xf32>
    %205 = math.tanh %204 : vector<2x16xf32>
    %206 = arith.mulf %201, %205 : vector<2x16xf32>
    %207 = arith.index_cast %c3_i32 : i32 to index
    %c0_68 = arith.constant 0 : index
    %c0_69 = arith.constant 0 : index
    %208 = vector.load %arg4[%207, %c0_68, %c0_69] : memref<16x2x16xf32, #tpu.memory_space<vmem>>, vector<1x2x16xf32>
    %209 = vector.shape_cast %208 : vector<1x2x16xf32> to vector<2x16xf32>
    %210 = vector.shape_cast %184 : vector<2x16xf32> to vector<1x2x16xf32>
    tpu.vector_store %arg4[%207, %c0_68, %c0_69], %210 {strides = array<i32>} : memref<16x2x16xf32, #tpu.memory_space<vmem>>, vector<1x2x16xf32>,
    %211 = arith.index_cast %185 : i32 to index
    %c0_70 = arith.constant 0 : index
    %c0_71 = arith.constant 0 : index
    %212 = vector.load %arg5[%211, %c0_70, %c0_71] : memref<16x2x16xf32, #tpu.memory_space<vmem>>, vector<1x2x16xf32>
    %213 = vector.shape_cast %212 : vector<1x2x16xf32> to vector<2x16xf32>
    %214 = vector.shape_cast %206 : vector<2x16xf32> to vector<1x2x16xf32>
    tpu.vector_store %arg5[%211, %c0_70, %c0_71], %214 {strides = array<i32>} : memref<16x2x16xf32, #tpu.memory_space<vmem>>, vector<1x2x16xf32>,
    %c4_i32 = arith.constant 4 : i32
    %c0_72 = arith.constant 0 : index
    %215 = arith.index_cast %c4_i32 : i32 to index
    %c0_73 = arith.constant 0 : index
    %c0_74 = arith.constant 0 : index
    %216 = vector.load %arg1[%c0_72, %215, %c0_73, %c0_74] : memref<1x16x2x64xf32, #tpu.memory_space<vmem>>, vector<1x1x2x64xf32>
    %217 = vector.shape_cast %216 : vector<1x1x2x64xf32> to vector<2x64xf32>
    %cst_75 = arith.constant dense<0.000000e+00> : vector<2x64xf32>
    %218 = tpu.matmul %184, %4, %cst_75 {dimension_numbers = #tpu.dot_dimension_numbers<[1], [0], [0], [1], [0, 0, 1, 1], [], []>} : vector<2x16xf32>, vector<16x64xf32>, vector<2x64xf32> -> vector<2x64xf32>
    %219 = arith.addf %217, %218 : vector<2x64xf32>
    %220 = vector.extract_strided_slice %219 {offsets = [0, 0], sizes = [2, 48], strides = [1, 1]} : vector<2x64xf32> to vector<2x48xf32>
    %221 = arith.negf %220 : vector<2x48xf32>
    %222 = math.exp %221 : vector<2x48xf32>
    %cst_76 = arith.constant 1.000000e+00 : f32
    %223 = vector.broadcast %cst_76 : f32 to vector<2x48xf32>
    %224 = arith.addf %223, %222 : vector<2x48xf32>
    %225 = arith.divf %223, %224 : vector<2x48xf32>
    %226 = vector.extract_strided_slice %219 {offsets = [0, 48], sizes = [2, 16], strides = [1, 1]} : vector<2x64xf32> to vector<2x16xf32>
    %227 = math.tanh %226 : vector<2x16xf32>
    %228 = vector.extract_strided_slice %225 {offsets = [0, 0], sizes = [2, 16], strides = [1, 1]} : vector<2x48xf32> to vector<2x16xf32>
    %229 = vector.extract_strided_slice %225 {offsets = [0, 16], sizes = [2, 16], strides = [1, 1]} : vector<2x48xf32> to vector<2x16xf32>
    %230 = vector.extract_strided_slice %225 {offsets = [0, 32], sizes = [2, 16], strides = [1, 1]} : vector<2x48xf32> to vector<2x16xf32>
    %231 = arith.mulf %229, %182 : vector<2x16xf32>
    %232 = arith.mulf %228, %227 : vector<2x16xf32>
    %233 = arith.addf %231, %232 : vector<2x16xf32>
    %234 = math.tanh %233 : vector<2x16xf32>
    %235 = arith.mulf %230, %234 : vector<2x16xf32>
    %c15_i32_77 = arith.constant 15 : i32
    %236 = arith.subi %c15_i32_77, %c4_i32 : i32
    %c0_78 = arith.constant 0 : index
    %237 = arith.index_cast %236 : i32 to index
    %c0_79 = arith.constant 0 : index
    %c0_80 = arith.constant 0 : index
    %238 = vector.load %arg2[%c0_78, %237, %c0_79, %c0_80] : memref<1x16x2x64xf32, #tpu.memory_space<vmem>>, vector<1x1x2x64xf32>
    %239 = vector.shape_cast %238 : vector<1x1x2x64xf32> to vector<2x64xf32>
    %cst_81 = arith.constant dense<0.000000e+00> : vector<2x64xf32>
    %240 = tpu.matmul %206, %6, %cst_81 {dimension_numbers = #tpu.dot_dimension_numbers<[1], [0], [0], [1], [0, 0, 1, 1], [], []>} : vector<2x16xf32>, vector<16x64xf32>, vector<2x64xf32> -> vector<2x64xf32>
    %241 = arith.addf %239, %240 : vector<2x64xf32>
    %242 = vector.extract_strided_slice %241 {offsets = [0, 0], sizes = [2, 48], strides = [1, 1]} : vector<2x64xf32> to vector<2x48xf32>
    %243 = arith.negf %242 : vector<2x48xf32>
    %244 = math.exp %243 : vector<2x48xf32>
    %cst_82 = arith.constant 1.000000e+00 : f32
    %245 = vector.broadcast %cst_82 : f32 to vector<2x48xf32>
    %246 = arith.addf %245, %244 : vector<2x48xf32>
    %247 = arith.divf %245, %246 : vector<2x48xf32>
    %248 = vector.extract_strided_slice %241 {offsets = [0, 48], sizes = [2, 16], strides = [1, 1]} : vector<2x64xf32> to vector<2x16xf32>
    %249 = math.tanh %248 : vector<2x16xf32>
    %250 = vector.extract_strided_slice %247 {offsets = [0, 0], sizes = [2, 16], strides = [1, 1]} : vector<2x48xf32> to vector<2x16xf32>
    %251 = vector.extract_strided_slice %247 {offsets = [0, 16], sizes = [2, 16], strides = [1, 1]} : vector<2x48xf32> to vector<2x16xf32>
    %252 = vector.extract_strided_slice %247 {offsets = [0, 32], sizes = [2, 16], strides = [1, 1]} : vector<2x48xf32> to vector<2x16xf32>
    %253 = arith.mulf %251, %204 : vector<2x16xf32>
    %254 = arith.mulf %250, %249 : vector<2x16xf32>
    %255 = arith.addf %253, %254 : vector<2x16xf32>
    %256 = math.tanh %255 : vector<2x16xf32>
    %257 = arith.mulf %252, %256 : vector<2x16xf32>
    %258 = arith.index_cast %c4_i32 : i32 to index
    %c0_83 = arith.constant 0 : index
    %c0_84 = arith.constant 0 : index
    %259 = vector.load %arg4[%258, %c0_83, %c0_84] : memref<16x2x16xf32, #tpu.memory_space<vmem>>, vector<1x2x16xf32>
    %260 = vector.shape_cast %259 : vector<1x2x16xf32> to vector<2x16xf32>
    %261 = vector.shape_cast %235 : vector<2x16xf32> to vector<1x2x16xf32>
    tpu.vector_store %arg4[%258, %c0_83, %c0_84], %261 {strides = array<i32>} : memref<16x2x16xf32, #tpu.memory_space<vmem>>, vector<1x2x16xf32>,
    %262 = arith.index_cast %236 : i32 to index
    %c0_85 = arith.constant 0 : index
    %c0_86 = arith.constant 0 : index
    %263 = vector.load %arg5[%262, %c0_85, %c0_86] : memref<16x2x16xf32, #tpu.memory_space<vmem>>, vector<1x2x16xf32>
    %264 = vector.shape_cast %263 : vector<1x2x16xf32> to vector<2x16xf32>
    %265 = vector.shape_cast %257 : vector<2x16xf32> to vector<1x2x16xf32>
    tpu.vector_store %arg5[%262, %c0_85, %c0_86], %265 {strides = array<i32>} : memref<16x2x16xf32, #tpu.memory_space<vmem>>, vector<1x2x16xf32>,
    %c5_i32 = arith.constant 5 : i32
    %c0_87 = arith.constant 0 : index
    %266 = arith.index_cast %c5_i32 : i32 to index
    %c0_88 = arith.constant 0 : index
    %c0_89 = arith.constant 0 : index
    %267 = vector.load %arg1[%c0_87, %266, %c0_88, %c0_89] : memref<1x16x2x64xf32, #tpu.memory_space<vmem>>, vector<1x1x2x64xf32>
    %268 = vector.shape_cast %267 : vector<1x1x2x64xf32> to vector<2x64xf32>
    %cst_90 = arith.constant dense<0.000000e+00> : vector<2x64xf32>
    %269 = tpu.matmul %235, %4, %cst_90 {dimension_numbers = #tpu.dot_dimension_numbers<[1], [0], [0], [1], [0, 0, 1, 1], [], []>} : vector<2x16xf32>, vector<16x64xf32>, vector<2x64xf32> -> vector<2x64xf32>
    %270 = arith.addf %268, %269 : vector<2x64xf32>
    %271 = vector.extract_strided_slice %270 {offsets = [0, 0], sizes = [2, 48], strides = [1, 1]} : vector<2x64xf32> to vector<2x48xf32>
    %272 = arith.negf %271 : vector<2x48xf32>
    %273 = math.exp %272 : vector<2x48xf32>
    %cst_91 = arith.constant 1.000000e+00 : f32
    %274 = vector.broadcast %cst_91 : f32 to vector<2x48xf32>
    %275 = arith.addf %274, %273 : vector<2x48xf32>
    %276 = arith.divf %274, %275 : vector<2x48xf32>
    %277 = vector.extract_strided_slice %270 {offsets = [0, 48], sizes = [2, 16], strides = [1, 1]} : vector<2x64xf32> to vector<2x16xf32>
    %278 = math.tanh %277 : vector<2x16xf32>
    %279 = vector.extract_strided_slice %276 {offsets = [0, 0], sizes = [2, 16], strides = [1, 1]} : vector<2x48xf32> to vector<2x16xf32>
    %280 = vector.extract_strided_slice %276 {offsets = [0, 16], sizes = [2, 16], strides = [1, 1]} : vector<2x48xf32> to vector<2x16xf32>
    %281 = vector.extract_strided_slice %276 {offsets = [0, 32], sizes = [2, 16], strides = [1, 1]} : vector<2x48xf32> to vector<2x16xf32>
    %282 = arith.mulf %280, %233 : vector<2x16xf32>
    %283 = arith.mulf %279, %278 : vector<2x16xf32>
    %284 = arith.addf %282, %283 : vector<2x16xf32>
    %285 = math.tanh %284 : vector<2x16xf32>
    %286 = arith.mulf %281, %285 : vector<2x16xf32>
    %c15_i32_92 = arith.constant 15 : i32
    %287 = arith.subi %c15_i32_92, %c5_i32 : i32
    %c0_93 = arith.constant 0 : index
    %288 = arith.index_cast %287 : i32 to index
    %c0_94 = arith.constant 0 : index
    %c0_95 = arith.constant 0 : index
    %289 = vector.load %arg2[%c0_93, %288, %c0_94, %c0_95] : memref<1x16x2x64xf32, #tpu.memory_space<vmem>>, vector<1x1x2x64xf32>
    %290 = vector.shape_cast %289 : vector<1x1x2x64xf32> to vector<2x64xf32>
    %cst_96 = arith.constant dense<0.000000e+00> : vector<2x64xf32>
    %291 = tpu.matmul %257, %6, %cst_96 {dimension_numbers = #tpu.dot_dimension_numbers<[1], [0], [0], [1], [0, 0, 1, 1], [], []>} : vector<2x16xf32>, vector<16x64xf32>, vector<2x64xf32> -> vector<2x64xf32>
    %292 = arith.addf %290, %291 : vector<2x64xf32>
    %293 = vector.extract_strided_slice %292 {offsets = [0, 0], sizes = [2, 48], strides = [1, 1]} : vector<2x64xf32> to vector<2x48xf32>
    %294 = arith.negf %293 : vector<2x48xf32>
    %295 = math.exp %294 : vector<2x48xf32>
    %cst_97 = arith.constant 1.000000e+00 : f32
    %296 = vector.broadcast %cst_97 : f32 to vector<2x48xf32>
    %297 = arith.addf %296, %295 : vector<2x48xf32>
    %298 = arith.divf %296, %297 : vector<2x48xf32>
    %299 = vector.extract_strided_slice %292 {offsets = [0, 48], sizes = [2, 16], strides = [1, 1]} : vector<2x64xf32> to vector<2x16xf32>
    %300 = math.tanh %299 : vector<2x16xf32>
    %301 = vector.extract_strided_slice %298 {offsets = [0, 0], sizes = [2, 16], strides = [1, 1]} : vector<2x48xf32> to vector<2x16xf32>
    %302 = vector.extract_strided_slice %298 {offsets = [0, 16], sizes = [2, 16], strides = [1, 1]} : vector<2x48xf32> to vector<2x16xf32>
    %303 = vector.extract_strided_slice %298 {offsets = [0, 32], sizes = [2, 16], strides = [1, 1]} : vector<2x48xf32> to vector<2x16xf32>
    %304 = arith.mulf %302, %255 : vector<2x16xf32>
    %305 = arith.mulf %301, %300 : vector<2x16xf32>
    %306 = arith.addf %304, %305 : vector<2x16xf32>
    %307 = math.tanh %306 : vector<2x16xf32>
    %308 = arith.mulf %303, %307 : vector<2x16xf32>
    %309 = arith.index_cast %c5_i32 : i32 to index
    %c0_98 = arith.constant 0 : index
    %c0_99 = arith.constant 0 : index
    %310 = vector.load %arg4[%309, %c0_98, %c0_99] : memref<16x2x16xf32, #tpu.memory_space<vmem>>, vector<1x2x16xf32>
    %311 = vector.shape_cast %310 : vector<1x2x16xf32> to vector<2x16xf32>
    %312 = vector.shape_cast %286 : vector<2x16xf32> to vector<1x2x16xf32>
    tpu.vector_store %arg4[%309, %c0_98, %c0_99], %312 {strides = array<i32>} : memref<16x2x16xf32, #tpu.memory_space<vmem>>, vector<1x2x16xf32>,
    %313 = arith.index_cast %287 : i32 to index
    %c0_100 = arith.constant 0 : index
    %c0_101 = arith.constant 0 : index
    %314 = vector.load %arg5[%313, %c0_100, %c0_101] : memref<16x2x16xf32, #tpu.memory_space<vmem>>, vector<1x2x16xf32>
    %315 = vector.shape_cast %314 : vector<1x2x16xf32> to vector<2x16xf32>
    %316 = vector.shape_cast %308 : vector<2x16xf32> to vector<1x2x16xf32>
    tpu.vector_store %arg5[%313, %c0_100, %c0_101], %316 {strides = array<i32>} : memref<16x2x16xf32, #tpu.memory_space<vmem>>, vector<1x2x16xf32>,
    %c6_i32 = arith.constant 6 : i32
    %c0_102 = arith.constant 0 : index
    %317 = arith.index_cast %c6_i32 : i32 to index
    %c0_103 = arith.constant 0 : index
    %c0_104 = arith.constant 0 : index
    %318 = vector.load %arg1[%c0_102, %317, %c0_103, %c0_104] : memref<1x16x2x64xf32, #tpu.memory_space<vmem>>, vector<1x1x2x64xf32>
    %319 = vector.shape_cast %318 : vector<1x1x2x64xf32> to vector<2x64xf32>
    %cst_105 = arith.constant dense<0.000000e+00> : vector<2x64xf32>
    %320 = tpu.matmul %286, %4, %cst_105 {dimension_numbers = #tpu.dot_dimension_numbers<[1], [0], [0], [1], [0, 0, 1, 1], [], []>} : vector<2x16xf32>, vector<16x64xf32>, vector<2x64xf32> -> vector<2x64xf32>
    %321 = arith.addf %319, %320 : vector<2x64xf32>
    %322 = vector.extract_strided_slice %321 {offsets = [0, 0], sizes = [2, 48], strides = [1, 1]} : vector<2x64xf32> to vector<2x48xf32>
    %323 = arith.negf %322 : vector<2x48xf32>
    %324 = math.exp %323 : vector<2x48xf32>
    %cst_106 = arith.constant 1.000000e+00 : f32
    %325 = vector.broadcast %cst_106 : f32 to vector<2x48xf32>
    %326 = arith.addf %325, %324 : vector<2x48xf32>
    %327 = arith.divf %325, %326 : vector<2x48xf32>
    %328 = vector.extract_strided_slice %321 {offsets = [0, 48], sizes = [2, 16], strides = [1, 1]} : vector<2x64xf32> to vector<2x16xf32>
    %329 = math.tanh %328 : vector<2x16xf32>
    %330 = vector.extract_strided_slice %327 {offsets = [0, 0], sizes = [2, 16], strides = [1, 1]} : vector<2x48xf32> to vector<2x16xf32>
    %331 = vector.extract_strided_slice %327 {offsets = [0, 16], sizes = [2, 16], strides = [1, 1]} : vector<2x48xf32> to vector<2x16xf32>
    %332 = vector.extract_strided_slice %327 {offsets = [0, 32], sizes = [2, 16], strides = [1, 1]} : vector<2x48xf32> to vector<2x16xf32>
    %333 = arith.mulf %331, %284 : vector<2x16xf32>
    %334 = arith.mulf %330, %329 : vector<2x16xf32>
    %335 = arith.addf %333, %334 : vector<2x16xf32>
    %336 = math.tanh %335 : vector<2x16xf32>
    %337 = arith.mulf %332, %336 : vector<2x16xf32>
    %c15_i32_107 = arith.constant 15 : i32
    %338 = arith.subi %c15_i32_107, %c6_i32 : i32
    %c0_108 = arith.constant 0 : index
    %339 = arith.index_cast %338 : i32 to index
    %c0_109 = arith.constant 0 : index
    %c0_110 = arith.constant 0 : index
    %340 = vector.load %arg2[%c0_108, %339, %c0_109, %c0_110] : memref<1x16x2x64xf32, #tpu.memory_space<vmem>>, vector<1x1x2x64xf32>
    %341 = vector.shape_cast %340 : vector<1x1x2x64xf32> to vector<2x64xf32>
    %cst_111 = arith.constant dense<0.000000e+00> : vector<2x64xf32>
    %342 = tpu.matmul %308, %6, %cst_111 {dimension_numbers = #tpu.dot_dimension_numbers<[1], [0], [0], [1], [0, 0, 1, 1], [], []>} : vector<2x16xf32>, vector<16x64xf32>, vector<2x64xf32> -> vector<2x64xf32>
    %343 = arith.addf %341, %342 : vector<2x64xf32>
    %344 = vector.extract_strided_slice %343 {offsets = [0, 0], sizes = [2, 48], strides = [1, 1]} : vector<2x64xf32> to vector<2x48xf32>
    %345 = arith.negf %344 : vector<2x48xf32>
    %346 = math.exp %345 : vector<2x48xf32>
    %cst_112 = arith.constant 1.000000e+00 : f32
    %347 = vector.broadcast %cst_112 : f32 to vector<2x48xf32>
    %348 = arith.addf %347, %346 : vector<2x48xf32>
    %349 = arith.divf %347, %348 : vector<2x48xf32>
    %350 = vector.extract_strided_slice %343 {offsets = [0, 48], sizes = [2, 16], strides = [1, 1]} : vector<2x64xf32> to vector<2x16xf32>
    %351 = math.tanh %350 : vector<2x16xf32>
    %352 = vector.extract_strided_slice %349 {offsets = [0, 0], sizes = [2, 16], strides = [1, 1]} : vector<2x48xf32> to vector<2x16xf32>
    %353 = vector.extract_strided_slice %349 {offsets = [0, 16], sizes = [2, 16], strides = [1, 1]} : vector<2x48xf32> to vector<2x16xf32>
    %354 = vector.extract_strided_slice %349 {offsets = [0, 32], sizes = [2, 16], strides = [1, 1]} : vector<2x48xf32> to vector<2x16xf32>
    %355 = arith.mulf %353, %306 : vector<2x16xf32>
    %356 = arith.mulf %352, %351 : vector<2x16xf32>
    %357 = arith.addf %355, %356 : vector<2x16xf32>
    %358 = math.tanh %357 : vector<2x16xf32>
    %359 = arith.mulf %354, %358 : vector<2x16xf32>
    %360 = arith.index_cast %c6_i32 : i32 to index
    %c0_113 = arith.constant 0 : index
    %c0_114 = arith.constant 0 : index
    %361 = vector.load %arg4[%360, %c0_113, %c0_114] : memref<16x2x16xf32, #tpu.memory_space<vmem>>, vector<1x2x16xf32>
    %362 = vector.shape_cast %361 : vector<1x2x16xf32> to vector<2x16xf32>
    %363 = vector.shape_cast %337 : vector<2x16xf32> to vector<1x2x16xf32>
    tpu.vector_store %arg4[%360, %c0_113, %c0_114], %363 {strides = array<i32>} : memref<16x2x16xf32, #tpu.memory_space<vmem>>, vector<1x2x16xf32>,
    %364 = arith.index_cast %338 : i32 to index
    %c0_115 = arith.constant 0 : index
    %c0_116 = arith.constant 0 : index
    %365 = vector.load %arg5[%364, %c0_115, %c0_116] : memref<16x2x16xf32, #tpu.memory_space<vmem>>, vector<1x2x16xf32>
    %366 = vector.shape_cast %365 : vector<1x2x16xf32> to vector<2x16xf32>
    %367 = vector.shape_cast %359 : vector<2x16xf32> to vector<1x2x16xf32>
    tpu.vector_store %arg5[%364, %c0_115, %c0_116], %367 {strides = array<i32>} : memref<16x2x16xf32, #tpu.memory_space<vmem>>, vector<1x2x16xf32>,
    %c7_i32 = arith.constant 7 : i32
    %c0_117 = arith.constant 0 : index
    %368 = arith.index_cast %c7_i32 : i32 to index
    %c0_118 = arith.constant 0 : index
    %c0_119 = arith.constant 0 : index
    %369 = vector.load %arg1[%c0_117, %368, %c0_118, %c0_119] : memref<1x16x2x64xf32, #tpu.memory_space<vmem>>, vector<1x1x2x64xf32>
    %370 = vector.shape_cast %369 : vector<1x1x2x64xf32> to vector<2x64xf32>
    %cst_120 = arith.constant dense<0.000000e+00> : vector<2x64xf32>
    %371 = tpu.matmul %337, %4, %cst_120 {dimension_numbers = #tpu.dot_dimension_numbers<[1], [0], [0], [1], [0, 0, 1, 1], [], []>} : vector<2x16xf32>, vector<16x64xf32>, vector<2x64xf32> -> vector<2x64xf32>
    %372 = arith.addf %370, %371 : vector<2x64xf32>
    %373 = vector.extract_strided_slice %372 {offsets = [0, 0], sizes = [2, 48], strides = [1, 1]} : vector<2x64xf32> to vector<2x48xf32>
    %374 = arith.negf %373 : vector<2x48xf32>
    %375 = math.exp %374 : vector<2x48xf32>
    %cst_121 = arith.constant 1.000000e+00 : f32
    %376 = vector.broadcast %cst_121 : f32 to vector<2x48xf32>
    %377 = arith.addf %376, %375 : vector<2x48xf32>
    %378 = arith.divf %376, %377 : vector<2x48xf32>
    %379 = vector.extract_strided_slice %372 {offsets = [0, 48], sizes = [2, 16], strides = [1, 1]} : vector<2x64xf32> to vector<2x16xf32>
    %380 = math.tanh %379 : vector<2x16xf32>
    %381 = vector.extract_strided_slice %378 {offsets = [0, 0], sizes = [2, 16], strides = [1, 1]} : vector<2x48xf32> to vector<2x16xf32>
    %382 = vector.extract_strided_slice %378 {offsets = [0, 16], sizes = [2, 16], strides = [1, 1]} : vector<2x48xf32> to vector<2x16xf32>
    %383 = vector.extract_strided_slice %378 {offsets = [0, 32], sizes = [2, 16], strides = [1, 1]} : vector<2x48xf32> to vector<2x16xf32>
    %384 = arith.mulf %382, %335 : vector<2x16xf32>
    %385 = arith.mulf %381, %380 : vector<2x16xf32>
    %386 = arith.addf %384, %385 : vector<2x16xf32>
    %387 = math.tanh %386 : vector<2x16xf32>
    %388 = arith.mulf %383, %387 : vector<2x16xf32>
    %c15_i32_122 = arith.constant 15 : i32
    %389 = arith.subi %c15_i32_122, %c7_i32 : i32
    %c0_123 = arith.constant 0 : index
    %390 = arith.index_cast %389 : i32 to index
    %c0_124 = arith.constant 0 : index
    %c0_125 = arith.constant 0 : index
    %391 = vector.load %arg2[%c0_123, %390, %c0_124, %c0_125] : memref<1x16x2x64xf32, #tpu.memory_space<vmem>>, vector<1x1x2x64xf32>
    %392 = vector.shape_cast %391 : vector<1x1x2x64xf32> to vector<2x64xf32>
    %cst_126 = arith.constant dense<0.000000e+00> : vector<2x64xf32>
    %393 = tpu.matmul %359, %6, %cst_126 {dimension_numbers = #tpu.dot_dimension_numbers<[1], [0], [0], [1], [0, 0, 1, 1], [], []>} : vector<2x16xf32>, vector<16x64xf32>, vector<2x64xf32> -> vector<2x64xf32>
    %394 = arith.addf %392, %393 : vector<2x64xf32>
    %395 = vector.extract_strided_slice %394 {offsets = [0, 0], sizes = [2, 48], strides = [1, 1]} : vector<2x64xf32> to vector<2x48xf32>
    %396 = arith.negf %395 : vector<2x48xf32>
    %397 = math.exp %396 : vector<2x48xf32>
    %cst_127 = arith.constant 1.000000e+00 : f32
    %398 = vector.broadcast %cst_127 : f32 to vector<2x48xf32>
    %399 = arith.addf %398, %397 : vector<2x48xf32>
    %400 = arith.divf %398, %399 : vector<2x48xf32>
    %401 = vector.extract_strided_slice %394 {offsets = [0, 48], sizes = [2, 16], strides = [1, 1]} : vector<2x64xf32> to vector<2x16xf32>
    %402 = math.tanh %401 : vector<2x16xf32>
    %403 = vector.extract_strided_slice %400 {offsets = [0, 0], sizes = [2, 16], strides = [1, 1]} : vector<2x48xf32> to vector<2x16xf32>
    %404 = vector.extract_strided_slice %400 {offsets = [0, 16], sizes = [2, 16], strides = [1, 1]} : vector<2x48xf32> to vector<2x16xf32>
    %405 = vector.extract_strided_slice %400 {offsets = [0, 32], sizes = [2, 16], strides = [1, 1]} : vector<2x48xf32> to vector<2x16xf32>
    %406 = arith.mulf %404, %357 : vector<2x16xf32>
    %407 = arith.mulf %403, %402 : vector<2x16xf32>
    %408 = arith.addf %406, %407 : vector<2x16xf32>
    %409 = math.tanh %408 : vector<2x16xf32>
    %410 = arith.mulf %405, %409 : vector<2x16xf32>
    %411 = arith.index_cast %c7_i32 : i32 to index
    %c0_128 = arith.constant 0 : index
    %c0_129 = arith.constant 0 : index
    %412 = vector.load %arg4[%411, %c0_128, %c0_129] : memref<16x2x16xf32, #tpu.memory_space<vmem>>, vector<1x2x16xf32>
    %413 = vector.shape_cast %412 : vector<1x2x16xf32> to vector<2x16xf32>
    %414 = vector.shape_cast %388 : vector<2x16xf32> to vector<1x2x16xf32>
    tpu.vector_store %arg4[%411, %c0_128, %c0_129], %414 {strides = array<i32>} : memref<16x2x16xf32, #tpu.memory_space<vmem>>, vector<1x2x16xf32>,
    %415 = arith.index_cast %389 : i32 to index
    %c0_130 = arith.constant 0 : index
    %c0_131 = arith.constant 0 : index
    %416 = vector.load %arg5[%415, %c0_130, %c0_131] : memref<16x2x16xf32, #tpu.memory_space<vmem>>, vector<1x2x16xf32>
    %417 = vector.shape_cast %416 : vector<1x2x16xf32> to vector<2x16xf32>
    %418 = vector.shape_cast %410 : vector<2x16xf32> to vector<1x2x16xf32>
    tpu.vector_store %arg5[%415, %c0_130, %c0_131], %418 {strides = array<i32>} : memref<16x2x16xf32, #tpu.memory_space<vmem>>, vector<1x2x16xf32>,
    %c8_i32 = arith.constant 8 : i32
    %c0_132 = arith.constant 0 : index
    %419 = arith.index_cast %c8_i32 : i32 to index
    %c0_133 = arith.constant 0 : index
    %c0_134 = arith.constant 0 : index
    %420 = vector.load %arg1[%c0_132, %419, %c0_133, %c0_134] : memref<1x16x2x64xf32, #tpu.memory_space<vmem>>, vector<1x1x2x64xf32>
    %421 = vector.shape_cast %420 : vector<1x1x2x64xf32> to vector<2x64xf32>
    %cst_135 = arith.constant dense<0.000000e+00> : vector<2x64xf32>
    %422 = tpu.matmul %388, %4, %cst_135 {dimension_numbers = #tpu.dot_dimension_numbers<[1], [0], [0], [1], [0, 0, 1, 1], [], []>} : vector<2x16xf32>, vector<16x64xf32>, vector<2x64xf32> -> vector<2x64xf32>
    %423 = arith.addf %421, %422 : vector<2x64xf32>
    %424 = vector.extract_strided_slice %423 {offsets = [0, 0], sizes = [2, 48], strides = [1, 1]} : vector<2x64xf32> to vector<2x48xf32>
    %425 = arith.negf %424 : vector<2x48xf32>
    %426 = math.exp %425 : vector<2x48xf32>
    %cst_136 = arith.constant 1.000000e+00 : f32
    %427 = vector.broadcast %cst_136 : f32 to vector<2x48xf32>
    %428 = arith.addf %427, %426 : vector<2x48xf32>
    %429 = arith.divf %427, %428 : vector<2x48xf32>
    %430 = vector.extract_strided_slice %423 {offsets = [0, 48], sizes = [2, 16], strides = [1, 1]} : vector<2x64xf32> to vector<2x16xf32>
    %431 = math.tanh %430 : vector<2x16xf32>
    %432 = vector.extract_strided_slice %429 {offsets = [0, 0], sizes = [2, 16], strides = [1, 1]} : vector<2x48xf32> to vector<2x16xf32>
    %433 = vector.extract_strided_slice %429 {offsets = [0, 16], sizes = [2, 16], strides = [1, 1]} : vector<2x48xf32> to vector<2x16xf32>
    %434 = vector.extract_strided_slice %429 {offsets = [0, 32], sizes = [2, 16], strides = [1, 1]} : vector<2x48xf32> to vector<2x16xf32>
    %435 = arith.mulf %433, %386 : vector<2x16xf32>
    %436 = arith.mulf %432, %431 : vector<2x16xf32>
    %437 = arith.addf %435, %436 : vector<2x16xf32>
    %438 = math.tanh %437 : vector<2x16xf32>
    %439 = arith.mulf %434, %438 : vector<2x16xf32>
    %c15_i32_137 = arith.constant 15 : i32
    %440 = arith.subi %c15_i32_137, %c8_i32 : i32
    %c0_138 = arith.constant 0 : index
    %441 = arith.index_cast %440 : i32 to index
    %c0_139 = arith.constant 0 : index
    %c0_140 = arith.constant 0 : index
    %442 = vector.load %arg2[%c0_138, %441, %c0_139, %c0_140] : memref<1x16x2x64xf32, #tpu.memory_space<vmem>>, vector<1x1x2x64xf32>
    %443 = vector.shape_cast %442 : vector<1x1x2x64xf32> to vector<2x64xf32>
    %cst_141 = arith.constant dense<0.000000e+00> : vector<2x64xf32>
    %444 = tpu.matmul %410, %6, %cst_141 {dimension_numbers = #tpu.dot_dimension_numbers<[1], [0], [0], [1], [0, 0, 1, 1], [], []>} : vector<2x16xf32>, vector<16x64xf32>, vector<2x64xf32> -> vector<2x64xf32>
    %445 = arith.addf %443, %444 : vector<2x64xf32>
    %446 = vector.extract_strided_slice %445 {offsets = [0, 0], sizes = [2, 48], strides = [1, 1]} : vector<2x64xf32> to vector<2x48xf32>
    %447 = arith.negf %446 : vector<2x48xf32>
    %448 = math.exp %447 : vector<2x48xf32>
    %cst_142 = arith.constant 1.000000e+00 : f32
    %449 = vector.broadcast %cst_142 : f32 to vector<2x48xf32>
    %450 = arith.addf %449, %448 : vector<2x48xf32>
    %451 = arith.divf %449, %450 : vector<2x48xf32>
    %452 = vector.extract_strided_slice %445 {offsets = [0, 48], sizes = [2, 16], strides = [1, 1]} : vector<2x64xf32> to vector<2x16xf32>
    %453 = math.tanh %452 : vector<2x16xf32>
    %454 = vector.extract_strided_slice %451 {offsets = [0, 0], sizes = [2, 16], strides = [1, 1]} : vector<2x48xf32> to vector<2x16xf32>
    %455 = vector.extract_strided_slice %451 {offsets = [0, 16], sizes = [2, 16], strides = [1, 1]} : vector<2x48xf32> to vector<2x16xf32>
    %456 = vector.extract_strided_slice %451 {offsets = [0, 32], sizes = [2, 16], strides = [1, 1]} : vector<2x48xf32> to vector<2x16xf32>
    %457 = arith.mulf %455, %408 : vector<2x16xf32>
    %458 = arith.mulf %454, %453 : vector<2x16xf32>
    %459 = arith.addf %457, %458 : vector<2x16xf32>
    %460 = math.tanh %459 : vector<2x16xf32>
    %461 = arith.mulf %456, %460 : vector<2x16xf32>
    %462 = arith.index_cast %c8_i32 : i32 to index
    %c0_143 = arith.constant 0 : index
    %c0_144 = arith.constant 0 : index
    %463 = vector.load %arg4[%462, %c0_143, %c0_144] : memref<16x2x16xf32, #tpu.memory_space<vmem>>, vector<1x2x16xf32>
    %464 = vector.shape_cast %463 : vector<1x2x16xf32> to vector<2x16xf32>
    %465 = vector.shape_cast %439 : vector<2x16xf32> to vector<1x2x16xf32>
    tpu.vector_store %arg4[%462, %c0_143, %c0_144], %465 {strides = array<i32>} : memref<16x2x16xf32, #tpu.memory_space<vmem>>, vector<1x2x16xf32>,
    %466 = arith.index_cast %440 : i32 to index
    %c0_145 = arith.constant 0 : index
    %c0_146 = arith.constant 0 : index
    %467 = vector.load %arg5[%466, %c0_145, %c0_146] : memref<16x2x16xf32, #tpu.memory_space<vmem>>, vector<1x2x16xf32>
    %468 = vector.shape_cast %467 : vector<1x2x16xf32> to vector<2x16xf32>
    %469 = vector.shape_cast %461 : vector<2x16xf32> to vector<1x2x16xf32>
    tpu.vector_store %arg5[%466, %c0_145, %c0_146], %469 {strides = array<i32>} : memref<16x2x16xf32, #tpu.memory_space<vmem>>, vector<1x2x16xf32>,
    %c9_i32 = arith.constant 9 : i32
    %c0_147 = arith.constant 0 : index
    %470 = arith.index_cast %c9_i32 : i32 to index
    %c0_148 = arith.constant 0 : index
    %c0_149 = arith.constant 0 : index
    %471 = vector.load %arg1[%c0_147, %470, %c0_148, %c0_149] : memref<1x16x2x64xf32, #tpu.memory_space<vmem>>, vector<1x1x2x64xf32>
    %472 = vector.shape_cast %471 : vector<1x1x2x64xf32> to vector<2x64xf32>
    %cst_150 = arith.constant dense<0.000000e+00> : vector<2x64xf32>
    %473 = tpu.matmul %439, %4, %cst_150 {dimension_numbers = #tpu.dot_dimension_numbers<[1], [0], [0], [1], [0, 0, 1, 1], [], []>} : vector<2x16xf32>, vector<16x64xf32>, vector<2x64xf32> -> vector<2x64xf32>
    %474 = arith.addf %472, %473 : vector<2x64xf32>
    %475 = vector.extract_strided_slice %474 {offsets = [0, 0], sizes = [2, 48], strides = [1, 1]} : vector<2x64xf32> to vector<2x48xf32>
    %476 = arith.negf %475 : vector<2x48xf32>
    %477 = math.exp %476 : vector<2x48xf32>
    %cst_151 = arith.constant 1.000000e+00 : f32
    %478 = vector.broadcast %cst_151 : f32 to vector<2x48xf32>
    %479 = arith.addf %478, %477 : vector<2x48xf32>
    %480 = arith.divf %478, %479 : vector<2x48xf32>
    %481 = vector.extract_strided_slice %474 {offsets = [0, 48], sizes = [2, 16], strides = [1, 1]} : vector<2x64xf32> to vector<2x16xf32>
    %482 = math.tanh %481 : vector<2x16xf32>
    %483 = vector.extract_strided_slice %480 {offsets = [0, 0], sizes = [2, 16], strides = [1, 1]} : vector<2x48xf32> to vector<2x16xf32>
    %484 = vector.extract_strided_slice %480 {offsets = [0, 16], sizes = [2, 16], strides = [1, 1]} : vector<2x48xf32> to vector<2x16xf32>
    %485 = vector.extract_strided_slice %480 {offsets = [0, 32], sizes = [2, 16], strides = [1, 1]} : vector<2x48xf32> to vector<2x16xf32>
    %486 = arith.mulf %484, %437 : vector<2x16xf32>
    %487 = arith.mulf %483, %482 : vector<2x16xf32>
    %488 = arith.addf %486, %487 : vector<2x16xf32>
    %489 = math.tanh %488 : vector<2x16xf32>
    %490 = arith.mulf %485, %489 : vector<2x16xf32>
    %c15_i32_152 = arith.constant 15 : i32
    %491 = arith.subi %c15_i32_152, %c9_i32 : i32
    %c0_153 = arith.constant 0 : index
    %492 = arith.index_cast %491 : i32 to index
    %c0_154 = arith.constant 0 : index
    %c0_155 = arith.constant 0 : index
    %493 = vector.load %arg2[%c0_153, %492, %c0_154, %c0_155] : memref<1x16x2x64xf32, #tpu.memory_space<vmem>>, vector<1x1x2x64xf32>
    %494 = vector.shape_cast %493 : vector<1x1x2x64xf32> to vector<2x64xf32>
    %cst_156 = arith.constant dense<0.000000e+00> : vector<2x64xf32>
    %495 = tpu.matmul %461, %6, %cst_156 {dimension_numbers = #tpu.dot_dimension_numbers<[1], [0], [0], [1], [0, 0, 1, 1], [], []>} : vector<2x16xf32>, vector<16x64xf32>, vector<2x64xf32> -> vector<2x64xf32>
    %496 = arith.addf %494, %495 : vector<2x64xf32>
    %497 = vector.extract_strided_slice %496 {offsets = [0, 0], sizes = [2, 48], strides = [1, 1]} : vector<2x64xf32> to vector<2x48xf32>
    %498 = arith.negf %497 : vector<2x48xf32>
    %499 = math.exp %498 : vector<2x48xf32>
    %cst_157 = arith.constant 1.000000e+00 : f32
    %500 = vector.broadcast %cst_157 : f32 to vector<2x48xf32>
    %501 = arith.addf %500, %499 : vector<2x48xf32>
    %502 = arith.divf %500, %501 : vector<2x48xf32>
    %503 = vector.extract_strided_slice %496 {offsets = [0, 48], sizes = [2, 16], strides = [1, 1]} : vector<2x64xf32> to vector<2x16xf32>
    %504 = math.tanh %503 : vector<2x16xf32>
    %505 = vector.extract_strided_slice %502 {offsets = [0, 0], sizes = [2, 16], strides = [1, 1]} : vector<2x48xf32> to vector<2x16xf32>
    %506 = vector.extract_strided_slice %502 {offsets = [0, 16], sizes = [2, 16], strides = [1, 1]} : vector<2x48xf32> to vector<2x16xf32>
    %507 = vector.extract_strided_slice %502 {offsets = [0, 32], sizes = [2, 16], strides = [1, 1]} : vector<2x48xf32> to vector<2x16xf32>
    %508 = arith.mulf %506, %459 : vector<2x16xf32>
    %509 = arith.mulf %505, %504 : vector<2x16xf32>
    %510 = arith.addf %508, %509 : vector<2x16xf32>
    %511 = math.tanh %510 : vector<2x16xf32>
    %512 = arith.mulf %507, %511 : vector<2x16xf32>
    %513 = arith.index_cast %c9_i32 : i32 to index
    %c0_158 = arith.constant 0 : index
    %c0_159 = arith.constant 0 : index
    %514 = vector.load %arg4[%513, %c0_158, %c0_159] : memref<16x2x16xf32, #tpu.memory_space<vmem>>, vector<1x2x16xf32>
    %515 = vector.shape_cast %514 : vector<1x2x16xf32> to vector<2x16xf32>
    %516 = vector.shape_cast %490 : vector<2x16xf32> to vector<1x2x16xf32>
    tpu.vector_store %arg4[%513, %c0_158, %c0_159], %516 {strides = array<i32>} : memref<16x2x16xf32, #tpu.memory_space<vmem>>, vector<1x2x16xf32>,
    %517 = arith.index_cast %491 : i32 to index
    %c0_160 = arith.constant 0 : index
    %c0_161 = arith.constant 0 : index
    %518 = vector.load %arg5[%517, %c0_160, %c0_161] : memref<16x2x16xf32, #tpu.memory_space<vmem>>, vector<1x2x16xf32>
    %519 = vector.shape_cast %518 : vector<1x2x16xf32> to vector<2x16xf32>
    %520 = vector.shape_cast %512 : vector<2x16xf32> to vector<1x2x16xf32>
    tpu.vector_store %arg5[%517, %c0_160, %c0_161], %520 {strides = array<i32>} : memref<16x2x16xf32, #tpu.memory_space<vmem>>, vector<1x2x16xf32>,
    %c10_i32 = arith.constant 10 : i32
    %c0_162 = arith.constant 0 : index
    %521 = arith.index_cast %c10_i32 : i32 to index
    %c0_163 = arith.constant 0 : index
    %c0_164 = arith.constant 0 : index
    %522 = vector.load %arg1[%c0_162, %521, %c0_163, %c0_164] : memref<1x16x2x64xf32, #tpu.memory_space<vmem>>, vector<1x1x2x64xf32>
    %523 = vector.shape_cast %522 : vector<1x1x2x64xf32> to vector<2x64xf32>
    %cst_165 = arith.constant dense<0.000000e+00> : vector<2x64xf32>
    %524 = tpu.matmul %490, %4, %cst_165 {dimension_numbers = #tpu.dot_dimension_numbers<[1], [0], [0], [1], [0, 0, 1, 1], [], []>} : vector<2x16xf32>, vector<16x64xf32>, vector<2x64xf32> -> vector<2x64xf32>
    %525 = arith.addf %523, %524 : vector<2x64xf32>
    %526 = vector.extract_strided_slice %525 {offsets = [0, 0], sizes = [2, 48], strides = [1, 1]} : vector<2x64xf32> to vector<2x48xf32>
    %527 = arith.negf %526 : vector<2x48xf32>
    %528 = math.exp %527 : vector<2x48xf32>
    %cst_166 = arith.constant 1.000000e+00 : f32
    %529 = vector.broadcast %cst_166 : f32 to vector<2x48xf32>
    %530 = arith.addf %529, %528 : vector<2x48xf32>
    %531 = arith.divf %529, %530 : vector<2x48xf32>
    %532 = vector.extract_strided_slice %525 {offsets = [0, 48], sizes = [2, 16], strides = [1, 1]} : vector<2x64xf32> to vector<2x16xf32>
    %533 = math.tanh %532 : vector<2x16xf32>
    %534 = vector.extract_strided_slice %531 {offsets = [0, 0], sizes = [2, 16], strides = [1, 1]} : vector<2x48xf32> to vector<2x16xf32>
    %535 = vector.extract_strided_slice %531 {offsets = [0, 16], sizes = [2, 16], strides = [1, 1]} : vector<2x48xf32> to vector<2x16xf32>
    %536 = vector.extract_strided_slice %531 {offsets = [0, 32], sizes = [2, 16], strides = [1, 1]} : vector<2x48xf32> to vector<2x16xf32>
    %537 = arith.mulf %535, %488 : vector<2x16xf32>
    %538 = arith.mulf %534, %533 : vector<2x16xf32>
    %539 = arith.addf %537, %538 : vector<2x16xf32>
    %540 = math.tanh %539 : vector<2x16xf32>
    %541 = arith.mulf %536, %540 : vector<2x16xf32>
    %c15_i32_167 = arith.constant 15 : i32
    %542 = arith.subi %c15_i32_167, %c10_i32 : i32
    %c0_168 = arith.constant 0 : index
    %543 = arith.index_cast %542 : i32 to index
    %c0_169 = arith.constant 0 : index
    %c0_170 = arith.constant 0 : index
    %544 = vector.load %arg2[%c0_168, %543, %c0_169, %c0_170] : memref<1x16x2x64xf32, #tpu.memory_space<vmem>>, vector<1x1x2x64xf32>
    %545 = vector.shape_cast %544 : vector<1x1x2x64xf32> to vector<2x64xf32>
    %cst_171 = arith.constant dense<0.000000e+00> : vector<2x64xf32>
    %546 = tpu.matmul %512, %6, %cst_171 {dimension_numbers = #tpu.dot_dimension_numbers<[1], [0], [0], [1], [0, 0, 1, 1], [], []>} : vector<2x16xf32>, vector<16x64xf32>, vector<2x64xf32> -> vector<2x64xf32>
    %547 = arith.addf %545, %546 : vector<2x64xf32>
    %548 = vector.extract_strided_slice %547 {offsets = [0, 0], sizes = [2, 48], strides = [1, 1]} : vector<2x64xf32> to vector<2x48xf32>
    %549 = arith.negf %548 : vector<2x48xf32>
    %550 = math.exp %549 : vector<2x48xf32>
    %cst_172 = arith.constant 1.000000e+00 : f32
    %551 = vector.broadcast %cst_172 : f32 to vector<2x48xf32>
    %552 = arith.addf %551, %550 : vector<2x48xf32>
    %553 = arith.divf %551, %552 : vector<2x48xf32>
    %554 = vector.extract_strided_slice %547 {offsets = [0, 48], sizes = [2, 16], strides = [1, 1]} : vector<2x64xf32> to vector<2x16xf32>
    %555 = math.tanh %554 : vector<2x16xf32>
    %556 = vector.extract_strided_slice %553 {offsets = [0, 0], sizes = [2, 16], strides = [1, 1]} : vector<2x48xf32> to vector<2x16xf32>
    %557 = vector.extract_strided_slice %553 {offsets = [0, 16], sizes = [2, 16], strides = [1, 1]} : vector<2x48xf32> to vector<2x16xf32>
    %558 = vector.extract_strided_slice %553 {offsets = [0, 32], sizes = [2, 16], strides = [1, 1]} : vector<2x48xf32> to vector<2x16xf32>
    %559 = arith.mulf %557, %510 : vector<2x16xf32>
    %560 = arith.mulf %556, %555 : vector<2x16xf32>
    %561 = arith.addf %559, %560 : vector<2x16xf32>
    %562 = math.tanh %561 : vector<2x16xf32>
    %563 = arith.mulf %558, %562 : vector<2x16xf32>
    %564 = arith.index_cast %c10_i32 : i32 to index
    %c0_173 = arith.constant 0 : index
    %c0_174 = arith.constant 0 : index
    %565 = vector.load %arg4[%564, %c0_173, %c0_174] : memref<16x2x16xf32, #tpu.memory_space<vmem>>, vector<1x2x16xf32>
    %566 = vector.shape_cast %565 : vector<1x2x16xf32> to vector<2x16xf32>
    %567 = vector.shape_cast %541 : vector<2x16xf32> to vector<1x2x16xf32>
    tpu.vector_store %arg4[%564, %c0_173, %c0_174], %567 {strides = array<i32>} : memref<16x2x16xf32, #tpu.memory_space<vmem>>, vector<1x2x16xf32>,
    %568 = arith.index_cast %542 : i32 to index
    %c0_175 = arith.constant 0 : index
    %c0_176 = arith.constant 0 : index
    %569 = vector.load %arg5[%568, %c0_175, %c0_176] : memref<16x2x16xf32, #tpu.memory_space<vmem>>, vector<1x2x16xf32>
    %570 = vector.shape_cast %569 : vector<1x2x16xf32> to vector<2x16xf32>
    %571 = vector.shape_cast %563 : vector<2x16xf32> to vector<1x2x16xf32>
    tpu.vector_store %arg5[%568, %c0_175, %c0_176], %571 {strides = array<i32>} : memref<16x2x16xf32, #tpu.memory_space<vmem>>, vector<1x2x16xf32>,
    %c11_i32 = arith.constant 11 : i32
    %c0_177 = arith.constant 0 : index
    %572 = arith.index_cast %c11_i32 : i32 to index
    %c0_178 = arith.constant 0 : index
    %c0_179 = arith.constant 0 : index
    %573 = vector.load %arg1[%c0_177, %572, %c0_178, %c0_179] : memref<1x16x2x64xf32, #tpu.memory_space<vmem>>, vector<1x1x2x64xf32>
    %574 = vector.shape_cast %573 : vector<1x1x2x64xf32> to vector<2x64xf32>
    %cst_180 = arith.constant dense<0.000000e+00> : vector<2x64xf32>
    %575 = tpu.matmul %541, %4, %cst_180 {dimension_numbers = #tpu.dot_dimension_numbers<[1], [0], [0], [1], [0, 0, 1, 1], [], []>} : vector<2x16xf32>, vector<16x64xf32>, vector<2x64xf32> -> vector<2x64xf32>
    %576 = arith.addf %574, %575 : vector<2x64xf32>
    %577 = vector.extract_strided_slice %576 {offsets = [0, 0], sizes = [2, 48], strides = [1, 1]} : vector<2x64xf32> to vector<2x48xf32>
    %578 = arith.negf %577 : vector<2x48xf32>
    %579 = math.exp %578 : vector<2x48xf32>
    %cst_181 = arith.constant 1.000000e+00 : f32
    %580 = vector.broadcast %cst_181 : f32 to vector<2x48xf32>
    %581 = arith.addf %580, %579 : vector<2x48xf32>
    %582 = arith.divf %580, %581 : vector<2x48xf32>
    %583 = vector.extract_strided_slice %576 {offsets = [0, 48], sizes = [2, 16], strides = [1, 1]} : vector<2x64xf32> to vector<2x16xf32>
    %584 = math.tanh %583 : vector<2x16xf32>
    %585 = vector.extract_strided_slice %582 {offsets = [0, 0], sizes = [2, 16], strides = [1, 1]} : vector<2x48xf32> to vector<2x16xf32>
    %586 = vector.extract_strided_slice %582 {offsets = [0, 16], sizes = [2, 16], strides = [1, 1]} : vector<2x48xf32> to vector<2x16xf32>
    %587 = vector.extract_strided_slice %582 {offsets = [0, 32], sizes = [2, 16], strides = [1, 1]} : vector<2x48xf32> to vector<2x16xf32>
    %588 = arith.mulf %586, %539 : vector<2x16xf32>
    %589 = arith.mulf %585, %584 : vector<2x16xf32>
    %590 = arith.addf %588, %589 : vector<2x16xf32>
    %591 = math.tanh %590 : vector<2x16xf32>
    %592 = arith.mulf %587, %591 : vector<2x16xf32>
    %c15_i32_182 = arith.constant 15 : i32
    %593 = arith.subi %c15_i32_182, %c11_i32 : i32
    %c0_183 = arith.constant 0 : index
    %594 = arith.index_cast %593 : i32 to index
    %c0_184 = arith.constant 0 : index
    %c0_185 = arith.constant 0 : index
    %595 = vector.load %arg2[%c0_183, %594, %c0_184, %c0_185] : memref<1x16x2x64xf32, #tpu.memory_space<vmem>>, vector<1x1x2x64xf32>
    %596 = vector.shape_cast %595 : vector<1x1x2x64xf32> to vector<2x64xf32>
    %cst_186 = arith.constant dense<0.000000e+00> : vector<2x64xf32>
    %597 = tpu.matmul %563, %6, %cst_186 {dimension_numbers = #tpu.dot_dimension_numbers<[1], [0], [0], [1], [0, 0, 1, 1], [], []>} : vector<2x16xf32>, vector<16x64xf32>, vector<2x64xf32> -> vector<2x64xf32>
    %598 = arith.addf %596, %597 : vector<2x64xf32>
    %599 = vector.extract_strided_slice %598 {offsets = [0, 0], sizes = [2, 48], strides = [1, 1]} : vector<2x64xf32> to vector<2x48xf32>
    %600 = arith.negf %599 : vector<2x48xf32>
    %601 = math.exp %600 : vector<2x48xf32>
    %cst_187 = arith.constant 1.000000e+00 : f32
    %602 = vector.broadcast %cst_187 : f32 to vector<2x48xf32>
    %603 = arith.addf %602, %601 : vector<2x48xf32>
    %604 = arith.divf %602, %603 : vector<2x48xf32>
    %605 = vector.extract_strided_slice %598 {offsets = [0, 48], sizes = [2, 16], strides = [1, 1]} : vector<2x64xf32> to vector<2x16xf32>
    %606 = math.tanh %605 : vector<2x16xf32>
    %607 = vector.extract_strided_slice %604 {offsets = [0, 0], sizes = [2, 16], strides = [1, 1]} : vector<2x48xf32> to vector<2x16xf32>
    %608 = vector.extract_strided_slice %604 {offsets = [0, 16], sizes = [2, 16], strides = [1, 1]} : vector<2x48xf32> to vector<2x16xf32>
    %609 = vector.extract_strided_slice %604 {offsets = [0, 32], sizes = [2, 16], strides = [1, 1]} : vector<2x48xf32> to vector<2x16xf32>
    %610 = arith.mulf %608, %561 : vector<2x16xf32>
    %611 = arith.mulf %607, %606 : vector<2x16xf32>
    %612 = arith.addf %610, %611 : vector<2x16xf32>
    %613 = math.tanh %612 : vector<2x16xf32>
    %614 = arith.mulf %609, %613 : vector<2x16xf32>
    %615 = arith.index_cast %c11_i32 : i32 to index
    %c0_188 = arith.constant 0 : index
    %c0_189 = arith.constant 0 : index
    %616 = vector.load %arg4[%615, %c0_188, %c0_189] : memref<16x2x16xf32, #tpu.memory_space<vmem>>, vector<1x2x16xf32>
    %617 = vector.shape_cast %616 : vector<1x2x16xf32> to vector<2x16xf32>
    %618 = vector.shape_cast %592 : vector<2x16xf32> to vector<1x2x16xf32>
    tpu.vector_store %arg4[%615, %c0_188, %c0_189], %618 {strides = array<i32>} : memref<16x2x16xf32, #tpu.memory_space<vmem>>, vector<1x2x16xf32>,
    %619 = arith.index_cast %593 : i32 to index
    %c0_190 = arith.constant 0 : index
    %c0_191 = arith.constant 0 : index
    %620 = vector.load %arg5[%619, %c0_190, %c0_191] : memref<16x2x16xf32, #tpu.memory_space<vmem>>, vector<1x2x16xf32>
    %621 = vector.shape_cast %620 : vector<1x2x16xf32> to vector<2x16xf32>
    %622 = vector.shape_cast %614 : vector<2x16xf32> to vector<1x2x16xf32>
    tpu.vector_store %arg5[%619, %c0_190, %c0_191], %622 {strides = array<i32>} : memref<16x2x16xf32, #tpu.memory_space<vmem>>, vector<1x2x16xf32>,
    %c12_i32 = arith.constant 12 : i32
    %c0_192 = arith.constant 0 : index
    %623 = arith.index_cast %c12_i32 : i32 to index
    %c0_193 = arith.constant 0 : index
    %c0_194 = arith.constant 0 : index
    %624 = vector.load %arg1[%c0_192, %623, %c0_193, %c0_194] : memref<1x16x2x64xf32, #tpu.memory_space<vmem>>, vector<1x1x2x64xf32>
    %625 = vector.shape_cast %624 : vector<1x1x2x64xf32> to vector<2x64xf32>
    %cst_195 = arith.constant dense<0.000000e+00> : vector<2x64xf32>
    %626 = tpu.matmul %592, %4, %cst_195 {dimension_numbers = #tpu.dot_dimension_numbers<[1], [0], [0], [1], [0, 0, 1, 1], [], []>} : vector<2x16xf32>, vector<16x64xf32>, vector<2x64xf32> -> vector<2x64xf32>
    %627 = arith.addf %625, %626 : vector<2x64xf32>
    %628 = vector.extract_strided_slice %627 {offsets = [0, 0], sizes = [2, 48], strides = [1, 1]} : vector<2x64xf32> to vector<2x48xf32>
    %629 = arith.negf %628 : vector<2x48xf32>
    %630 = math.exp %629 : vector<2x48xf32>
    %cst_196 = arith.constant 1.000000e+00 : f32
    %631 = vector.broadcast %cst_196 : f32 to vector<2x48xf32>
    %632 = arith.addf %631, %630 : vector<2x48xf32>
    %633 = arith.divf %631, %632 : vector<2x48xf32>
    %634 = vector.extract_strided_slice %627 {offsets = [0, 48], sizes = [2, 16], strides = [1, 1]} : vector<2x64xf32> to vector<2x16xf32>
    %635 = math.tanh %634 : vector<2x16xf32>
    %636 = vector.extract_strided_slice %633 {offsets = [0, 0], sizes = [2, 16], strides = [1, 1]} : vector<2x48xf32> to vector<2x16xf32>
    %637 = vector.extract_strided_slice %633 {offsets = [0, 16], sizes = [2, 16], strides = [1, 1]} : vector<2x48xf32> to vector<2x16xf32>
    %638 = vector.extract_strided_slice %633 {offsets = [0, 32], sizes = [2, 16], strides = [1, 1]} : vector<2x48xf32> to vector<2x16xf32>
    %639 = arith.mulf %637, %590 : vector<2x16xf32>
    %640 = arith.mulf %636, %635 : vector<2x16xf32>
    %641 = arith.addf %639, %640 : vector<2x16xf32>
    %642 = math.tanh %641 : vector<2x16xf32>
    %643 = arith.mulf %638, %642 : vector<2x16xf32>
    %c15_i32_197 = arith.constant 15 : i32
    %644 = arith.subi %c15_i32_197, %c12_i32 : i32
    %c0_198 = arith.constant 0 : index
    %645 = arith.index_cast %644 : i32 to index
    %c0_199 = arith.constant 0 : index
    %c0_200 = arith.constant 0 : index
    %646 = vector.load %arg2[%c0_198, %645, %c0_199, %c0_200] : memref<1x16x2x64xf32, #tpu.memory_space<vmem>>, vector<1x1x2x64xf32>
    %647 = vector.shape_cast %646 : vector<1x1x2x64xf32> to vector<2x64xf32>
    %cst_201 = arith.constant dense<0.000000e+00> : vector<2x64xf32>
    %648 = tpu.matmul %614, %6, %cst_201 {dimension_numbers = #tpu.dot_dimension_numbers<[1], [0], [0], [1], [0, 0, 1, 1], [], []>} : vector<2x16xf32>, vector<16x64xf32>, vector<2x64xf32> -> vector<2x64xf32>
    %649 = arith.addf %647, %648 : vector<2x64xf32>
    %650 = vector.extract_strided_slice %649 {offsets = [0, 0], sizes = [2, 48], strides = [1, 1]} : vector<2x64xf32> to vector<2x48xf32>
    %651 = arith.negf %650 : vector<2x48xf32>
    %652 = math.exp %651 : vector<2x48xf32>
    %cst_202 = arith.constant 1.000000e+00 : f32
    %653 = vector.broadcast %cst_202 : f32 to vector<2x48xf32>
    %654 = arith.addf %653, %652 : vector<2x48xf32>
    %655 = arith.divf %653, %654 : vector<2x48xf32>
    %656 = vector.extract_strided_slice %649 {offsets = [0, 48], sizes = [2, 16], strides = [1, 1]} : vector<2x64xf32> to vector<2x16xf32>
    %657 = math.tanh %656 : vector<2x16xf32>
    %658 = vector.extract_strided_slice %655 {offsets = [0, 0], sizes = [2, 16], strides = [1, 1]} : vector<2x48xf32> to vector<2x16xf32>
    %659 = vector.extract_strided_slice %655 {offsets = [0, 16], sizes = [2, 16], strides = [1, 1]} : vector<2x48xf32> to vector<2x16xf32>
    %660 = vector.extract_strided_slice %655 {offsets = [0, 32], sizes = [2, 16], strides = [1, 1]} : vector<2x48xf32> to vector<2x16xf32>
    %661 = arith.mulf %659, %612 : vector<2x16xf32>
    %662 = arith.mulf %658, %657 : vector<2x16xf32>
    %663 = arith.addf %661, %662 : vector<2x16xf32>
    %664 = math.tanh %663 : vector<2x16xf32>
    %665 = arith.mulf %660, %664 : vector<2x16xf32>
    %666 = arith.index_cast %c12_i32 : i32 to index
    %c0_203 = arith.constant 0 : index
    %c0_204 = arith.constant 0 : index
    %667 = vector.load %arg4[%666, %c0_203, %c0_204] : memref<16x2x16xf32, #tpu.memory_space<vmem>>, vector<1x2x16xf32>
    %668 = vector.shape_cast %667 : vector<1x2x16xf32> to vector<2x16xf32>
    %669 = vector.shape_cast %643 : vector<2x16xf32> to vector<1x2x16xf32>
    tpu.vector_store %arg4[%666, %c0_203, %c0_204], %669 {strides = array<i32>} : memref<16x2x16xf32, #tpu.memory_space<vmem>>, vector<1x2x16xf32>,
    %670 = arith.index_cast %644 : i32 to index
    %c0_205 = arith.constant 0 : index
    %c0_206 = arith.constant 0 : index
    %671 = vector.load %arg5[%670, %c0_205, %c0_206] : memref<16x2x16xf32, #tpu.memory_space<vmem>>, vector<1x2x16xf32>
    %672 = vector.shape_cast %671 : vector<1x2x16xf32> to vector<2x16xf32>
    %673 = vector.shape_cast %665 : vector<2x16xf32> to vector<1x2x16xf32>
    tpu.vector_store %arg5[%670, %c0_205, %c0_206], %673 {strides = array<i32>} : memref<16x2x16xf32, #tpu.memory_space<vmem>>, vector<1x2x16xf32>,
    %c13_i32 = arith.constant 13 : i32
    %c0_207 = arith.constant 0 : index
    %674 = arith.index_cast %c13_i32 : i32 to index
    %c0_208 = arith.constant 0 : index
    %c0_209 = arith.constant 0 : index
    %675 = vector.load %arg1[%c0_207, %674, %c0_208, %c0_209] : memref<1x16x2x64xf32, #tpu.memory_space<vmem>>, vector<1x1x2x64xf32>
    %676 = vector.shape_cast %675 : vector<1x1x2x64xf32> to vector<2x64xf32>
    %cst_210 = arith.constant dense<0.000000e+00> : vector<2x64xf32>
    %677 = tpu.matmul %643, %4, %cst_210 {dimension_numbers = #tpu.dot_dimension_numbers<[1], [0], [0], [1], [0, 0, 1, 1], [], []>} : vector<2x16xf32>, vector<16x64xf32>, vector<2x64xf32> -> vector<2x64xf32>
    %678 = arith.addf %676, %677 : vector<2x64xf32>
    %679 = vector.extract_strided_slice %678 {offsets = [0, 0], sizes = [2, 48], strides = [1, 1]} : vector<2x64xf32> to vector<2x48xf32>
    %680 = arith.negf %679 : vector<2x48xf32>
    %681 = math.exp %680 : vector<2x48xf32>
    %cst_211 = arith.constant 1.000000e+00 : f32
    %682 = vector.broadcast %cst_211 : f32 to vector<2x48xf32>
    %683 = arith.addf %682, %681 : vector<2x48xf32>
    %684 = arith.divf %682, %683 : vector<2x48xf32>
    %685 = vector.extract_strided_slice %678 {offsets = [0, 48], sizes = [2, 16], strides = [1, 1]} : vector<2x64xf32> to vector<2x16xf32>
    %686 = math.tanh %685 : vector<2x16xf32>
    %687 = vector.extract_strided_slice %684 {offsets = [0, 0], sizes = [2, 16], strides = [1, 1]} : vector<2x48xf32> to vector<2x16xf32>
    %688 = vector.extract_strided_slice %684 {offsets = [0, 16], sizes = [2, 16], strides = [1, 1]} : vector<2x48xf32> to vector<2x16xf32>
    %689 = vector.extract_strided_slice %684 {offsets = [0, 32], sizes = [2, 16], strides = [1, 1]} : vector<2x48xf32> to vector<2x16xf32>
    %690 = arith.mulf %688, %641 : vector<2x16xf32>
    %691 = arith.mulf %687, %686 : vector<2x16xf32>
    %692 = arith.addf %690, %691 : vector<2x16xf32>
    %693 = math.tanh %692 : vector<2x16xf32>
    %694 = arith.mulf %689, %693 : vector<2x16xf32>
    %c15_i32_212 = arith.constant 15 : i32
    %695 = arith.subi %c15_i32_212, %c13_i32 : i32
    %c0_213 = arith.constant 0 : index
    %696 = arith.index_cast %695 : i32 to index
    %c0_214 = arith.constant 0 : index
    %c0_215 = arith.constant 0 : index
    %697 = vector.load %arg2[%c0_213, %696, %c0_214, %c0_215] : memref<1x16x2x64xf32, #tpu.memory_space<vmem>>, vector<1x1x2x64xf32>
    %698 = vector.shape_cast %697 : vector<1x1x2x64xf32> to vector<2x64xf32>
    %cst_216 = arith.constant dense<0.000000e+00> : vector<2x64xf32>
    %699 = tpu.matmul %665, %6, %cst_216 {dimension_numbers = #tpu.dot_dimension_numbers<[1], [0], [0], [1], [0, 0, 1, 1], [], []>} : vector<2x16xf32>, vector<16x64xf32>, vector<2x64xf32> -> vector<2x64xf32>
    %700 = arith.addf %698, %699 : vector<2x64xf32>
    %701 = vector.extract_strided_slice %700 {offsets = [0, 0], sizes = [2, 48], strides = [1, 1]} : vector<2x64xf32> to vector<2x48xf32>
    %702 = arith.negf %701 : vector<2x48xf32>
    %703 = math.exp %702 : vector<2x48xf32>
    %cst_217 = arith.constant 1.000000e+00 : f32
    %704 = vector.broadcast %cst_217 : f32 to vector<2x48xf32>
    %705 = arith.addf %704, %703 : vector<2x48xf32>
    %706 = arith.divf %704, %705 : vector<2x48xf32>
    %707 = vector.extract_strided_slice %700 {offsets = [0, 48], sizes = [2, 16], strides = [1, 1]} : vector<2x64xf32> to vector<2x16xf32>
    %708 = math.tanh %707 : vector<2x16xf32>
    %709 = vector.extract_strided_slice %706 {offsets = [0, 0], sizes = [2, 16], strides = [1, 1]} : vector<2x48xf32> to vector<2x16xf32>
    %710 = vector.extract_strided_slice %706 {offsets = [0, 16], sizes = [2, 16], strides = [1, 1]} : vector<2x48xf32> to vector<2x16xf32>
    %711 = vector.extract_strided_slice %706 {offsets = [0, 32], sizes = [2, 16], strides = [1, 1]} : vector<2x48xf32> to vector<2x16xf32>
    %712 = arith.mulf %710, %663 : vector<2x16xf32>
    %713 = arith.mulf %709, %708 : vector<2x16xf32>
    %714 = arith.addf %712, %713 : vector<2x16xf32>
    %715 = math.tanh %714 : vector<2x16xf32>
    %716 = arith.mulf %711, %715 : vector<2x16xf32>
    %717 = arith.index_cast %c13_i32 : i32 to index
    %c0_218 = arith.constant 0 : index
    %c0_219 = arith.constant 0 : index
    %718 = vector.load %arg4[%717, %c0_218, %c0_219] : memref<16x2x16xf32, #tpu.memory_space<vmem>>, vector<1x2x16xf32>
    %719 = vector.shape_cast %718 : vector<1x2x16xf32> to vector<2x16xf32>
    %720 = vector.shape_cast %694 : vector<2x16xf32> to vector<1x2x16xf32>
    tpu.vector_store %arg4[%717, %c0_218, %c0_219], %720 {strides = array<i32>} : memref<16x2x16xf32, #tpu.memory_space<vmem>>, vector<1x2x16xf32>,
    %721 = arith.index_cast %695 : i32 to index
    %c0_220 = arith.constant 0 : index
    %c0_221 = arith.constant 0 : index
    %722 = vector.load %arg5[%721, %c0_220, %c0_221] : memref<16x2x16xf32, #tpu.memory_space<vmem>>, vector<1x2x16xf32>
    %723 = vector.shape_cast %722 : vector<1x2x16xf32> to vector<2x16xf32>
    %724 = vector.shape_cast %716 : vector<2x16xf32> to vector<1x2x16xf32>
    tpu.vector_store %arg5[%721, %c0_220, %c0_221], %724 {strides = array<i32>} : memref<16x2x16xf32, #tpu.memory_space<vmem>>, vector<1x2x16xf32>,
    %c14_i32 = arith.constant 14 : i32
    %c0_222 = arith.constant 0 : index
    %725 = arith.index_cast %c14_i32 : i32 to index
    %c0_223 = arith.constant 0 : index
    %c0_224 = arith.constant 0 : index
    %726 = vector.load %arg1[%c0_222, %725, %c0_223, %c0_224] : memref<1x16x2x64xf32, #tpu.memory_space<vmem>>, vector<1x1x2x64xf32>
    %727 = vector.shape_cast %726 : vector<1x1x2x64xf32> to vector<2x64xf32>
    %cst_225 = arith.constant dense<0.000000e+00> : vector<2x64xf32>
    %728 = tpu.matmul %694, %4, %cst_225 {dimension_numbers = #tpu.dot_dimension_numbers<[1], [0], [0], [1], [0, 0, 1, 1], [], []>} : vector<2x16xf32>, vector<16x64xf32>, vector<2x64xf32> -> vector<2x64xf32>
    %729 = arith.addf %727, %728 : vector<2x64xf32>
    %730 = vector.extract_strided_slice %729 {offsets = [0, 0], sizes = [2, 48], strides = [1, 1]} : vector<2x64xf32> to vector<2x48xf32>
    %731 = arith.negf %730 : vector<2x48xf32>
    %732 = math.exp %731 : vector<2x48xf32>
    %cst_226 = arith.constant 1.000000e+00 : f32
    %733 = vector.broadcast %cst_226 : f32 to vector<2x48xf32>
    %734 = arith.addf %733, %732 : vector<2x48xf32>
    %735 = arith.divf %733, %734 : vector<2x48xf32>
    %736 = vector.extract_strided_slice %729 {offsets = [0, 48], sizes = [2, 16], strides = [1, 1]} : vector<2x64xf32> to vector<2x16xf32>
    %737 = math.tanh %736 : vector<2x16xf32>
    %738 = vector.extract_strided_slice %735 {offsets = [0, 0], sizes = [2, 16], strides = [1, 1]} : vector<2x48xf32> to vector<2x16xf32>
    %739 = vector.extract_strided_slice %735 {offsets = [0, 16], sizes = [2, 16], strides = [1, 1]} : vector<2x48xf32> to vector<2x16xf32>
    %740 = vector.extract_strided_slice %735 {offsets = [0, 32], sizes = [2, 16], strides = [1, 1]} : vector<2x48xf32> to vector<2x16xf32>
    %741 = arith.mulf %739, %692 : vector<2x16xf32>
    %742 = arith.mulf %738, %737 : vector<2x16xf32>
    %743 = arith.addf %741, %742 : vector<2x16xf32>
    %744 = math.tanh %743 : vector<2x16xf32>
    %745 = arith.mulf %740, %744 : vector<2x16xf32>
    %c15_i32_227 = arith.constant 15 : i32
    %746 = arith.subi %c15_i32_227, %c14_i32 : i32
    %c0_228 = arith.constant 0 : index
    %747 = arith.index_cast %746 : i32 to index
    %c0_229 = arith.constant 0 : index
    %c0_230 = arith.constant 0 : index
    %748 = vector.load %arg2[%c0_228, %747, %c0_229, %c0_230] : memref<1x16x2x64xf32, #tpu.memory_space<vmem>>, vector<1x1x2x64xf32>
    %749 = vector.shape_cast %748 : vector<1x1x2x64xf32> to vector<2x64xf32>
    %cst_231 = arith.constant dense<0.000000e+00> : vector<2x64xf32>
    %750 = tpu.matmul %716, %6, %cst_231 {dimension_numbers = #tpu.dot_dimension_numbers<[1], [0], [0], [1], [0, 0, 1, 1], [], []>} : vector<2x16xf32>, vector<16x64xf32>, vector<2x64xf32> -> vector<2x64xf32>
    %751 = arith.addf %749, %750 : vector<2x64xf32>
    %752 = vector.extract_strided_slice %751 {offsets = [0, 0], sizes = [2, 48], strides = [1, 1]} : vector<2x64xf32> to vector<2x48xf32>
    %753 = arith.negf %752 : vector<2x48xf32>
    %754 = math.exp %753 : vector<2x48xf32>
    %cst_232 = arith.constant 1.000000e+00 : f32
    %755 = vector.broadcast %cst_232 : f32 to vector<2x48xf32>
    %756 = arith.addf %755, %754 : vector<2x48xf32>
    %757 = arith.divf %755, %756 : vector<2x48xf32>
    %758 = vector.extract_strided_slice %751 {offsets = [0, 48], sizes = [2, 16], strides = [1, 1]} : vector<2x64xf32> to vector<2x16xf32>
    %759 = math.tanh %758 : vector<2x16xf32>
    %760 = vector.extract_strided_slice %757 {offsets = [0, 0], sizes = [2, 16], strides = [1, 1]} : vector<2x48xf32> to vector<2x16xf32>
    %761 = vector.extract_strided_slice %757 {offsets = [0, 16], sizes = [2, 16], strides = [1, 1]} : vector<2x48xf32> to vector<2x16xf32>
    %762 = vector.extract_strided_slice %757 {offsets = [0, 32], sizes = [2, 16], strides = [1, 1]} : vector<2x48xf32> to vector<2x16xf32>
    %763 = arith.mulf %761, %714 : vector<2x16xf32>
    %764 = arith.mulf %760, %759 : vector<2x16xf32>
    %765 = arith.addf %763, %764 : vector<2x16xf32>
    %766 = math.tanh %765 : vector<2x16xf32>
    %767 = arith.mulf %762, %766 : vector<2x16xf32>
    %768 = arith.index_cast %c14_i32 : i32 to index
    %c0_233 = arith.constant 0 : index
    %c0_234 = arith.constant 0 : index
    %769 = vector.load %arg4[%768, %c0_233, %c0_234] : memref<16x2x16xf32, #tpu.memory_space<vmem>>, vector<1x2x16xf32>
    %770 = vector.shape_cast %769 : vector<1x2x16xf32> to vector<2x16xf32>
    %771 = vector.shape_cast %745 : vector<2x16xf32> to vector<1x2x16xf32>
    tpu.vector_store %arg4[%768, %c0_233, %c0_234], %771 {strides = array<i32>} : memref<16x2x16xf32, #tpu.memory_space<vmem>>, vector<1x2x16xf32>,
    %772 = arith.index_cast %746 : i32 to index
    %c0_235 = arith.constant 0 : index
    %c0_236 = arith.constant 0 : index
    %773 = vector.load %arg5[%772, %c0_235, %c0_236] : memref<16x2x16xf32, #tpu.memory_space<vmem>>, vector<1x2x16xf32>
    %774 = vector.shape_cast %773 : vector<1x2x16xf32> to vector<2x16xf32>
    %775 = vector.shape_cast %767 : vector<2x16xf32> to vector<1x2x16xf32>
    tpu.vector_store %arg5[%772, %c0_235, %c0_236], %775 {strides = array<i32>} : memref<16x2x16xf32, #tpu.memory_space<vmem>>, vector<1x2x16xf32>,
    %c15_i32_237 = arith.constant 15 : i32
    %c0_238 = arith.constant 0 : index
    %776 = arith.index_cast %c15_i32_237 : i32 to index
    %c0_239 = arith.constant 0 : index
    %c0_240 = arith.constant 0 : index
    %777 = vector.load %arg1[%c0_238, %776, %c0_239, %c0_240] : memref<1x16x2x64xf32, #tpu.memory_space<vmem>>, vector<1x1x2x64xf32>
    %778 = vector.shape_cast %777 : vector<1x1x2x64xf32> to vector<2x64xf32>
    %cst_241 = arith.constant dense<0.000000e+00> : vector<2x64xf32>
    %779 = tpu.matmul %745, %4, %cst_241 {dimension_numbers = #tpu.dot_dimension_numbers<[1], [0], [0], [1], [0, 0, 1, 1], [], []>} : vector<2x16xf32>, vector<16x64xf32>, vector<2x64xf32> -> vector<2x64xf32>
    %780 = arith.addf %778, %779 : vector<2x64xf32>
    %781 = vector.extract_strided_slice %780 {offsets = [0, 0], sizes = [2, 48], strides = [1, 1]} : vector<2x64xf32> to vector<2x48xf32>
    %782 = arith.negf %781 : vector<2x48xf32>
    %783 = math.exp %782 : vector<2x48xf32>
    %cst_242 = arith.constant 1.000000e+00 : f32
    %784 = vector.broadcast %cst_242 : f32 to vector<2x48xf32>
    %785 = arith.addf %784, %783 : vector<2x48xf32>
    %786 = arith.divf %784, %785 : vector<2x48xf32>
    %787 = vector.extract_strided_slice %780 {offsets = [0, 48], sizes = [2, 16], strides = [1, 1]} : vector<2x64xf32> to vector<2x16xf32>
    %788 = math.tanh %787 : vector<2x16xf32>
    %789 = vector.extract_strided_slice %786 {offsets = [0, 0], sizes = [2, 16], strides = [1, 1]} : vector<2x48xf32> to vector<2x16xf32>
    %790 = vector.extract_strided_slice %786 {offsets = [0, 16], sizes = [2, 16], strides = [1, 1]} : vector<2x48xf32> to vector<2x16xf32>
    %791 = vector.extract_strided_slice %786 {offsets = [0, 32], sizes = [2, 16], strides = [1, 1]} : vector<2x48xf32> to vector<2x16xf32>
    %792 = arith.mulf %790, %743 : vector<2x16xf32>
    %793 = arith.mulf %789, %788 : vector<2x16xf32>
    %794 = arith.addf %792, %793 : vector<2x16xf32>
    %795 = math.tanh %794 : vector<2x16xf32>
    %796 = arith.mulf %791, %795 : vector<2x16xf32>
    %c15_i32_243 = arith.constant 15 : i32
    %797 = arith.subi %c15_i32_243, %c15_i32_237 : i32
    %c0_244 = arith.constant 0 : index
    %798 = arith.index_cast %797 : i32 to index
    %c0_245 = arith.constant 0 : index
    %c0_246 = arith.constant 0 : index
    %799 = vector.load %arg2[%c0_244, %798, %c0_245, %c0_246] : memref<1x16x2x64xf32, #tpu.memory_space<vmem>>, vector<1x1x2x64xf32>
    %800 = vector.shape_cast %799 : vector<1x1x2x64xf32> to vector<2x64xf32>
    %cst_247 = arith.constant dense<0.000000e+00> : vector<2x64xf32>
    %801 = tpu.matmul %767, %6, %cst_247 {dimension_numbers = #tpu.dot_dimension_numbers<[1], [0], [0], [1], [0, 0, 1, 1], [], []>} : vector<2x16xf32>, vector<16x64xf32>, vector<2x64xf32> -> vector<2x64xf32>
    %802 = arith.addf %800, %801 : vector<2x64xf32>
    %803 = vector.extract_strided_slice %802 {offsets = [0, 0], sizes = [2, 48], strides = [1, 1]} : vector<2x64xf32> to vector<2x48xf32>
    %804 = arith.negf %803 : vector<2x48xf32>
    %805 = math.exp %804 : vector<2x48xf32>
    %cst_248 = arith.constant 1.000000e+00 : f32
    %806 = vector.broadcast %cst_248 : f32 to vector<2x48xf32>
    %807 = arith.addf %806, %805 : vector<2x48xf32>
    %808 = arith.divf %806, %807 : vector<2x48xf32>
    %809 = vector.extract_strided_slice %802 {offsets = [0, 48], sizes = [2, 16], strides = [1, 1]} : vector<2x64xf32> to vector<2x16xf32>
    %810 = math.tanh %809 : vector<2x16xf32>
    %811 = vector.extract_strided_slice %808 {offsets = [0, 0], sizes = [2, 16], strides = [1, 1]} : vector<2x48xf32> to vector<2x16xf32>
    %812 = vector.extract_strided_slice %808 {offsets = [0, 16], sizes = [2, 16], strides = [1, 1]} : vector<2x48xf32> to vector<2x16xf32>
    %813 = vector.extract_strided_slice %808 {offsets = [0, 32], sizes = [2, 16], strides = [1, 1]} : vector<2x48xf32> to vector<2x16xf32>
    %814 = arith.mulf %812, %765 : vector<2x16xf32>
    %815 = arith.mulf %811, %810 : vector<2x16xf32>
    %816 = arith.addf %814, %815 : vector<2x16xf32>
    %817 = math.tanh %816 : vector<2x16xf32>
    %818 = arith.mulf %813, %817 : vector<2x16xf32>
    %819 = arith.index_cast %c15_i32_237 : i32 to index
    %c0_249 = arith.constant 0 : index
    %c0_250 = arith.constant 0 : index
    %820 = vector.load %arg4[%819, %c0_249, %c0_250] : memref<16x2x16xf32, #tpu.memory_space<vmem>>, vector<1x2x16xf32>
    %821 = vector.shape_cast %820 : vector<1x2x16xf32> to vector<2x16xf32>
    %822 = vector.shape_cast %796 : vector<2x16xf32> to vector<1x2x16xf32>
    tpu.vector_store %arg4[%819, %c0_249, %c0_250], %822 {strides = array<i32>} : memref<16x2x16xf32, #tpu.memory_space<vmem>>, vector<1x2x16xf32>,
    %823 = arith.index_cast %797 : i32 to index
    %c0_251 = arith.constant 0 : index
    %c0_252 = arith.constant 0 : index
    %824 = vector.load %arg5[%823, %c0_251, %c0_252] : memref<16x2x16xf32, #tpu.memory_space<vmem>>, vector<1x2x16xf32>
    %825 = vector.shape_cast %824 : vector<1x2x16xf32> to vector<2x16xf32>
    %826 = vector.shape_cast %818 : vector<2x16xf32> to vector<1x2x16xf32>
    tpu.vector_store %arg5[%823, %c0_251, %c0_252], %826 {strides = array<i32>} : memref<16x2x16xf32, #tpu.memory_space<vmem>>, vector<1x2x16xf32>,
    %c16_i32 = arith.constant 16 : i32
    %c0_253 = arith.constant 0 : index
    %c0_254 = arith.constant 0 : index
    %827 = vector.load %arg6[%c0_253, %c0_254] : memref<2x16xf32, #tpu.memory_space<vmem>>, vector<2x16xf32>
    tpu.vector_store %arg6[%c0_253, %c0_254], %796 {strides = array<i32>} : memref<2x16xf32, #tpu.memory_space<vmem>>, vector<2x16xf32>,
    %c0_255 = arith.constant 0 : index
    %c0_256 = arith.constant 0 : index
    %828 = vector.load %arg7[%c0_255, %c0_256] : memref<2x16xf32, #tpu.memory_space<vmem>>, vector<2x16xf32>
    tpu.vector_store %arg7[%c0_255, %c0_256], %794 {strides = array<i32>} : memref<2x16xf32, #tpu.memory_space<vmem>>, vector<2x16xf32>,
    %c0_257 = arith.constant 0 : index
    %c0_258 = arith.constant 0 : index
    %829 = vector.load %arg8[%c0_257, %c0_258] : memref<2x16xf32, #tpu.memory_space<vmem>>, vector<2x16xf32>
    tpu.vector_store %arg8[%c0_257, %c0_258], %818 {strides = array<i32>} : memref<2x16xf32, #tpu.memory_space<vmem>>, vector<2x16xf32>,
    %c0_259 = arith.constant 0 : index
    %c0_260 = arith.constant 0 : index
    %830 = vector.load %arg9[%c0_259, %c0_260] : memref<2x16xf32, #tpu.memory_space<vmem>>, vector<2x16xf32>
    tpu.vector_store %arg9[%c0_259, %c0_260], %816 {strides = array<i32>} : memref<2x16xf32, #tpu.memory_space<vmem>>, vector<2x16xf32>,
    return
  }
  func.func @transform_0(%arg0: i32) -> (i32, i32, i32, i32) {
    %c0_i32 = arith.constant 0 : i32
    %c0_i32_0 = arith.constant 0 : i32
    %c0_i32_1 = arith.constant 0 : i32
    %c0_i32_2 = arith.constant 0 : i32
    return %c0_i32, %arg0, %c0_i32_0, %c0_i32_1 : i32, i32, i32, i32
  }
  func.func @transform_1(%arg0: i32) -> (i32, i32, i32, i32) {
    %c0_i32 = arith.constant 0 : i32
    %0 = arith.subi %c0_i32, %arg0 : i32
    %c1_i32 = arith.constant 1 : i32
    %c0_i32_0 = arith.constant 0 : i32
    %c0_i32_1 = arith.constant 0 : i32
    %c0_i32_2 = arith.constant 0 : i32
    return %c1_i32, %0, %c0_i32_0, %c0_i32_1 : i32, i32, i32, i32
  }
  func.func @transform_2(%arg0: i32) -> (i32, i32, i32) {
    %c0_i32 = arith.constant 0 : i32
    %c0_i32_0 = arith.constant 0 : i32
    %c0_i32_1 = arith.constant 0 : i32
    %c0_i32_2 = arith.constant 0 : i32
    return %c0_i32, %c0_i32_0, %c0_i32_1 : i32, i32, i32
  }
  func.func @transform_3(%arg0: i32) -> (i32, i32, i32) {
    %c0_i32 = arith.constant 0 : i32
    %c0_i32_0 = arith.constant 0 : i32
    %c0_i32_1 = arith.constant 0 : i32
    return %arg0, %c0_i32, %c0_i32_0 : i32, i32, i32
  }
  func.func @transform_4(%arg0: i32) -> (i32, i32, i32) {
    %c0_i32 = arith.constant 0 : i32
    %0 = arith.subi %c0_i32, %arg0 : i32
    %c0_i32_0 = arith.constant 0 : i32
    %c0_i32_1 = arith.constant 0 : i32
    %c0_i32_2 = arith.constant 0 : i32
    return %0, %c0_i32_0, %c0_i32_1 : i32, i32, i32
  }
}

</mosaic_0001>

<llo_original>
// kernel: separator_apply.5
$region0: #{separator_apply.5}
  #allocation0 [shape = 'u32[]', space=smem, size = 0x4, offset = 0x4, fixed_abs, tag = 'smem constant byte address 0x4 - core index']
  #allocation1 [shape = 'u32[144,128]{1,0:T(1,128)}', space=vmem, size = 0x12000, scoped, tag = 'internal scratch']
  %s0 = inlined_call_operand.vmem [shape: f32[2,16,16], index: 0, kind: input, shape index: {}]
  %s1 = inlined_call_operand.vmem [shape: f32[16,1], index: 1, kind: input, shape index: {}]
  %s2 = inlined_call_operand.vmem [shape: f32[16,1], index: 2, kind: input, shape index: {}]
  %s3 = inlined_call_operand.vmem [shape: f32[2,16,16], index: 3, kind: output, shape index: {}]
  %s4 = sld [smem:[#allocation0]]
  $region45: #{separator_apply.5} parent=0
    _
  %s6 = ssub.s32 1, %s4
  %s7 = scalar_select 0, %s6, %s4
  loop: start=0, step=1, limit=4
  $region2: #{separator_apply.5} parent=0 // loop_pre_header
    _
  $region3: #{separator_apply.5} parent=0 // loop_header
    %s9 = sphi 0, %s13
    %p10 = scmp.ge.s32.totalorder %s9, 4
    %s16 = sphi 0, %s28
    %s17 = sphi 0, %s24
    %s18 = sphi 0, %s16
    %s19 = sphi 0, %s17
    %s20 = sphi 0, %s18
    %s21 = sphi 0, %s19
    %s33 = sphi 0, %s35
    %s36 = sphi 0, %s33
    %s37 = sphi 0, %s36
    %s53 = sphi 0, %s37
    %s57 = sphi 0, %s57
    %s59 = sphi 0, %s57
    %s60 = sphi 0, %s59
    %s74 = sphi 0, %s60
    %s78 = sphi 0, %s78
    %s80 = sphi 0, %s78
    %s81 = sphi 0, %s80
    %s95 = sphi 0, %s81
    %s103 = sphi 0, %s105
    %s106 = sphi 0, %s103
    %s107 = sphi 0, %s106
    %s123 = sphi 0, %s107
  $region4: #{separator_apply.5} parent=0 // loop_header_branch
    %12 = sbr.rel (%p10) target = $region8
  $region5: #{separator_apply.5} parent=0 // loop_body
    %s14 = ssub.s32 %s9, 1
    %s15 = ssub.s32 %s9, 2
    %s22 = sadd.s32 1, %s17
    %p23 = scmp.ge.s32.totalorder %s22, 1
    %s24 = scalar_select %p23, 0, %s22
    %s25 = sadd.s32 1, %s16
    %s26 = scalar_select %p23, %s25, %s16
    %p27 = scmp.ge.s32.totalorder %s26, 2
    %s28 = scalar_select %p27, 0, %s26
    %s29 = ssub.s32 %s16, %s28
    %s30 = ssub.s32 %s17, %s24
    %s31 = sor.u32 %s29, %s30
    %p32 = scmp.eq.s32.totalorder %s31, 0
    %s34 = sadd.s32 %s33, 1
    %s35 = scalar_select %p32, %s33, %s34
    %p38 = pneg %p32
    %p39 = scmp.eq.s32.totalorder %s9, 1
    %p40 = por %p38, %p39
    %p41 = scmp.ne.s32.totalorder %s33, %s36
    %p42 = scmp.eq.s32.totalorder %s9, 0
    %p43 = por %p41, %p42
    %p44 = scmp.ne.s32.totalorder %s33, %s36
    %p45 = scmp.eq.s32.totalorder %s14, 1
    %p46 = por %p44, %p45
    %p47 = scmp.ne.s32.totalorder %s36, %s37
    %p48 = scmp.eq.s32.totalorder %s14, 0
    %p49 = por %p47, %p48
    %p50 = scmp.ne.s32.totalorder %s36, %s37
    %p51 = scmp.eq.s32.totalorder %s15, 1
    %p52 = por %p50, %p51
    %p54 = scmp.ne.s32.totalorder %s37, %s53
    %p55 = scmp.eq.s32.totalorder %s15, 0
    %p56 = por %p54, %p55
    %s58 = sadd.s32 %s57, 1
    %p61 = scmp.eq.s32.totalorder %s9, 1
    %p62 = scmp.ne.s32.totalorder %s57, %s59
    %p63 = scmp.eq.s32.totalorder %s9, 0
    %p64 = por %p62, %p63
    %p65 = scmp.ne.s32.totalorder %s57, %s59
    %p66 = scmp.eq.s32.totalorder %s14, 1
    %p67 = por %p65, %p66
    %p68 = scmp.ne.s32.totalorder %s59, %s60
    %p69 = scmp.eq.s32.totalorder %s14, 0
    %p70 = por %p68, %p69
    %p71 = scmp.ne.s32.totalorder %s59, %s60
    %p72 = scmp.eq.s32.totalorder %s15, 1
    %p73 = por %p71, %p72
    %p75 = scmp.ne.s32.totalorder %s60, %s74
    %p76 = scmp.eq.s32.totalorder %s15, 0
    %p77 = por %p75, %p76
    %s79 = sadd.s32 %s78, 1
    %p82 = scmp.eq.s32.totalorder %s9, 1
    %p83 = scmp.ne.s32.totalorder %s78, %s80
    %p84 = scmp.eq.s32.totalorder %s9, 0
    %p85 = por %p83, %p84
    %p86 = scmp.ne.s32.totalorder %s78, %s80
    %p87 = scmp.eq.s32.totalorder %s14, 1
    %p88 = por %p86, %p87
    %p89 = scmp.ne.s32.totalorder %s80, %s81
    %p90 = scmp.eq.s32.totalorder %s14, 0
    %p91 = por %p89, %p90
    %p92 = scmp.ne.s32.totalorder %s80, %s81
    %p93 = scmp.eq.s32.totalorder %s15, 1
    %p94 = por %p92, %p93
    %p96 = scmp.ne.s32.totalorder %s81, %s95
    %p97 = scmp.eq.s32.totalorder %s15, 0
    %p98 = por %p96, %p97
    %s99 = ssub.s32 %s16, %s28
    %s100 = ssub.s32 %s17, %s24
    %s101 = sor.u32 %s99, %s100
    %p102 = scmp.eq.s32.totalorder %s101, 0
    %s104 = sadd.s32 %s103, 1
    %s105 = scalar_select %p102, %s103, %s104
    %p108 = pneg %p102
    %p109 = scmp.eq.s32.totalorder %s9, 1
    %p110 = por %p108, %p109
    %p111 = scmp.ne.s32.totalorder %s103, %s106
    %p112 = scmp.eq.s32.totalorder %s9, 0
    %p113 = por %p111, %p112
    %p114 = scmp.ne.s32.totalorder %s103, %s106
    %p115 = scmp.eq.s32.totalorder %s14, 1
    %p116 = por %p114, %p115
    %p117 = scmp.ne.s32.totalorder %s106, %s107
    %p118 = scmp.eq.s32.totalorder %s14, 0
    %p119 = por %p117, %p118
    %p120 = scmp.ne.s32.totalorder %s106, %s107
    %p121 = scmp.eq.s32.totalorder %s15, 1
    %p122 = por %p120, %p121
    %p124 = scmp.ne.s32.totalorder %s107, %s123
    %p125 = scmp.eq.s32.totalorder %s15, 0
    %p126 = por %p124, %p125
    %p127 = scmp.le.s32.totalorder 1, %s9
    %p128 = scmp.lt.s32.totalorder %s9, 3
    %p129 = pnand %p127, %p128
    %p130 = pneg %p129
    // Predicated region
    $region9: #{separator_apply.5} parent=5 // pred_check
      _
    $region10: #{separator_apply.5} parent=5 // pred_check_branch
      %132 = sbr.rel (%p129) target = $region12
    $region11: #{separator_apply.5} parent=5 // pred_region
      %s133 = ssub.s32 %s9, 1
      // Predicated region
      $region13: #{separator_apply.5} parent=11 // pred_check
        %p134 = pneg %p70
      $region14: #{separator_apply.5} parent=11 // pred_check_branch
        %136 = sbr.rel (%p134) target = $region16
      $region15: #{separator_apply.5} parent=11 // pred_region
        _
      $region16: #{separator_apply.5} parent=11 // pred_fallthru
        _
      // Predicated region
      $region17: #{separator_apply.5} parent=11 // pred_check
        %p137 = pneg %p91
      $region18: #{separator_apply.5} parent=11 // pred_check_branch
        %139 = sbr.rel (%p137) target = $region20
      $region19: #{separator_apply.5} parent=11 // pred_region
        _
      $region20: #{separator_apply.5} parent=11 // pred_fallthru
        _
    $region12: #{separator_apply.5} parent=5 // pred_fallthru
      _
    %p140 = scmp.lt.s32.totalorder %s9, 2
    // Predicated region
    $region21: #{separator_apply.5} parent=5 // pred_check
      %p141 = pneg %p140
    $region22: #{separator_apply.5} parent=5 // pred_check_branch
      %143 = sbr.rel (%p141) target = $region24
    $region23: #{separator_apply.5} parent=5 // pred_region
      // Predicated region
      $region25: #{separator_apply.5} parent=23 // pred_check
        %p144 = pneg %p43
      $region26: #{separator_apply.5} parent=23 // pred_check_branch
        %146 = sbr.rel (%p144) target = $region28
      $region27: #{separator_apply.5} parent=23 // pred_region
        %p147 = scmp.lt.s32.totalorder %s16, 1
        %s148 = scalar_select %p147, %s16, 1
        %p149 = scmp.lt.s32.totalorder %s17, 0
        %s150 = scalar_select %p149, %s17, 0
        %s151 = smul.addr %s148, 2
        %s152 = sadd.s32 %s150, %s151
        %s153 = smul.addr %s152, 8
        %s154 = scalar_lea.vmem %s0, %s153
      $region28: #{separator_apply.5} parent=23 // pred_fallthru
        _
    $region24: #{separator_apply.5} parent=5 // pred_fallthru
      _
    %p155 = scmp.le.s32.totalorder 1, %s9
    %p156 = scmp.lt.s32.totalorder %s9, 3
    %p157 = pnand %p155, %p156
    %p158 = pneg %p157
    // Predicated region
    $region29: #{separator_apply.5} parent=5 // pred_check
      _
    $region30: #{separator_apply.5} parent=5 // pred_check_branch
      %160 = sbr.rel (%p157) target = $region32
    $region31: #{separator_apply.5} parent=5 // pred_region
      %s161 = ssub.s32 %s9, 1
      %p162 = scmp.lt.s32.totalorder %s18, 1
      %s163 = scalar_select %p162, %s18, 1
      %p164 = scmp.lt.s32.totalorder %s19, 0
      %s165 = scalar_select %p164, %s19, 0
      %s166 = smul.addr %s163, 2
      %s167 = sadd.s32 %s165, %s166
      %s168 = smul.addr %s167, 8
      %s169 = scalar_lea.vmem %s0, %s168
      %p170 = pneg %p49
      %p171 = pneg %p46
      %p172 = pneg %p70
      %p173 = pneg %p67
      %p174 = pneg %p91
      %p175 = pneg %p88
      %p176 = pneg %p119
      %p177 = pneg %p116
      %p178 = scmp.lt.s32.totalorder %s18, 1
      %s179 = scalar_select %p178, %s18, 1
      %p180 = scmp.lt.s32.totalorder %s19, 0
      %s181 = scalar_select %p180, %s19, 0
      %s182 = smul.addr %s179, 2
      %s183 = sadd.s32 %s181, %s182
      %s184 = smul.addr %s183, 8
      %s185 = scalar_lea.vmem %s3, %s184
      %p186 = scmp.lt.s32.totalorder %s18, 1
      %s187 = scalar_select %p186, %s18, 1
      %p188 = scmp.lt.s32.totalorder %s19, 0
      %s189 = scalar_select %p188, %s19, 0
      %s190 = smul.addr %s187, 2
      %s191 = sadd.s32 %s189, %s190
      %s192 = smul.addr %s191, 8
      %s193 = scalar_lea.vmem %s0, %s192
      %p194 = scmp.lt.s32.totalorder %s18, 1
      %s195 = scalar_select %p194, %s18, 1
      %p196 = scmp.lt.s32.totalorder %s19, 0
      %s197 = scalar_select %p196, %s19, 0
      %s198 = smul.addr %s195, 2
      %s199 = sadd.s32 %s197, %s198
      %s200 = smul.addr %s199, 8
      %s201 = scalar_lea.vmem %s3, %s200
      %v202 = vld [vmem:[%s193] sm:$0xff]
      %v203 = vld [vmem:[%s193 + $0x8] sm:$0xff]
      %vm204 = vcmask 130048
      %v205 = vsel %vm204, %v202, 0.0
      %v206 = vsel %vm204, %v203, 0.0
      %v207 = vadd.f32 %v205, %v206
      %v208 = vrot.slane %v207, 4
      %v209 = vadd.f32 %v207, %v208
      %v210 = vrot.slane %v209, 2
      %v211 = vadd.f32 %v209, %v210
      %v212 = vrot.slane %v211, 1
      %v213 = vadd.f32 %v211, %v212
      %v214 = vrcp.pop 16.0
      %v215 = vmul.f32 %v213, %v214
      %v216 = vmul.f32 %v202, %v202
      %v217 = vmul.f32 %v203, %v203
      %v218 = vsel %vm204, %v216, 0.0
      %v219 = vsel %vm204, %v217, 0.0
      %v220 = vadd.f32 %v218, %v219
      %v221 = vrot.slane %v220, 4
      %v222 = vadd.f32 %v220, %v221
      %v223 = vrot.slane %v222, 2
      %v224 = vadd.f32 %v222, %v223
      %v225 = vrot.slane %v224, 1
      %v226 = vadd.f32 %v224, %v225
      %v227 = vmul.f32 %v226, %v214
      %v228 = vmul.f32 %v215, %v215
      %v229 = vsub.f32 %v227, %v228
      %v230 = vmax.f32 %v229, 0.0
      %v231 = vld [vmem:[%s1] sm:$0xff]
      %v232 = vld [vmem:[%s1 + $0x8] sm:$0xff]
      %v233 = vsub.f32 %v202, %v215
      %v234 = vsub.f32 %v203, %v215
      %236 = vset.pattern.permute.xlu0 0
      %237 = vperm.xlu0 %236, %v231
      %v238 = vpop.permute.xlu0 %237
      %241 = vset.pattern.permute.xlu0 0
      %242 = vperm.xlu0 %241, %v232
      %v243 = vpop.permute.xlu0 %242
      %v245 = vmul.f32 %v238, %v233
      %v246 = vmul.f32 %v243, %v234
      %v247 = vrsqrt.pop %v230
      %v248 = vmul.f32 %v230, %v247
      %vm249 = vcmp.eq.f32.partialorder %v230, inf
      %v250 = vsel %vm249, %v230, %v248
      %vm251 = vcmp.eq.f32.partialorder %v230, 0.0
      %v252 = vand.u32 %v230, 2147483648
      %v253 = vsel %vm251, %v252, %v250
      %v254 = vadd.f32 %v253, 1e-12
      %v255 = vrcp.pop %v254
      %v256 = vmul.f32 %v245, %v255
      %v257 = vmul.f32 %v246, %v255
      %v258 = vld [vmem:[%s2] sm:$0xff]
      %v259 = vld [vmem:[%s2 + $0x8] sm:$0xff]
      %261 = vset.pattern.permute.xlu0 0
      %262 = vperm.xlu0 %261, %v258
      %v263 = vpop.permute.xlu0 %262
      %266 = vset.pattern.permute.xlu0 0
      %267 = vperm.xlu0 %266, %v259
      %v268 = vpop.permute.xlu0 %267
      %v270 = vadd.f32 %v256, %v263
      %v271 = vadd.f32 %v257, %v268
      %272 = vst.msk [vmem:[%s201] sm:$0xff] %vm204, %v270
      %273 = vst.msk [vmem:[%s201 + $0x8] sm:$0xff] %vm204, %v271
      %p274 = scmp.lt.s32.totalorder %s18, 1
      %s275 = scalar_select %p274, %s18, 1
      %p276 = scmp.lt.s32.totalorder %s19, 0
      %s277 = scalar_select %p276, %s19, 0
      %s278 = smul.addr %s275, 2
      %s279 = sadd.s32 %s277, %s278
      %s280 = smul.addr %s279, 8
      %s281 = scalar_lea.vmem %s3, %s280
      // Predicated region
      $region33: #{separator_apply.5} parent=31 // pred_check
        %p282 = pneg %p116
      $region34: #{separator_apply.5} parent=31 // pred_check_branch
        %284 = sbr.rel (%p282) target = $region36
      $region35: #{separator_apply.5} parent=31 // pred_region
        _
      $region36: #{separator_apply.5} parent=31 // pred_fallthru
        _
    $region32: #{separator_apply.5} parent=5 // pred_fallthru
      _
    %p285 = scmp.le.s32.totalorder 2, %s9
    // Predicated region
    $region37: #{separator_apply.5} parent=5 // pred_check
      %p286 = pneg %p285
    $region38: #{separator_apply.5} parent=5 // pred_check_branch
      %288 = sbr.rel (%p286) target = $region40
    $region39: #{separator_apply.5} parent=5 // pred_region
      %s289 = ssub.s32 %s9, 2
      // Predicated region
      $region41: #{separator_apply.5} parent=39 // pred_check
        %p290 = pneg %p122
      $region42: #{separator_apply.5} parent=39 // pred_check_branch
        %292 = sbr.rel (%p290) target = $region44
      $region43: #{separator_apply.5} parent=39 // pred_region
        %p293 = scmp.lt.s32.totalorder %s20, 1
        %s294 = scalar_select %p293, %s20, 1
        %p295 = scmp.lt.s32.totalorder %s21, 0
        %s296 = scalar_select %p295, %s21, 0
        %s297 = smul.addr %s294, 2
        %s298 = sadd.s32 %s296, %s297
        %s299 = smul.addr %s298, 8
        %s300 = scalar_lea.vmem %s3, %s299
      $region44: #{separator_apply.5} parent=39 // pred_fallthru
        _
    $region40: #{separator_apply.5} parent=5 // pred_fallthru
      _
  $region6: #{separator_apply.5} parent=0 // loop_footer
    %s13 = sadd.s32 1, %s9
  $region7: #{separator_apply.5} parent=0 // loop_footer_branch
    %8 = sbr.rel target = $region3
  $region8: #{separator_apply.5} parent=0 // loop_exit
    _

// kernel: separator_apply.6
$region0: #{separator_apply.6}
  #allocation0 [shape = 'u32[]', space=smem, size = 0x4, offset = 0x4, fixed_abs, tag = 'smem constant byte address 0x4 - core index']
  #allocation1 [shape = 'u32[144,128]{1,0:T(1,128)}', space=vmem, size = 0x12000, scoped, tag = 'internal scratch']
  #allocation2 [shape = 'f32[2,16]{1,0:T(2,128)}', space=vmem, size = 0x400, scoped, tag = 'scratch operand']
  #allocation3 [shape = 'f32[2,16]{1,0:T(2,128)}', space=vmem, size = 0x400, scoped, tag = 'scratch operand']
  #allocation4 [shape = 'f32[2,16]{1,0:T(2,128)}', space=vmem, size = 0x400, scoped, tag = 'scratch operand']
  #allocation5 [shape = 'f32[2,16]{1,0:T(2,128)}', space=vmem, size = 0x400, scoped, tag = 'scratch operand']
  %s0 = inlined_call_operand.vmem [shape: f32[2,16,2,64], index: 0, kind: input, shape index: {}, may-alias: {0,1}]
  %s1 = inlined_call_operand.vmem [shape: f32[2,16,2,64], index: 1, kind: input, shape index: {}, may-alias: {0,1}]
  %s2 = inlined_call_operand.vmem [shape: f32[2,16,64], index: 2, kind: input, shape index: {}]
  %s3 = inlined_call_operand.vmem [shape: f32[16,2,16], index: 3, kind: output, shape index: {0}]
  %s4 = inlined_call_operand.vmem [shape: f32[16,2,16], index: 4, kind: output, shape index: {1}]
  %5 = xla_tuple %s3, %s4
  %s6 = sld [smem:[#allocation0]]
  $region34: #{separator_apply.6} parent=0
    _
  %s8 = ssub.s32 1, %s6
  %s9 = scalar_select 0, %s8, %s6
  // Predicated region
  $region2: #{separator_apply.6} parent=0 // pred_check
    _
  $region3: #{separator_apply.6} parent=0 // pred_check_branch
    %11 = sbr.rel (0) target = $region5
  $region4: #{separator_apply.6} parent=0 // pred_region
    _
  $region5: #{separator_apply.6} parent=0 // pred_fallthru
    _
  // Predicated region
  $region6: #{separator_apply.6} parent=0 // pred_check
    _
  $region7: #{separator_apply.6} parent=0 // pred_check_branch
    %13 = sbr.rel (0) target = $region9
  $region8: #{separator_apply.6} parent=0 // pred_region
    %s14 = ssub.s32 0, 0
    %s15 = smul.u32 16, %s14
    %p16 = scmp.lt.s32.totalorder %s15, 15
    %s17 = scalar_select %p16, %s15, 15
    %s18 = sadd.s32 %s17, 16
    %s19 = smul.addr %s18, 2
    %s20 = scalar_lea.vmem %s1, %s19
    %s21 = ssub.s32 0, 0
    %s22 = smul.u32 16, %s21
  $region9: #{separator_apply.6} parent=0 // pred_fallthru
    _
  // Predicated region
  $region10: #{separator_apply.6} parent=0 // pred_check
    _
  $region11: #{separator_apply.6} parent=0 // pred_check_branch
    %24 = sbr.rel (0) target = $region13
  $region12: #{separator_apply.6} parent=0 // pred_region
    _
  $region13: #{separator_apply.6} parent=0 // pred_fallthru
    _
  %s25 = ssub.s32 0, 0
  %s26 = smul.u32 16, %s25
  %p27 = scmp.lt.s32.totalorder %s26, 15
  %s28 = scalar_select %p27, %s26, 15
  %s29 = sadd.s32 %s28, 16
  %s30 = smul.addr %s29, 2
  %s31 = scalar_lea.vmem %s1, %s30
  %s32 = ssub.s32 0, 0
  %s33 = smul.u32 16, %s32
  %p34 = scmp.lt.s32.totalorder %s33, 15
  %s35 = scalar_select %p34, %s33, 15
  %s36 = smul.addr %s35, 2
  %s37 = scalar_lea.vmem %s4, %s36
  %s38 = ssub.s32 0, 0
  %s39 = smul.u32 16, %s38
  %p40 = scmp.lt.s32.totalorder %s39, 15
  %s41 = scalar_select %p40, %s39, 15
  %s42 = sadd.s32 %s41, 16
  %s43 = smul.addr %s42, 2
  %s44 = scalar_lea.vmem %s1, %s43
  %s45 = ssub.s32 0, 0
  %s46 = smul.u32 16, %s45
  %s47 = ssub.s32 0, 0
  %s48 = smul.u32 16, %s47
  %p49 = scmp.lt.s32.totalorder %s48, 15
  %s50 = scalar_select %p49, %s48, 15
  %s51 = smul.addr %s50, 2
  %s52 = scalar_lea.vmem %s4, %s51
  %s53 = ssub.s32 0, 0
  %s54 = smul.u32 16, %s53
  %p55 = scmp.eq.s32.totalorder 0, 0
  // Predicated region
  $region14: #{separator_apply.6} parent=0 // pred_check
    %p56 = pneg %p55
  $region15: #{separator_apply.6} parent=0 // pred_check_branch
    %58 = sbr.rel (%p56) target = $region17
  $region16: #{separator_apply.6} parent=0 // pred_region
    %vm59 = vcmask 123904
    %60 = vst.msk [vmem:[#allocation2] sm:$0x3] %vm59, 0.0
    %61 = vst.msk [vmem:[#allocation3] sm:$0x3] %vm59, 0.0
    %62 = vst.msk [vmem:[#allocation4] sm:$0x3] %vm59, 0.0
    %63 = vst.msk [vmem:[#allocation5] sm:$0x3] %vm59, 0.0
  $region17: #{separator_apply.6} parent=0 // pred_fallthru
    _
  %v64 = vld [vmem:[%s2] sm:$0xff]
  %v65 = vld [vmem:[%s2 + $0x8] sm:$0xff]
  %s66 = scalar_lea.vmem %s2, 16
  %v67 = vld [vmem:[%s66] sm:$0xff]
  %v68 = vld [vmem:[%s66 + $0x8] sm:$0xff]
  %v69 = vld [vmem:[#allocation2] sm:$0x3]
  %v70 = vld [vmem:[#allocation3] sm:$0x3]
  %v71 = vld [vmem:[#allocation4] sm:$0x3]
  %v72 = vld [vmem:[#allocation5] sm:$0x3]
  %v73 = vld [vmem:[%s0] sm:$0x3]
  %vm74 = vcmask 130048
  %v76 = vsel %vm74, %v69, 0
  %78 = vmatprep.subr.mxu0 0.0
  %79 = vmatpush1.msra.mxu0 %v64
  %80 = vmatprep.subr.mxu0 0.0
  %81 = vmatpush1.msra.mxu0 %v65
  %82 = vmatprep.subr.mxu0 0.0
  %83 = vmatpush1.msra.mxu0 0.0
  %84 = vmatprep.subr.mxu0 0.0
  %85 = vmatpush1.msra.mxu0 0.0
  %86 = vmatprep.subr.mxu0 0.0
  %87 = vmatpush1.msra.mxu0 0.0
  %88 = vmatprep.subr.mxu0 0.0
  %89 = vmatpush1.msra.mxu0 0.0
  %90 = vmatprep.subr.mxu0 0.0
  %91 = vmatpush1.msra.mxu0 0.0
  %92 = vmatprep.subr.mxu0 0.0
  %93 = vmatpush1.msra.mxu0 0.0
  %94 = vmatprep.subr.mxu0 0.0
  %95 = vmatpush1.msra.mxu0 0.0
  %96 = vmatprep.subr.mxu0 0.0
  %97 = vmatpush1.msra.mxu0 0.0
  %98 = vmatprep.subr.mxu0 0.0
  %99 = vmatpush1.msra.mxu0 0.0
  %100 = vmatprep.subr.mxu0 0.0
  %101 = vmatpush1.msra.mxu0 0.0
  %102 = vmatprep.subr.mxu0 0.0
  %103 = vmatpush1.msra.mxu0 0.0
  %104 = vmatprep.subr.mxu0 0.0
  %105 = vmatpush1.msra.mxu0 0.0
  %106 = vmatprep.subr.mxu0 0.0
  %107 = vmatpush1.msra.mxu0 0.0
  %108 = vmatprep.subr.mxu0 0.0
  %109 = vmatpush1.msra.mxu0 0.0
  %110 = vmatprep.subr.mxu0 0.0
  %111 = vmatpush1.msra.mxu0 0.0
  %112 = vmatprep.subr.mxu0 0.0
  %113 = vmatpush1.msra.mxu0 0.0
  %114 = vmatprep.subr.mxu0 0.0
  %115 = vmatpush1.msra.mxu0 0.0
  %116 = vmatprep.subr.mxu0 0.0
  %117 = vmatpush1.msra.mxu0 0.0
  %118 = vmatprep.subr.mxu0 0.0
  %119 = vmatpush1.msra.mxu0 0.0
  %120 = vmatprep.subr.mxu0 0.0
  %121 = vmatpush1.msra.mxu0 0.0
  %122 = vmatprep.subr.mxu0 0.0
  %123 = vmatpush1.msra.mxu0 0.0
  %124 = vmatprep.subr.mxu0 0.0
  %125 = vmatpush1.msra.mxu0 0.0
  %126 = vmatprep.subr.mxu0 0.0
  %127 = vmatpush1.msra.mxu0 0.0
  %128 = vmatprep.subr.mxu0 0.0
  %129 = vmatpush1.msra.mxu0 0.0
  %130 = vmatprep.subr.mxu0 0.0
  %131 = vmatpush1.msra.mxu0 0.0
  %132 = vmatprep.subr.mxu0 0.0
  %133 = vmatpush1.msra.mxu0 0.0
  %134 = vmatprep.subr.mxu0 0.0
  %135 = vmatpush1.msra.mxu0 0.0
  %136 = vmatprep.subr.mxu0 0.0
  %137 = vmatpush1.msra.mxu0 0.0
  %138 = vmatprep.subr.mxu0 0.0
  %139 = vmatpush1.msra.mxu0 0.0
  %140 = vmatprep.subr.mxu0 0.0
  %141 = vmatpush1.msra.mxu0 0.0
  %142 = vmatprep.mubr.f32.mxu0 0.0
  %143 = vmatmul.mubr.f32.gmra.mrb[0].mxu0 %v76
  %v144 = vpop.f32.mrb[0].mxu0
  %v145 = vadd.f32 0.0, %v144
  %v146 = vpop.f32.mrb[0].mxu0
  %147 = vdwg.mxu0
  %v148 = vadd.f32 %v73, %v145
  %v149 = vxor.u32 %v148, 2147483648
  %v150 = vmul.f32 %v149, 1.442695
  %v151 = vpow.pop %v150
  %v152 = vadd.f32 %v151, 1.0
  %v153 = vrcp.pop %v152
  %v154 = vmul.f32 1.0, %v153
  %v155 = vtanh.pop %v148
  %157 = vrot.lane.b32.xlu0 %v70, 16
  %v158 = vpop.permute.xlu0 %157
  %v160 = vmul.f32 %v154, %v158
  %162 = vrot.lane.b32.xlu0 %v155, 80
  %v163 = vpop.permute.xlu0 %162
  %v165 = vmul.f32 %v154, %v163
  %167 = vrot.lane.b32.xlu0 %v165, 16
  %v168 = vpop.permute.xlu0 %167
  %v170 = vadd.f32 %v160, %v168
  %v171 = vtanh.pop %v170
  %173 = vrot.lane.b32.xlu0 %v171, 16
  %v174 = vpop.permute.xlu0 %173
  %v176 = vmul.f32 %v154, %v174
  %s177 = scalar_lea.vmem %s44, 30
  %v178 = vld [vmem:[%s177] sm:$0x3]
  %v180 = vsel %vm74, %v71, 0
  %182 = vmatprep.subr.mxu0 0.0
  %183 = vmatpush1.msra.mxu0 %v67
  %184 = vmatprep.subr.mxu0 0.0
  %185 = vmatpush1.msra.mxu0 %v68
  %186 = vmatprep.subr.mxu0 0.0
  %187 = vmatpush1.msra.mxu0 0.0
  %188 = vmatprep.subr.mxu0 0.0
  %189 = vmatpush1.msra.mxu0 0.0
  %190 = vmatprep.subr.mxu0 0.0
  %191 = vmatpush1.msra.mxu0 0.0
  %192 = vmatprep.subr.mxu0 0.0
  %193 = vmatpush1.msra.mxu0 0.0
  %194 = vmatprep.subr.mxu0 0.0
  %195 = vmatpush1.msra.mxu0 0.0
  %196 = vmatprep.subr.mxu0 0.0
  %197 = vmatpush1.msra.mxu0 0.0
  %198 = vmatprep.subr.mxu0 0.0
  %199 = vmatpush1.msra.mxu0 0.0
  %200 = vmatprep.subr.mxu0 0.0
  %201 = vmatpush1.msra.mxu0 0.0
  %202 = vmatprep.subr.mxu0 0.0
  %203 = vmatpush1.msra.mxu0 0.0
  %204 = vmatprep.subr.mxu0 0.0
  %205 = vmatpush1.msra.mxu0 0.0
  %206 = vmatprep.subr.mxu0 0.0
  %207 = vmatpush1.msra.mxu0 0.0
  %208 = vmatprep.subr.mxu0 0.0
  %209 = vmatpush1.msra.mxu0 0.0
  %210 = vmatprep.subr.mxu0 0.0
  %211 = vmatpush1.msra.mxu0 0.0
  %212 = vmatprep.subr.mxu0 0.0
  %213 = vmatpush1.msra.mxu0 0.0
  %214 = vmatprep.subr.mxu0 0.0
  %215 = vmatpush1.msra.mxu0 0.0
  %216 = vmatprep.subr.mxu0 0.0
  %217 = vmatpush1.msra.mxu0 0.0
  %218 = vmatprep.subr.mxu0 0.0
  %219 = vmatpush1.msra.mxu0 0.0
  %220 = vmatprep.subr.mxu0 0.0
  %221 = vmatpush1.msra.mxu0 0.0
  %222 = vmatprep.subr.mxu0 0.0
  %223 = vmatpush1.msra.mxu0 0.0
  %224 = vmatprep.subr.mxu0 0.0
  %225 = vmatpush1.msra.mxu0 0.0
  %226 = vmatprep.subr.mxu0 0.0
  %227 = vmatpush1.msra.mxu0 0.0
  %228 = vmatprep.subr.mxu0 0.0
  %229 = vmatpush1.msra.mxu0 0.0
  %230 = vmatprep.subr.mxu0 0.0
  %231 = vmatpush1.msra.mxu0 0.0
  %232 = vmatprep.subr.mxu0 0.0
  %233 = vmatpush1.msra.mxu0 0.0
  %234 = vmatprep.subr.mxu0 0.0
  %235 = vmatpush1.msra.mxu0 0.0
  %236 = vmatprep.subr.mxu0 0.0
  %237 = vmatpush1.msra.mxu0 0.0
  %238 = vmatprep.subr.mxu0 0.0
  %239 = vmatpush1.msra.mxu0 0.0
  %240 = vmatprep.subr.mxu0 0.0
  %241 = vmatpush1.msra.mxu0 0.0
  %242 = vmatprep.subr.mxu0 0.0
  %243 = vmatpush1.msra.mxu0 0.0
  %244 = vmatprep.subr.mxu0 0.0
  %245 = vmatpush1.msra.mxu0 0.0
  %246 = vmatprep.mubr.f32.mxu0 0.0
  %247 = vmatmul.mubr.f32.gmra.mrb[0].mxu0 %v180
  %v248 = vpop.f32.mrb[0].mxu0
  %v249 = vadd.f32 0.0, %v248
  %v250 = vpop.f32.mrb[0].mxu0
  %251 = vdwg.mxu0
  %v252 = vadd.f32 %v178, %v249
  %v253 = vxor.u32 %v252, 2147483648
  %v254 = vmul.f32 %v253, 1.442695
  %v255 = vpow.pop %v254
  %v256 = vadd.f32 %v255, 1.0
  %v257 = vrcp.pop %v256
  %v258 = vmul.f32 1.0, %v257
  %v259 = vtanh.pop %v252
  %261 = vrot.lane.b32.xlu0 %v72, 16
  %v262 = vpop.permute.xlu0 %261
  %v264 = vmul.f32 %v258, %v262
  %266 = vrot.lane.b32.xlu0 %v259, 80
  %v267 = vpop.permute.xlu0 %266
  %v269 = vmul.f32 %v258, %v267
  %271 = vrot.lane.b32.xlu0 %v269, 16
  %v272 = vpop.permute.xlu0 %271
  %v274 = vadd.f32 %v264, %v272
  %v275 = vtanh.pop %v274
  %277 = vrot.lane.b32.xlu0 %v275, 16
  %v278 = vpop.permute.xlu0 %277
  %v280 = vmul.f32 %v258, %v278
  %282 = vrot.lane.b32.xlu0 %v176, 96
  %v283 = vpop.permute.xlu0 %282
  %vm285 = vcmask 123904
  %286 = vst.msk [vmem:[%s3] sm:$0x3] %vm285, %v283
  %288 = vrot.lane.b32.xlu0 %v280, 96
  %v289 = vpop.permute.xlu0 %288
  %s291 = scalar_lea.vmem %s52, 30
  %292 = vst.msk [vmem:[%s291] sm:$0x3] %vm285, %v289
  %s293 = scalar_lea.vmem %s0, 2
  %v294 = vld [vmem:[%s293] sm:$0x3]
  %v295 = vsel %vm74, %v283, 0
  %297 = vmatprep.subr.mxu0 0.0
  %298 = vmatpush1.msra.mxu0 %v64
  %299 = vmatprep.subr.mxu0 0.0
  %300 = vmatpush1.msra.mxu0 %v65
  %301 = vmatprep.subr.mxu0 0.0
  %302 = vmatpush1.msra.mxu0 0.0
  %303 = vmatprep.subr.mxu0 0.0
  %304 = vmatpush1.msra.mxu0 0.0
  %305 = vmatprep.subr.mxu0 0.0
  %306 = vmatpush1.msra.mxu0 0.0
  %307 = vmatprep.subr.mxu0 0.0
  %308 = vmatpush1.msra.mxu0 0.0
  %309 = vmatprep.subr.mxu0 0.0
  %310 = vmatpush1.msra.mxu0 0.0
  %311 = vmatprep.subr.mxu0 0.0
  %312 = vmatpush1.msra.mxu0 0.0
  %313 = vmatprep.subr.mxu0 0.0
  %314 = vmatpush1.msra.mxu0 0.0
  %315 = vmatprep.subr.mxu0 0.0
  %316 = vmatpush1.msra.mxu0 0.0
  %317 = vmatprep.subr.mxu0 0.0
  %318 = vmatpush1.msra.mxu0 0.0
  %319 = vmatprep.subr.mxu0 0.0
  %320 = vmatpush1.msra.mxu0 0.0
  %321 = vmatprep.subr.mxu0 0.0
  %322 = vmatpush1.msra.mxu0 0.0
  %323 = vmatprep.subr.mxu0 0.0
  %324 = vmatpush1.msra.mxu0 0.0
  %325 = vmatprep.subr.mxu0 0.0
  %326 = vmatpush1.msra.mxu0 0.0
  %327 = vmatprep.subr.mxu0 0.0
  %328 = vmatpush1.msra.mxu0 0.0
  %329 = vmatprep.subr.mxu0 0.0
  %330 = vmatpush1.msra.mxu0 0.0
  %331 = vmatprep.subr.mxu0 0.0
  %332 = vmatpush1.msra.mxu0 0.0
  %333 = vmatprep.subr.mxu0 0.0
  %334 = vmatpush1.msra.mxu0 0.0
  %335 = vmatprep.subr.mxu0 0.0
  %336 = vmatpush1.msra.mxu0 0.0
  %337 = vmatprep.subr.mxu0 0.0
  %338 = vmatpush1.msra.mxu0 0.0
  %339 = vmatprep.subr.mxu0 0.0
  %340 = vmatpush1.msra.mxu0 0.0
  %341 = vmatprep.subr.mxu0 0.0
  %342 = vmatpush1.msra.mxu0 0.0
  %343 = vmatprep.subr.mxu0 0.0
  %344 = vmatpush1.msra.mxu0 0.0
  %345 = vmatprep.subr.mxu0 0.0
  %346 = vmatpush1.msra.mxu0 0.0
  %347 = vmatprep.subr.mxu0 0.0
  %348 = vmatpush1.msra.mxu0 0.0
  %349 = vmatprep.subr.mxu0 0.0
  %350 = vmatpush1.msra.mxu0 0.0
  %351 = vmatprep.subr.mxu0 0.0
  %352 = vmatpush1.msra.mxu0 0.0
  %353 = vmatprep.subr.mxu0 0.0
  %354 = vmatpush1.msra.mxu0 0.0
  %355 = vmatprep.subr.mxu0 0.0
  %356 = vmatpush1.msra.mxu0 0.0
  %357 = vmatprep.subr.mxu0 0.0
  %358 = vmatpush1.msra.mxu0 0.0
  %359 = vmatprep.subr.mxu0 0.0
  %360 = vmatpush1.msra.mxu0 0.0
  %361 = vmatprep.mubr.f32.mxu0 0.0
  %362 = vmatmul.mubr.f32.gmra.mrb[0].mxu0 %v295
  %v363 = vpop.f32.mrb[0].mxu0
  %v364 = vadd.f32 0.0, %v363
  %v365 = vpop.f32.mrb[0].mxu0
  %366 = vdwg.mxu0
  %v367 = vadd.f32 %v294, %v364
  %v368 = vxor.u32 %v367, 2147483648
  %v369 = vmul.f32 %v368, 1.442695
  %v370 = vpow.pop %v369
  %v371 = vadd.f32 %v370, 1.0
  %v372 = vrcp.pop %v371
  %v373 = vmul.f32 1.0, %v372
  %v374 = vtanh.pop %v367
  %v375 = vmul.f32 %v373, %v170
  %377 = vrot.lane.b32.xlu0 %v374, 80
  %v378 = vpop.permute.xlu0 %377
  %v380 = vmul.f32 %v373, %v378
  %382 = vrot.lane.b32.xlu0 %v380, 16
  %v383 = vpop.permute.xlu0 %382
  %v385 = vadd.f32 %v375, %v383
  %v386 = vtanh.pop %v385
  %388 = vrot.lane.b32.xlu0 %v386, 16
  %v389 = vpop.permute.xlu0 %388
  %v391 = vmul.f32 %v373, %v389
  %s392 = scalar_lea.vmem %s44, 28
  %v393 = vld [vmem:[%s392] sm:$0x3]
  %v394 = vsel %vm74, %v289, 0
  %396 = vmatprep.subr.mxu0 0.0
  %397 = vmatpush1.msra.mxu0 %v67
  %398 = vmatprep.subr.mxu0 0.0
  %399 = vmatpush1.msra.mxu0 %v68
  %400 = vmatprep.subr.mxu0 0.0
  %401 = vmatpush1.msra.mxu0 0.0
  %402 = vmatprep.subr.mxu0 0.0
  %403 = vmatpush1.msra.mxu0 0.0
  %404 = vmatprep.subr.mxu0 0.0
  %405 = vmatpush1.msra.mxu0 0.0
  %406 = vmatprep.subr.mxu0 0.0
  %407 = vmatpush1.msra.mxu0 0.0
  %408 = vmatprep.subr.mxu0 0.0
  %409 = vmatpush1.msra.mxu0 0.0
  %410 = vmatprep.subr.mxu0 0.0
  %411 = vmatpush1.msra.mxu0 0.0
  %412 = vmatprep.subr.mxu0 0.0
  %413 = vmatpush1.msra.mxu0 0.0
  %414 = vmatprep.subr.mxu0 0.0
  %415 = vmatpush1.msra.mxu0 0.0
  %416 = vmatprep.subr.mxu0 0.0
  %417 = vmatpush1.msra.mxu0 0.0
  %418 = vmatprep.subr.mxu0 0.0
  %419 = vmatpush1.msra.mxu0 0.0
  %420 = vmatprep.subr.mxu0 0.0
  %421 = vmatpush1.msra.mxu0 0.0
  %422 = vmatprep.subr.mxu0 0.0
  %423 = vmatpush1.msra.mxu0 0.0
  %424 = vmatprep.subr.mxu0 0.0
  %425 = vmatpush1.msra.mxu0 0.0
  %426 = vmatprep.subr.mxu0 0.0
  %427 = vmatpush1.msra.mxu0 0.0
  %428 = vmatprep.subr.mxu0 0.0
  %429 = vmatpush1.msra.mxu0 0.0
  %430 = vmatprep.subr.mxu0 0.0
  %431 = vmatpush1.msra.mxu0 0.0
  %432 = vmatprep.subr.mxu0 0.0
  %433 = vmatpush1.msra.mxu0 0.0
  %434 = vmatprep.subr.mxu0 0.0
  %435 = vmatpush1.msra.mxu0 0.0
  %436 = vmatprep.subr.mxu0 0.0
  %437 = vmatpush1.msra.mxu0 0.0
  %438 = vmatprep.subr.mxu0 0.0
  %439 = vmatpush1.msra.mxu0 0.0
  %440 = vmatprep.subr.mxu0 0.0
  %441 = vmatpush1.msra.mxu0 0.0
  %442 = vmatprep.subr.mxu0 0.0
  %443 = vmatpush1.msra.mxu0 0.0
  %444 = vmatprep.subr.mxu0 0.0
  %445 = vmatpush1.msra.mxu0 0.0
  %446 = vmatprep.subr.mxu0 0.0
  %447 = vmatpush1.msra.mxu0 0.0
  %448 = vmatprep.subr.mxu0 0.0
  %449 = vmatpush1.msra.mxu0 0.0
  %450 = vmatprep.subr.mxu0 0.0
  %451 = vmatpush1.msra.mxu0 0.0
  %452 = vmatprep.subr.mxu0 0.0
  %453 = vmatpush1.msra.mxu0 0.0
  %454 = vmatprep.subr.mxu0 0.0
  %455 = vmatpush1.msra.mxu0 0.0
  %456 = vmatprep.subr.mxu0 0.0
  %457 = vmatpush1.msra.mxu0 0.0
  %458 = vmatprep.subr.mxu0 0.0
  %459 = vmatpush1.msra.mxu0 0.0
  %460 = vmatprep.mubr.f32.mxu0 0.0
  %461 = vmatmul.mubr.f32.gmra.mrb[0].mxu0 %v394
  %v462 = vpop.f32.mrb[0].mxu0
  %v463 = vadd.f32 0.0, %v462
  %v464 = vpop.f32.mrb[0].mxu0
  %465 = vdwg.mxu0
  %v466 = vadd.f32 %v393, %v463
  %v467 = vxor.u32 %v466, 2147483648
  %v468 = vmul.f32 %v467, 1.442695
  %v469 = vpow.pop %v468
  %v470 = vadd.f32 %v469, 1.0
  %v471 = vrcp.pop %v470
  %v472 = vmul.f32 1.0, %v471
  %v473 = vtanh.pop %v466
  %v474 = vmul.f32 %v472, %v274
  %476 = vrot.lane.b32.xlu0 %v473, 80
  %v477 = vpop.permute.xlu0 %476
  %v479 = vmul.f32 %v472, %v477
  %481 = vrot.lane.b32.xlu0 %v479, 16
  %v482 = vpop.permute.xlu0 %481
  %v484 = vadd.f32 %v474, %v482
  %v485 = vtanh.pop %v484
  %487 = vrot.lane.b32.xlu0 %v485, 16
  %v488 = vpop.permute.xlu0 %487
  %v490 = vmul.f32 %v472, %v488
  %492 = vrot.lane.b32.xlu0 %v391, 96
  %v493 = vpop.permute.xlu0 %492
  %s495 = scalar_lea.vmem %s3, 2
  %496 = vst.msk [vmem:[%s495] sm:$0x3] %vm285, %v493
  %498 = vrot.lane.b32.xlu0 %v490, 96
  %v499 = vpop.permute.xlu0 %498
  %s501 = scalar_lea.vmem %s52, 28
  %502 = vst.msk [vmem:[%s501] sm:$0x3] %vm285, %v499
  %s503 = scalar_lea.vmem %s0, 4
  %v504 = vld [vmem:[%s503] sm:$0x3]
  %v505 = vsel %vm74, %v493, 0
  %507 = vmatprep.subr.mxu0 0.0
  %508 = vmatpush1.msra.mxu0 %v64
  %509 = vmatprep.subr.mxu0 0.0
  %510 = vmatpush1.msra.mxu0 %v65
  %511 = vmatprep.subr.mxu0 0.0
  %512 = vmatpush1.msra.mxu0 0.0
  %513 = vmatprep.subr.mxu0 0.0
  %514 = vmatpush1.msra.mxu0 0.0
  %515 = vmatprep.subr.mxu0 0.0
  %516 = vmatpush1.msra.mxu0 0.0
  %517 = vmatprep.subr.mxu0 0.0
  %518 = vmatpush1.msra.mxu0 0.0
  %519 = vmatprep.subr.mxu0 0.0
  %520 = vmatpush1.msra.mxu0 0.0
  %521 = vmatprep.subr.mxu0 0.0
  %522 = vmatpush1.msra.mxu0 0.0
  %523 = vmatprep.subr.mxu0 0.0
  %524 = vmatpush1.msra.mxu0 0.0
  %525 = vmatprep.subr.mxu0 0.0
  %526 = vmatpush1.msra.mxu0 0.0
  %527 = vmatprep.subr.mxu0 0.0
  %528 = vmatpush1.msra.mxu0 0.0
  %529 = vmatprep.subr.mxu0 0.0
  %530 = vmatpush1.msra.mxu0 0.0
  %531 = vmatprep.subr.mxu0 0.0
  %532 = vmatpush1.msra.mxu0 0.0
  %533 = vmatprep.subr.mxu0 0.0
  %534 = vmatpush1.msra.mxu0 0.0
  %535 = vmatprep.subr.mxu0 0.0
  %536 = vmatpush1.msra.mxu0 0.0
  %537 = vmatprep.subr.mxu0 0.0
  %538 = vmatpush1.msra.mxu0 0.0
  %539 = vmatprep.subr.mxu0 0.0
  %540 = vmatpush1.msra.mxu0 0.0
  %541 = vmatprep.subr.mxu0 0.0
  %542 = vmatpush1.msra.mxu0 0.0
  %543 = vmatprep.subr.mxu0 0.0
  %544 = vmatpush1.msra.mxu0 0.0
  %545 = vmatprep.subr.mxu0 0.0
  %546 = vmatpush1.msra.mxu0 0.0
  %547 = vmatprep.subr.mxu0 0.0
  %548 = vmatpush1.msra.mxu0 0.0
  %549 = vmatprep.subr.mxu0 0.0
  %550 = vmatpush1.msra.mxu0 0.0
  %551 = vmatprep.subr.mxu0 0.0
  %552 = vmatpush1.msra.mxu0 0.0
  %553 = vmatprep.subr.mxu0 0.0
  %554 = vmatpush1.msra.mxu0 0.0
  %555 = vmatprep.subr.mxu0 0.0
  %556 = vmatpush1.msra.mxu0 0.0
  %557 = vmatprep.subr.mxu0 0.0
  %558 = vmatpush1.msra.mxu0 0.0
  %559 = vmatprep.subr.mxu0 0.0
  %560 = vmatpush1.msra.mxu0 0.0
  %561 = vmatprep.subr.mxu0 0.0
  %562 = vmatpush1.msra.mxu0 0.0
  %563 = vmatprep.subr.mxu0 0.0
  %564 = vmatpush1.msra.mxu0 0.0
  %565 = vmatprep.subr.mxu0 0.0
  %566 = vmatpush1.msra.mxu0 0.0
  %567 = vmatprep.subr.mxu0 0.0
  %568 = vmatpush1.msra.mxu0 0.0
  %569 = vmatprep.subr.mxu0 0.0
  %570 = vmatpush1.msra.mxu0 0.0
  %571 = vmatprep.mubr.f32.mxu0 0.0
  %572 = vmatmul.mubr.f32.gmra.mrb[0].mxu0 %v505
  %v573 = vpop.f32.mrb[0].mxu0
  %v574 = vadd.f32 0.0, %v573
  %v575 = vpop.f32.mrb[0].mxu0
  %576 = vdwg.mxu0
  %v577 = vadd.f32 %v504, %v574
  %v578 = vxor.u32 %v577, 2147483648
  %v579 = vmul.f32 %v578, 1.442695
  %v580 = vpow.pop %v579
  %v581 = vadd.f32 %v580, 1.0
  %v582 = vrcp.pop %v581
  %v583 = vmul.f32 1.0, %v582
  %v584 = vtanh.pop %v577
  %v585 = vmul.f32 %v583, %v385
  %587 = vrot.lane.b32.xlu0 %v584, 80
  %v588 = vpop.permute.xlu0 %587
  %v590 = vmul.f32 %v583, %v588
  %592 = vrot.lane.b32.xlu0 %v590, 16
  %v593 = vpop.permute.xlu0 %592
  %v595 = vadd.f32 %v585, %v593
  %v596 = vtanh.pop %v595
  %598 = vrot.lane.b32.xlu0 %v596, 16
  %v599 = vpop.permute.xlu0 %598
  %v601 = vmul.f32 %v583, %v599
  %s602 = scalar_lea.vmem %s44, 26
  %v603 = vld [vmem:[%s602] sm:$0x3]
  %v604 = vsel %vm74, %v499, 0
  %606 = vmatprep.subr.mxu0 0.0
  %607 = vmatpush1.msra.mxu0 %v67
  %608 = vmatprep.subr.mxu0 0.0
  %609 = vmatpush1.msra.mxu0 %v68
  %610 = vmatprep.subr.mxu0 0.0
  %611 = vmatpush1.msra.mxu0 0.0
  %612 = vmatprep.subr.mxu0 0.0
  %613 = vmatpush1.msra.mxu0 0.0
  %614 = vmatprep.subr.mxu0 0.0
  %615 = vmatpush1.msra.mxu0 0.0
  %616 = vmatprep.subr.mxu0 0.0
  %617 = vmatpush1.msra.mxu0 0.0
  %618 = vmatprep.subr.mxu0 0.0
  %619 = vmatpush1.msra.mxu0 0.0
  %620 = vmatprep.subr.mxu0 0.0
  %621 = vmatpush1.msra.mxu0 0.0
  %622 = vmatprep.subr.mxu0 0.0
  %623 = vmatpush1.msra.mxu0 0.0
  %624 = vmatprep.subr.mxu0 0.0
  %625 = vmatpush1.msra.mxu0 0.0
  %626 = vmatprep.subr.mxu0 0.0
  %627 = vmatpush1.msra.mxu0 0.0
  %628 = vmatprep.subr.mxu0 0.0
  %629 = vmatpush1.msra.mxu0 0.0
  %630 = vmatprep.subr.mxu0 0.0
  %631 = vmatpush1.msra.mxu0 0.0
  %632 = vmatprep.subr.mxu0 0.0
  %633 = vmatpush1.msra.mxu0 0.0
  %634 = vmatprep.subr.mxu0 0.0
  %635 = vmatpush1.msra.mxu0 0.0
  %636 = vmatprep.subr.mxu0 0.0
  %637 = vmatpush1.msra.mxu0 0.0
  %638 = vmatprep.subr.mxu0 0.0
  %639 = vmatpush1.msra.mxu0 0.0
  %640 = vmatprep.subr.mxu0 0.0
  %641 = vmatpush1.msra.mxu0 0.0
  %642 = vmatprep.subr.mxu0 0.0
  %643 = vmatpush1.msra.mxu0 0.0
  %644 = vmatprep.subr.mxu0 0.0
  %645 = vmatpush1.msra.mxu0 0.0
  %646 = vmatprep.subr.mxu0 0.0
  %647 = vmatpush1.msra.mxu0 0.0
  %648 = vmatprep.subr.mxu0 0.0
  %649 = vmatpush1.msra.mxu0 0.0
  %650 = vmatprep.subr.mxu0 0.0
  %651 = vmatpush1.msra.mxu0 0.0
  %652 = vmatprep.subr.mxu0 0.0
  %653 = vmatpush1.msra.mxu0 0.0
  %654 = vmatprep.subr.mxu0 0.0
  %655 = vmatpush1.msra.mxu0 0.0
  %656 = vmatprep.subr.mxu0 0.0
  %657 = vmatpush1.msra.mxu0 0.0
  %658 = vmatprep.subr.mxu0 0.0
  %659 = vmatpush1.msra.mxu0 0.0
  %660 = vmatprep.subr.mxu0 0.0
  %661 = vmatpush1.msra.mxu0 0.0
  %662 = vmatprep.subr.mxu0 0.0
  %663 = vmatpush1.msra.mxu0 0.0
  %664 = vmatprep.subr.mxu0 0.0
  %665 = vmatpush1.msra.mxu0 0.0
  %666 = vmatprep.subr.mxu0 0.0
  %667 = vmatpush1.msra.mxu0 0.0
  %668 = vmatprep.subr.mxu0 0.0
  %669 = vmatpush1.msra.mxu0 0.0
  %670 = vmatprep.mubr.f32.mxu0 0.0
  %671 = vmatmul.mubr.f32.gmra.mrb[0].mxu0 %v604
  %v672 = vpop.f32.mrb[0].mxu0
  %v673 = vadd.f32 0.0, %v672
  %v674 = vpop.f32.mrb[0].mxu0
  %675 = vdwg.mxu0
  %v676 = vadd.f32 %v603, %v673
  %v677 = vxor.u32 %v676, 2147483648
  %v678 = vmul.f32 %v677, 1.442695
  %v679 = vpow.pop %v678
  %v680 = vadd.f32 %v679, 1.0
  %v681 = vrcp.pop %v680
  %v682 = vmul.f32 1.0, %v681
  %v683 = vtanh.pop %v676
  %v684 = vmul.f32 %v682, %v484
  %686 = vrot.lane.b32.xlu0 %v683, 80
  %v687 = vpop.permute.xlu0 %686
  %v689 = vmul.f32 %v682, %v687
  %691 = vrot.lane.b32.xlu0 %v689, 16
  %v692 = vpop.permute.xlu0 %691
  %v694 = vadd.f32 %v684, %v692
  %v695 = vtanh.pop %v694
  %697 = vrot.lane.b32.xlu0 %v695, 16
  %v698 = vpop.permute.xlu0 %697
  %v700 = vmul.f32 %v682, %v698
  %702 = vrot.lane.b32.xlu0 %v601, 96
  %v703 = vpop.permute.xlu0 %702
  %s705 = scalar_lea.vmem %s3, 4
  %706 = vst.msk [vmem:[%s705] sm:$0x3] %vm285, %v703
  %708 = vrot.lane.b32.xlu0 %v700, 96
  %v709 = vpop.permute.xlu0 %708
  %s711 = scalar_lea.vmem %s52, 26
  %712 = vst.msk [vmem:[%s711] sm:$0x3] %vm285, %v709
  %s713 = scalar_lea.vmem %s0, 6
  %v714 = vld [vmem:[%s713] sm:$0x3]
  %v715 = vsel %vm74, %v703, 0
  %717 = vmatprep.subr.mxu0 0.0
  %718 = vmatpush1.msra.mxu0 %v64
  %719 = vmatprep.subr.mxu0 0.0
  %720 = vmatpush1.msra.mxu0 %v65
  %721 = vmatprep.subr.mxu0 0.0
  %722 = vmatpush1.msra.mxu0 0.0
  %723 = vmatprep.subr.mxu0 0.0
  %724 = vmatpush1.msra.mxu0 0.0
  %725 = vmatprep.subr.mxu0 0.0
  %726 = vmatpush1.msra.mxu0 0.0
  %727 = vmatprep.subr.mxu0 0.0
  %728 = vmatpush1.msra.mxu0 0.0
  %729 = vmatprep.subr.mxu0 0.0
  %730 = vmatpush1.msra.mxu0 0.0
  %731 = vmatprep.subr.mxu0 0.0
  %732 = vmatpush1.msra.mxu0 0.0
  %733 = vmatprep.subr.mxu0 0.0
  %734 = vmatpush1.msra.mxu0 0.0
  %735 = vmatprep.subr.mxu0 0.0
  %736 = vmatpush1.msra.mxu0 0.0
  %737 = vmatprep.subr.mxu0 0.0
  %738 = vmatpush1.msra.mxu0 0.0
  %739 = vmatprep.subr.mxu0 0.0
  %740 = vmatpush1.msra.mxu0 0.0
  %741 = vmatprep.subr.mxu0 0.0
  %742 = vmatpush1.msra.mxu0 0.0
  %743 = vmatprep.subr.mxu0 0.0
  %744 = vmatpush1.msra.mxu0 0.0
  %745 = vmatprep.subr.mxu0 0.0
  %746 = vmatpush1.msra.mxu0 0.0
  %747 = vmatprep.subr.mxu0 0.0
  %748 = vmatpush1.msra.mxu0 0.0
  %749 = vmatprep.subr.mxu0 0.0
  %750 = vmatpush1.msra.mxu0 0.0
  %751 = vmatprep.subr.mxu0 0.0
  %752 = vmatpush1.msra.mxu0 0.0
  %753 = vmatprep.subr.mxu0 0.0
  %754 = vmatpush1.msra.mxu0 0.0
  %755 = vmatprep.subr.mxu0 0.0
  %756 = vmatpush1.msra.mxu0 0.0
  %757 = vmatprep.subr.mxu0 0.0
  %758 = vmatpush1.msra.mxu0 0.0
  %759 = vmatprep.subr.mxu0 0.0
  %760 = vmatpush1.msra.mxu0 0.0
  %761 = vmatprep.subr.mxu0 0.0
  %762 = vmatpush1.msra.mxu0 0.0
  %763 = vmatprep.subr.mxu0 0.0
  %764 = vmatpush1.msra.mxu0 0.0
  %765 = vmatprep.subr.mxu0 0.0
  %766 = vmatpush1.msra.mxu0 0.0
  %767 = vmatprep.subr.mxu0 0.0
  %768 = vmatpush1.msra.mxu0 0.0
  %769 = vmatprep.subr.mxu0 0.0
  %770 = vmatpush1.msra.mxu0 0.0
  %771 = vmatprep.subr.mxu0 0.0
  %772 = vmatpush1.msra.mxu0 0.0
  %773 = vmatprep.subr.mxu0 0.0
  %774 = vmatpush1.msra.mxu0 0.0
  %775 = vmatprep.subr.mxu0 0.0
  %776 = vmatpush1.msra.mxu0 0.0
  %777 = vmatprep.subr.mxu0 0.0
  %778 = vmatpush1.msra.mxu0 0.0
  %779 = vmatprep.subr.mxu0 0.0
  %780 = vmatpush1.msra.mxu0 0.0
  %781 = vmatprep.mubr.f32.mxu0 0.0
  %782 = vmatmul.mubr.f32.gmra.mrb[0].mxu0 %v715
  %v783 = vpop.f32.mrb[0].mxu0
  %v784 = vadd.f32 0.0, %v783
  %v785 = vpop.f32.mrb[0].mxu0
  %786 = vdwg.mxu0
  %v787 = vadd.f32 %v714, %v784
  %v788 = vxor.u32 %v787, 2147483648
  %v789 = vmul.f32 %v788, 1.442695
  %v790 = vpow.pop %v789
  %v791 = vadd.f32 %v790, 1.0
  %v792 = vrcp.pop %v791
  %v793 = vmul.f32 1.0, %v792
  %v794 = vtanh.pop %v787
  %v795 = vmul.f32 %v793, %v595
  %797 = vrot.lane.b32.xlu0 %v794, 80
  %v798 = vpop.permute.xlu0 %797
  %v800 = vmul.f32 %v793, %v798
  %802 = vrot.lane.b32.xlu0 %v800, 16
  %v803 = vpop.permute.xlu0 %802
  %v805 = vadd.f32 %v795, %v803
  %v806 = vtanh.pop %v805
  %808 = vrot.lane.b32.xlu0 %v806, 16
  %v809 = vpop.permute.xlu0 %808
  %v811 = vmul.f32 %v793, %v809
  %s812 = scalar_lea.vmem %s44, 24
  %v813 = vld [vmem:[%s812] sm:$0x3]
  %v814 = vsel %vm74, %v709, 0
  %816 = vmatprep.subr.mxu0 0.0
  %817 = vmatpush1.msra.mxu0 %v67
  %818 = vmatprep.subr.mxu0 0.0
  %819 = vmatpush1.msra.mxu0 %v68
  %820 = vmatprep.subr.mxu0 0.0
  %821 = vmatpush1.msra.mxu0 0.0
  %822 = vmatprep.subr.mxu0 0.0
  %823 = vmatpush1.msra.mxu0 0.0
  %824 = vmatprep.subr.mxu0 0.0
  %825 = vmatpush1.msra.mxu0 0.0
  %826 = vmatprep.subr.mxu0 0.0
  %827 = vmatpush1.msra.mxu0 0.0
  %828 = vmatprep.subr.mxu0 0.0
  %829 = vmatpush1.msra.mxu0 0.0
  %830 = vmatprep.subr.mxu0 0.0
  %831 = vmatpush1.msra.mxu0 0.0
  %832 = vmatprep.subr.mxu0 0.0
  %833 = vmatpush1.msra.mxu0 0.0
  %834 = vmatprep.subr.mxu0 0.0
  %835 = vmatpush1.msra.mxu0 0.0
  %836 = vmatprep.subr.mxu0 0.0
  %837 = vmatpush1.msra.mxu0 0.0
  %838 = vmatprep.subr.mxu0 0.0
  %839 = vmatpush1.msra.mxu0 0.0
  %840 = vmatprep.subr.mxu0 0.0
  %841 = vmatpush1.msra.mxu0 0.0
  %842 = vmatprep.subr.mxu0 0.0
  %843 = vmatpush1.msra.mxu0 0.0
  %844 = vmatprep.subr.mxu0 0.0
  %845 = vmatpush1.msra.mxu0 0.0
  %846 = vmatprep.subr.mxu0 0.0
  %847 = vmatpush1.msra.mxu0 0.0
  %848 = vmatprep.subr.mxu0 0.0
  %849 = vmatpush1.msra.mxu0 0.0
  %850 = vmatprep.subr.mxu0 0.0
  %851 = vmatpush1.msra.mxu0 0.0
  %852 = vmatprep.subr.mxu0 0.0
  %853 = vmatpush1.msra.mxu0 0.0
  %854 = vmatprep.subr.mxu0 0.0
  %855 = vmatpush1.msra.mxu0 0.0
  %856 = vmatprep.subr.mxu0 0.0
  %857 = vmatpush1.msra.mxu0 0.0
  %858 = vmatprep.subr.mxu0 0.0
  %859 = vmatpush1.msra.mxu0 0.0
  %860 = vmatprep.subr.mxu0 0.0
  %861 = vmatpush1.msra.mxu0 0.0
  %862 = vmatprep.subr.mxu0 0.0
  %863 = vmatpush1.msra.mxu0 0.0
  %864 = vmatprep.subr.mxu0 0.0
  %865 = vmatpush1.msra.mxu0 0.0
  %866 = vmatprep.subr.mxu0 0.0
  %867 = vmatpush1.msra.mxu0 0.0
  %868 = vmatprep.subr.mxu0 0.0
  %869 = vmatpush1.msra.mxu0 0.0
  %870 = vmatprep.subr.mxu0 0.0
  %871 = vmatpush1.msra.mxu0 0.0
  %872 = vmatprep.subr.mxu0 0.0
  %873 = vmatpush1.msra.mxu0 0.0
  %874 = vmatprep.subr.mxu0 0.0
  %875 = vmatpush1.msra.mxu0 0.0
  %876 = vmatprep.subr.mxu0 0.0
  %877 = vmatpush1.msra.mxu0 0.0
  %878 = vmatprep.subr.mxu0 0.0
  %879 = vmatpush1.msra.mxu0 0.0
  %880 = vmatprep.mubr.f32.mxu0 0.0
  %881 = vmatmul.mubr.f32.gmra.mrb[0].mxu0 %v814
  %v882 = vpop.f32.mrb[0].mxu0
  %v883 = vadd.f32 0.0, %v882
  %v884 = vpop.f32.mrb[0].mxu0
  %885 = vdwg.mxu0
  %v886 = vadd.f32 %v813, %v883
  %v887 = vxor.u32 %v886, 2147483648
  %v888 = vmul.f32 %v887, 1.442695
  %v889 = vpow.pop %v888
  %v890 = vadd.f32 %v889, 1.0
  %v891 = vrcp.pop %v890
  %v892 = vmul.f32 1.0, %v891
  %v893 = vtanh.pop %v886
  %v894 = vmul.f32 %v892, %v694
  %896 = vrot.lane.b32.xlu0 %v893, 80
  %v897 = vpop.permute.xlu0 %896
  %v899 = vmul.f32 %v892, %v897
  %901 = vrot.lane.b32.xlu0 %v899, 16
  %v902 = vpop.permute.xlu0 %901
  %v904 = vadd.f32 %v894, %v902
  %v905 = vtanh.pop %v904
  %907 = vrot.lane.b32.xlu0 %v905, 16
  %v908 = vpop.permute.xlu0 %907
  %v910 = vmul.f32 %v892, %v908
  %912 = vrot.lane.b32.xlu0 %v811, 96
  %v913 = vpop.permute.xlu0 %912
  %s915 = scalar_lea.vmem %s3, 6
  %916 = vst.msk [vmem:[%s915] sm:$0x3] %vm285, %v913
  %918 = vrot.lane.b32.xlu0 %v910, 96
  %v919 = vpop.permute.xlu0 %918
  %s921 = scalar_lea.vmem %s52, 24
  %922 = vst.msk [vmem:[%s921] sm:$0x3] %vm285, %v919
  %s923 = scalar_lea.vmem %s0, 8
  %v924 = vld [vmem:[%s923] sm:$0x3]
  %v925 = vsel %vm74, %v913, 0
  %927 = vmatprep.subr.mxu0 0.0
  %928 = vmatpush1.msra.mxu0 %v64
  %929 = vmatprep.subr.mxu0 0.0
  %930 = vmatpush1.msra.mxu0 %v65
  %931 = vmatprep.subr.mxu0 0.0
  %932 = vmatpush1.msra.mxu0 0.0
  %933 = vmatprep.subr.mxu0 0.0
  %934 = vmatpush1.msra.mxu0 0.0
  %935 = vmatprep.subr.mxu0 0.0
  %936 = vmatpush1.msra.mxu0 0.0
  %937 = vmatprep.subr.mxu0 0.0
  %938 = vmatpush1.msra.mxu0 0.0
  %939 = vmatprep.subr.mxu0 0.0
  %940 = vmatpush1.msra.mxu0 0.0
  %941 = vmatprep.subr.mxu0 0.0
  %942 = vmatpush1.msra.mxu0 0.0
  %943 = vmatprep.subr.mxu0 0.0
  %944 = vmatpush1.msra.mxu0 0.0
  %945 = vmatprep.subr.mxu0 0.0
  %946 = vmatpush1.msra.mxu0 0.0
  %947 = vmatprep.subr.mxu0 0.0
  %948 = vmatpush1.msra.mxu0 0.0
  %949 = vmatprep.subr.mxu0 0.0
  %950 = vmatpush1.msra.mxu0 0.0
  %951 = vmatprep.subr.mxu0 0.0
  %952 = vmatpush1.msra.mxu0 0.0
  %953 = vmatprep.subr.mxu0 0.0
  %954 = vmatpush1.msra.mxu0 0.0
  %955 = vmatprep.subr.mxu0 0.0
  %956 = vmatpush1.msra.mxu0 0.0
  %957 = vmatprep.subr.mxu0 0.0
  %958 = vmatpush1.msra.mxu0 0.0
  %959 = vmatprep.subr.mxu0 0.0
  %960 = vmatpush1.msra.mxu0 0.0
  %961 = vmatprep.subr.mxu0 0.0
  %962 = vmatpush1.msra.mxu0 0.0
  %963 = vmatprep.subr.mxu0 0.0
  %964 = vmatpush1.msra.mxu0 0.0
  %965 = vmatprep.subr.mxu0 0.0
  %966 = vmatpush1.msra.mxu0 0.0
  %967 = vmatprep.subr.mxu0 0.0
  %968 = vmatpush1.msra.mxu0 0.0
  %969 = vmatprep.subr.mxu0 0.0
  %970 = vmatpush1.msra.mxu0 0.0
  %971 = vmatprep.subr.mxu0 0.0
  %972 = vmatpush1.msra.mxu0 0.0
  %973 = vmatprep.subr.mxu0 0.0
  %974 = vmatpush1.msra.mxu0 0.0
  %975 = vmatprep.subr.mxu0 0.0
  %976 = vmatpush1.msra.mxu0 0.0
  %977 = vmatprep.subr.mxu0 0.0
  %978 = vmatpush1.msra.mxu0 0.0
  %979 = vmatprep.subr.mxu0 0.0
  %980 = vmatpush1.msra.mxu0 0.0
  %981 = vmatprep.subr.mxu0 0.0
  %982 = vmatpush1.msra.mxu0 0.0
  %983 = vmatprep.subr.mxu0 0.0
  %984 = vmatpush1.msra.mxu0 0.0
  %985 = vmatprep.subr.mxu0 0.0
  %986 = vmatpush1.msra.mxu0 0.0
  %987 = vmatprep.subr.mxu0 0.0
  %988 = vmatpush1.msra.mxu0 0.0
  %989 = vmatprep.subr.mxu0 0.0
  %990 = vmatpush1.msra.mxu0 0.0
  %991 = vmatprep.mubr.f32.mxu0 0.0
  %992 = vmatmul.mubr.f32.gmra.mrb[0].mxu0 %v925
  %v993 = vpop.f32.mrb[0].mxu0
  %v994 = vadd.f32 0.0, %v993
  %v995 = vpop.f32.mrb[0].mxu0
  %996 = vdwg.mxu0
  %v997 = vadd.f32 %v924, %v994
  %v998 = vxor.u32 %v997, 2147483648
  %v999 = vmul.f32 %v998, 1.442695
  %v1000 = vpow.pop %v999
  %v1001 = vadd.f32 %v1000, 1.0
  %v1002 = vrcp.pop %v1001
  %v1003 = vmul.f32 1.0, %v1002
  %v1004 = vtanh.pop %v997
  %v1005 = vmul.f32 %v1003, %v805
  %1007 = vrot.lane.b32.xlu0 %v1004, 80
  %v1008 = vpop.permute.xlu0 %1007
  %v1010 = vmul.f32 %v1003, %v1008
  %1012 = vrot.lane.b32.xlu0 %v1010, 16
  %v1013 = vpop.permute.xlu0 %1012
  %v1015 = vadd.f32 %v1005, %v1013
  %v1016 = vtanh.pop %v1015
  %1018 = vrot.lane.b32.xlu0 %v1016, 16
  %v1019 = vpop.permute.xlu0 %1018
  %v1021 = vmul.f32 %v1003, %v1019
  %s1022 = scalar_lea.vmem %s44, 22
  %v1023 = vld [vmem:[%s1022] sm:$0x3]
  %v1024 = vsel %vm74, %v919, 0
  %1026 = vmatprep.subr.mxu0 0.0
  %1027 = vmatpush1.msra.mxu0 %v67
  %1028 = vmatprep.subr.mxu0 0.0
  %1029 = vmatpush1.msra.mxu0 %v68
  %1030 = vmatprep.subr.mxu0 0.0
  %1031 = vmatpush1.msra.mxu0 0.0
  %1032 = vmatprep.subr.mxu0 0.0
  %1033 = vmatpush1.msra.mxu0 0.0
  %1034 = vmatprep.subr.mxu0 0.0
  %1035 = vmatpush1.msra.mxu0 0.0
  %1036 = vmatprep.subr.mxu0 0.0
  %1037 = vmatpush1.msra.mxu0 0.0
  %1038 = vmatprep.subr.mxu0 0.0
  %1039 = vmatpush1.msra.mxu0 0.0
  %1040 = vmatprep.subr.mxu0 0.0
  %1041 = vmatpush1.msra.mxu0 0.0
  %1042 = vmatprep.subr.mxu0 0.0
  %1043 = vmatpush1.msra.mxu0 0.0
  %1044 = vmatprep.subr.mxu0 0.0
  %1045 = vmatpush1.msra.mxu0 0.0
  %1046 = vmatprep.subr.mxu0 0.0
  %1047 = vmatpush1.msra.mxu0 0.0
  %1048 = vmatprep.subr.mxu0 0.0
  %1049 = vmatpush1.msra.mxu0 0.0
  %1050 = vmatprep.subr.mxu0 0.0
  %1051 = vmatpush1.msra.mxu0 0.0
  %1052 = vmatprep.subr.mxu0 0.0
  %1053 = vmatpush1.msra.mxu0 0.0
  %1054 = vmatprep.subr.mxu0 0.0
  %1055 = vmatpush1.msra.mxu0 0.0
  %1056 = vmatprep.subr.mxu0 0.0
  %1057 = vmatpush1.msra.mxu0 0.0
  %1058 = vmatprep.subr.mxu0 0.0
  %1059 = vmatpush1.msra.mxu0 0.0
  %1060 = vmatprep.subr.mxu0 0.0
  %1061 = vmatpush1.msra.mxu0 0.0
  %1062 = vmatprep.subr.mxu0 0.0
  %1063 = vmatpush1.msra.mxu0 0.0
  %1064 = vmatprep.subr.mxu0 0.0
  %1065 = vmatpush1.msra.mxu0 0.0
  %1066 = vmatprep.subr.mxu0 0.0
  %1067 = vmatpush1.msra.mxu0 0.0
  %1068 = vmatprep.subr.mxu0 0.0
  %1069 = vmatpush1.msra.mxu0 0.0
  %1070 = vmatprep.subr.mxu0 0.0
  %1071 = vmatpush1.msra.mxu0 0.0
  %1072 = vmatprep.subr.mxu0 0.0
  %1073 = vmatpush1.msra.mxu0 0.0
  %1074 = vmatprep.subr.mxu0 0.0
  %1075 = vmatpush1.msra.mxu0 0.0
  %1076 = vmatprep.subr.mxu0 0.0
  %1077 = vmatpush1.msra.mxu0 0.0
  %1078 = vmatprep.subr.mxu0 0.0
  %1079 = vmatpush1.msra.mxu0 0.0
  %1080 = vmatprep.subr.mxu0 0.0
  %1081 = vmatpush1.msra.mxu0 0.0
  %1082 = vmatprep.subr.mxu0 0.0
  %1083 = vmatpush1.msra.mxu0 0.0
  %1084 = vmatprep.subr.mxu0 0.0
  %1085 = vmatpush1.msra.mxu0 0.0
  %1086 = vmatprep.subr.mxu0 0.0
  %1087 = vmatpush1.msra.mxu0 0.0
  %1088 = vmatprep.subr.mxu0 0.0
  %1089 = vmatpush1.msra.mxu0 0.0
  %1090 = vmatprep.mubr.f32.mxu0 0.0
  %1091 = vmatmul.mubr.f32.gmra.mrb[0].mxu0 %v1024
  %v1092 = vpop.f32.mrb[0].mxu0
  %v1093 = vadd.f32 0.0, %v1092
  %v1094 = vpop.f32.mrb[0].mxu0
  %1095 = vdwg.mxu0
  %v1096 = vadd.f32 %v1023, %v1093
  %v1097 = vxor.u32 %v1096, 2147483648
  %v1098 = vmul.f32 %v1097, 1.442695
  %v1099 = vpow.pop %v1098
  %v1100 = vadd.f32 %v1099, 1.0
  %v1101 = vrcp.pop %v1100
  %v1102 = vmul.f32 1.0, %v1101
  %v1103 = vtanh.pop %v1096
  %v1104 = vmul.f32 %v1102, %v904
  %1106 = vrot.lane.b32.xlu0 %v1103, 80
  %v1107 = vpop.permute.xlu0 %1106
  %v1109 = vmul.f32 %v1102, %v1107
  %1111 = vrot.lane.b32.xlu0 %v1109, 16
  %v1112 = vpop.permute.xlu0 %1111
  %v1114 = vadd.f32 %v1104, %v1112
  %v1115 = vtanh.pop %v1114
  %1117 = vrot.lane.b32.xlu0 %v1115, 16
  %v1118 = vpop.permute.xlu0 %1117
  %v1120 = vmul.f32 %v1102, %v1118
  %1122 = vrot.lane.b32.xlu0 %v1021, 96
  %v1123 = vpop.permute.xlu0 %1122
  %s1125 = scalar_lea.vmem %s3, 8
  %1126 = vst.msk [vmem:[%s1125] sm:$0x3] %vm285, %v1123
  %1128 = vrot.lane.b32.xlu0 %v1120, 96
  %v1129 = vpop.permute.xlu0 %1128
  %s1131 = scalar_lea.vmem %s52, 22
  %1132 = vst.msk [vmem:[%s1131] sm:$0x3] %vm285, %v1129
  %s1133 = scalar_lea.vmem %s0, 10
  %v1134 = vld [vmem:[%s1133] sm:$0x3]
  %v1135 = vsel %vm74, %v1123, 0
  %1137 = vmatprep.subr.mxu0 0.0
  %1138 = vmatpush1.msra.mxu0 %v64
  %1139 = vmatprep.subr.mxu0 0.0
  %1140 = vmatpush1.msra.mxu0 %v65
  %1141 = vmatprep.subr.mxu0 0.0
  %1142 = vmatpush1.msra.mxu0 0.0
  %1143 = vmatprep.subr.mxu0 0.0
  %1144 = vmatpush1.msra.mxu0 0.0
  %1145 = vmatprep.subr.mxu0 0.0
  %1146 = vmatpush1.msra.mxu0 0.0
  %1147 = vmatprep.subr.mxu0 0.0
  %1148 = vmatpush1.msra.mxu0 0.0
  %1149 = vmatprep.subr.mxu0 0.0
  %1150 = vmatpush1.msra.mxu0 0.0
  %1151 = vmatprep.subr.mxu0 0.0
  %1152 = vmatpush1.msra.mxu0 0.0
  %1153 = vmatprep.subr.mxu0 0.0
  %1154 = vmatpush1.msra.mxu0 0.0
  %1155 = vmatprep.subr.mxu0 0.0
  %1156 = vmatpush1.msra.mxu0 0.0
  %1157 = vmatprep.subr.mxu0 0.0
  %1158 = vmatpush1.msra.mxu0 0.0
  %1159 = vmatprep.subr.mxu0 0.0
  %1160 = vmatpush1.msra.mxu0 0.0
  %1161 = vmatprep.subr.mxu0 0.0
  %1162 = vmatpush1.msra.mxu0 0.0
  %1163 = vmatprep.subr.mxu0 0.0
  %1164 = vmatpush1.msra.mxu0 0.0
  %1165 = vmatprep.subr.mxu0 0.0
  %1166 = vmatpush1.msra.mxu0 0.0
  %1167 = vmatprep.subr.mxu0 0.0
  %1168 = vmatpush1.msra.mxu0 0.0
  %1169 = vmatprep.subr.mxu0 0.0
  %1170 = vmatpush1.msra.mxu0 0.0
  %1171 = vmatprep.subr.mxu0 0.0
  %1172 = vmatpush1.msra.mxu0 0.0
  %1173 = vmatprep.subr.mxu0 0.0
  %1174 = vmatpush1.msra.mxu0 0.0
  %1175 = vmatprep.subr.mxu0 0.0
  %1176 = vmatpush1.msra.mxu0 0.0
  %1177 = vmatprep.subr.mxu0 0.0
  %1178 = vmatpush1.msra.mxu0 0.0
  %1179 = vmatprep.subr.mxu0 0.0
  %1180 = vmatpush1.msra.mxu0 0.0
  %1181 = vmatprep.subr.mxu0 0.0
  %1182 = vmatpush1.msra.mxu0 0.0
  %1183 = vmatprep.subr.mxu0 0.0
  %1184 = vmatpush1.msra.mxu0 0.0
  %1185 = vmatprep.subr.mxu0 0.0
  %1186 = vmatpush1.msra.mxu0 0.0
  %1187 = vmatprep.subr.mxu0 0.0
  %1188 = vmatpush1.msra.mxu0 0.0
  %1189 = vmatprep.subr.mxu0 0.0
  %1190 = vmatpush1.msra.mxu0 0.0
  %1191 = vmatprep.subr.mxu0 0.0
  %1192 = vmatpush1.msra.mxu0 0.0
  %1193 = vmatprep.subr.mxu0 0.0
  %1194 = vmatpush1.msra.mxu0 0.0
  %1195 = vmatprep.subr.mxu0 0.0
  %1196 = vmatpush1.msra.mxu0 0.0
  %1197 = vmatprep.subr.mxu0 0.0
  %1198 = vmatpush1.msra.mxu0 0.0
  %1199 = vmatprep.subr.mxu0 0.0
  %1200 = vmatpush1.msra.mxu0 0.0
  %1201 = vmatprep.mubr.f32.mxu0 0.0
  %1202 = vmatmul.mubr.f32.gmra.mrb[0].mxu0 %v1135
  %v1203 = vpop.f32.mrb[0].mxu0
  %v1204 = vadd.f32 0.0, %v1203
  %v1205 = vpop.f32.mrb[0].mxu0
  %1206 = vdwg.mxu0
  %v1207 = vadd.f32 %v1134, %v1204
  %v1208 = vxor.u32 %v1207, 2147483648
  %v1209 = vmul.f32 %v1208, 1.442695
  %v1210 = vpow.pop %v1209
  %v1211 = vadd.f32 %v1210, 1.0
  %v1212 = vrcp.pop %v1211
  %v1213 = vmul.f32 1.0, %v1212
  %v1214 = vtanh.pop %v1207
  %v1215 = vmul.f32 %v1213, %v1015
  %1217 = vrot.lane.b32.xlu0 %v1214, 80
  %v1218 = vpop.permute.xlu0 %1217
  %v1220 = vmul.f32 %v1213, %v1218
  %1222 = vrot.lane.b32.xlu0 %v1220, 16
  %v1223 = vpop.permute.xlu0 %1222
  %v1225 = vadd.f32 %v1215, %v1223
  %v1226 = vtanh.pop %v1225
  %1228 = vrot.lane.b32.xlu0 %v1226, 16
  %v1229 = vpop.permute.xlu0 %1228
  %v1231 = vmul.f32 %v1213, %v1229
  %s1232 = scalar_lea.vmem %s44, 20
  %v1233 = vld [vmem:[%s1232] sm:$0x3]
  %v1234 = vsel %vm74, %v1129, 0
  %1236 = vmatprep.subr.mxu0 0.0
  %1237 = vmatpush1.msra.mxu0 %v67
  %1238 = vmatprep.subr.mxu0 0.0
  %1239 = vmatpush1.msra.mxu0 %v68
  %1240 = vmatprep.subr.mxu0 0.0
  %1241 = vmatpush1.msra.mxu0 0.0
  %1242 = vmatprep.subr.mxu0 0.0
  %1243 = vmatpush1.msra.mxu0 0.0
  %1244 = vmatprep.subr.mxu0 0.0
  %1245 = vmatpush1.msra.mxu0 0.0
  %1246 = vmatprep.subr.mxu0 0.0
  %1247 = vmatpush1.msra.mxu0 0.0
  %1248 = vmatprep.subr.mxu0 0.0
  %1249 = vmatpush1.msra.mxu0 0.0
  %1250 = vmatprep.subr.mxu0 0.0
  %1251 = vmatpush1.msra.mxu0 0.0
  %1252 = vmatprep.subr.mxu0 0.0
  %1253 = vmatpush1.msra.mxu0 0.0
  %1254 = vmatprep.subr.mxu0 0.0
  %1255 = vmatpush1.msra.mxu0 0.0
  %1256 = vmatprep.subr.mxu0 0.0
  %1257 = vmatpush1.msra.mxu0 0.0
  %1258 = vmatprep.subr.mxu0 0.0
  %1259 = vmatpush1.msra.mxu0 0.0
  %1260 = vmatprep.subr.mxu0 0.0
  %1261 = vmatpush1.msra.mxu0 0.0
  %1262 = vmatprep.subr.mxu0 0.0
  %1263 = vmatpush1.msra.mxu0 0.0
  %1264 = vmatprep.subr.mxu0 0.0
  %1265 = vmatpush1.msra.mxu0 0.0
  %1266 = vmatprep.subr.mxu0 0.0
  %1267 = vmatpush1.msra.mxu0 0.0
  %1268 = vmatprep.subr.mxu0 0.0
  %1269 = vmatpush1.msra.mxu0 0.0
  %1270 = vmatprep.subr.mxu0 0.0
  %1271 = vmatpush1.msra.mxu0 0.0
  %1272 = vmatprep.subr.mxu0 0.0
  %1273 = vmatpush1.msra.mxu0 0.0
  %1274 = vmatprep.subr.mxu0 0.0
  %1275 = vmatpush1.msra.mxu0 0.0
  %1276 = vmatprep.subr.mxu0 0.0
  %1277 = vmatpush1.msra.mxu0 0.0
  %1278 = vmatprep.subr.mxu0 0.0
  %1279 = vmatpush1.msra.mxu0 0.0
  %1280 = vmatprep.subr.mxu0 0.0
  %1281 = vmatpush1.msra.mxu0 0.0
  %1282 = vmatprep.subr.mxu0 0.0
  %1283 = vmatpush1.msra.mxu0 0.0
  %1284 = vmatprep.subr.mxu0 0.0
  %1285 = vmatpush1.msra.mxu0 0.0
  %1286 = vmatprep.subr.mxu0 0.0
  %1287 = vmatpush1.msra.mxu0 0.0
  %1288 = vmatprep.subr.mxu0 0.0
  %1289 = vmatpush1.msra.mxu0 0.0
  %1290 = vmatprep.subr.mxu0 0.0
  %1291 = vmatpush1.msra.mxu0 0.0
  %1292 = vmatprep.subr.mxu0 0.0
  %1293 = vmatpush1.msra.mxu0 0.0
  %1294 = vmatprep.subr.mxu0 0.0
  %1295 = vmatpush1.msra.mxu0 0.0
  %1296 = vmatprep.subr.mxu0 0.0
  %1297 = vmatpush1.msra.mxu0 0.0
  %1298 = vmatprep.subr.mxu0 0.0
  %1299 = vmatpush1.msra.mxu0 0.0
  %1300 = vmatprep.mubr.f32.mxu0 0.0
  %1301 = vmatmul.mubr.f32.gmra.mrb[0].mxu0 %v1234
  %v1302 = vpop.f32.mrb[0].mxu0
  %v1303 = vadd.f32 0.0, %v1302
  %v1304 = vpop.f32.mrb[0].mxu0
  %1305 = vdwg.mxu0
  %v1306 = vadd.f32 %v1233, %v1303
  %v1307 = vxor.u32 %v1306, 2147483648
  %v1308 = vmul.f32 %v1307, 1.442695
  %v1309 = vpow.pop %v1308
  %v1310 = vadd.f32 %v1309, 1.0
  %v1311 = vrcp.pop %v1310
  %v1312 = vmul.f32 1.0, %v1311
  %v1313 = vtanh.pop %v1306
  %v1314 = vmul.f32 %v1312, %v1114
  %1316 = vrot.lane.b32.xlu0 %v1313, 80
  %v1317 = vpop.permute.xlu0 %1316
  %v1319 = vmul.f32 %v1312, %v1317
  %1321 = vrot.lane.b32.xlu0 %v1319, 16
  %v1322 = vpop.permute.xlu0 %1321
  %v1324 = vadd.f32 %v1314, %v1322
  %v1325 = vtanh.pop %v1324
  %1327 = vrot.lane.b32.xlu0 %v1325, 16
  %v1328 = vpop.permute.xlu0 %1327
  %v1330 = vmul.f32 %v1312, %v1328
  %1332 = vrot.lane.b32.xlu0 %v1231, 96
  %v1333 = vpop.permute.xlu0 %1332
  %s1335 = scalar_lea.vmem %s3, 10
  %1336 = vst.msk [vmem:[%s1335] sm:$0x3] %vm285, %v1333
  %1338 = vrot.lane.b32.xlu0 %v1330, 96
  %v1339 = vpop.permute.xlu0 %1338
  %s1341 = scalar_lea.vmem %s52, 20
  %1342 = vst.msk [vmem:[%s1341] sm:$0x3] %vm285, %v1339
  %s1343 = scalar_lea.vmem %s0, 12
  %v1344 = vld [vmem:[%s1343] sm:$0x3]
  %v1345 = vsel %vm74, %v1333, 0
  %1347 = vmatprep.subr.mxu0 0.0
  %1348 = vmatpush1.msra.mxu0 %v64
  %1349 = vmatprep.subr.mxu0 0.0
  %1350 = vmatpush1.msra.mxu0 %v65
  %1351 = vmatprep.subr.mxu0 0.0
  %1352 = vmatpush1.msra.mxu0 0.0
  %1353 = vmatprep.subr.mxu0 0.0
  %1354 = vmatpush1.msra.mxu0 0.0
  %1355 = vmatprep.subr.mxu0 0.0
  %1356 = vmatpush1.msra.mxu0 0.0
  %1357 = vmatprep.subr.mxu0 0.0
  %1358 = vmatpush1.msra.mxu0 0.0
  %1359 = vmatprep.subr.mxu0 0.0
  %1360 = vmatpush1.msra.mxu0 0.0
  %1361 = vmatprep.subr.mxu0 0.0
  %1362 = vmatpush1.msra.mxu0 0.0
  %1363 = vmatprep.subr.mxu0 0.0
  %1364 = vmatpush1.msra.mxu0 0.0
  %1365 = vmatprep.subr.mxu0 0.0
  %1366 = vmatpush1.msra.mxu0 0.0
  %1367 = vmatprep.subr.mxu0 0.0
  %1368 = vmatpush1.msra.mxu0 0.0
  %1369 = vmatprep.subr.mxu0 0.0
  %1370 = vmatpush1.msra.mxu0 0.0
  %1371 = vmatprep.subr.mxu0 0.0
  %1372 = vmatpush1.msra.mxu0 0.0
  %1373 = vmatprep.subr.mxu0 0.0
  %1374 = vmatpush1.msra.mxu0 0.0
  %1375 = vmatprep.subr.mxu0 0.0
  %1376 = vmatpush1.msra.mxu0 0.0
  %1377 = vmatprep.subr.mxu0 0.0
  %1378 = vmatpush1.msra.mxu0 0.0
  %1379 = vmatprep.subr.mxu0 0.0
  %1380 = vmatpush1.msra.mxu0 0.0
  %1381 = vmatprep.subr.mxu0 0.0
  %1382 = vmatpush1.msra.mxu0 0.0
  %1383 = vmatprep.subr.mxu0 0.0
  %1384 = vmatpush1.msra.mxu0 0.0
  %1385 = vmatprep.subr.mxu0 0.0
  %1386 = vmatpush1.msra.mxu0 0.0
  %1387 = vmatprep.subr.mxu0 0.0
  %1388 = vmatpush1.msra.mxu0 0.0
  %1389 = vmatprep.subr.mxu0 0.0
  %1390 = vmatpush1.msra.mxu0 0.0
  %1391 = vmatprep.subr.mxu0 0.0
  %1392 = vmatpush1.msra.mxu0 0.0
  %1393 = vmatprep.subr.mxu0 0.0
  %1394 = vmatpush1.msra.mxu0 0.0
  %1395 = vmatprep.subr.mxu0 0.0
  %1396 = vmatpush1.msra.mxu0 0.0
  %1397 = vmatprep.subr.mxu0 0.0
  %1398 = vmatpush1.msra.mxu0 0.0
  %1399 = vmatprep.subr.mxu0 0.0
  %1400 = vmatpush1.msra.mxu0 0.0
  %1401 = vmatprep.subr.mxu0 0.0
  %1402 = vmatpush1.msra.mxu0 0.0
  %1403 = vmatprep.subr.mxu0 0.0
  %1404 = vmatpush1.msra.mxu0 0.0
  %1405 = vmatprep.subr.mxu0 0.0
  %1406 = vmatpush1.msra.mxu0 0.0
  %1407 = vmatprep.subr.mxu0 0.0
  %1408 = vmatpush1.msra.mxu0 0.0
  %1409 = vmatprep.subr.mxu0 0.0
  %1410 = vmatpush1.msra.mxu0 0.0
  %1411 = vmatprep.mubr.f32.mxu0 0.0
  %1412 = vmatmul.mubr.f32.gmra.mrb[0].mxu0 %v1345
  %v1413 = vpop.f32.mrb[0].mxu0
  %v1414 = vadd.f32 0.0, %v1413
  %v1415 = vpop.f32.mrb[0].mxu0
  %1416 = vdwg.mxu0
  %v1417 = vadd.f32 %v1344, %v1414
  %v1418 = vxor.u32 %v1417, 2147483648
  %v1419 = vmul.f32 %v1418, 1.442695
  %v1420 = vpow.pop %v1419
  %v1421 = vadd.f32 %v1420, 1.0
  %v1422 = vrcp.pop %v1421
  %v1423 = vmul.f32 1.0, %v1422
  %v1424 = vtanh.pop %v1417
  %v1425 = vmul.f32 %v1423, %v1225
  %1427 = vrot.lane.b32.xlu0 %v1424, 80
  %v1428 = vpop.permute.xlu0 %1427
  %v1430 = vmul.f32 %v1423, %v1428
  %1432 = vrot.lane.b32.xlu0 %v1430, 16
  %v1433 = vpop.permute.xlu0 %1432
  %v1435 = vadd.f32 %v1425, %v1433
  %v1436 = vtanh.pop %v1435
  %1438 = vrot.lane.b32.xlu0 %v1436, 16
  %v1439 = vpop.permute.xlu0 %1438
  %v1441 = vmul.f32 %v1423, %v1439
  %s1442 = scalar_lea.vmem %s44, 18
  %v1443 = vld [vmem:[%s1442] sm:$0x3]
  %v1444 = vsel %vm74, %v1339, 0
  %1446 = vmatprep.subr.mxu0 0.0
  %1447 = vmatpush1.msra.mxu0 %v67
  %1448 = vmatprep.subr.mxu0 0.0
  %1449 = vmatpush1.msra.mxu0 %v68
  %1450 = vmatprep.subr.mxu0 0.0
  %1451 = vmatpush1.msra.mxu0 0.0
  %1452 = vmatprep.subr.mxu0 0.0
  %1453 = vmatpush1.msra.mxu0 0.0
  %1454 = vmatprep.subr.mxu0 0.0
  %1455 = vmatpush1.msra.mxu0 0.0
  %1456 = vmatprep.subr.mxu0 0.0
  %1457 = vmatpush1.msra.mxu0 0.0
  %1458 = vmatprep.subr.mxu0 0.0
  %1459 = vmatpush1.msra.mxu0 0.0
  %1460 = vmatprep.subr.mxu0 0.0
  %1461 = vmatpush1.msra.mxu0 0.0
  %1462 = vmatprep.subr.mxu0 0.0
  %1463 = vmatpush1.msra.mxu0 0.0
  %1464 = vmatprep.subr.mxu0 0.0
  %1465 = vmatpush1.msra.mxu0 0.0
  %1466 = vmatprep.subr.mxu0 0.0
  %1467 = vmatpush1.msra.mxu0 0.0
  %1468 = vmatprep.subr.mxu0 0.0
  %1469 = vmatpush1.msra.mxu0 0.0
  %1470 = vmatprep.subr.mxu0 0.0
  %1471 = vmatpush1.msra.mxu0 0.0
  %1472 = vmatprep.subr.mxu0 0.0
  %1473 = vmatpush1.msra.mxu0 0.0
  %1474 = vmatprep.subr.mxu0 0.0
  %1475 = vmatpush1.msra.mxu0 0.0
  %1476 = vmatprep.subr.mxu0 0.0
  %1477 = vmatpush1.msra.mxu0 0.0
  %1478 = vmatprep.subr.mxu0 0.0
  %1479 = vmatpush1.msra.mxu0 0.0
  %1480 = vmatprep.subr.mxu0 0.0
  %1481 = vmatpush1.msra.mxu0 0.0
  %1482 = vmatprep.subr.mxu0 0.0
  %1483 = vmatpush1.msra.mxu0 0.0
  %1484 = vmatprep.subr.mxu0 0.0
  %1485 = vmatpush1.msra.mxu0 0.0
  %1486 = vmatprep.subr.mxu0 0.0
  %1487 = vmatpush1.msra.mxu0 0.0
  %1488 = vmatprep.subr.mxu0 0.0
  %1489 = vmatpush1.msra.mxu0 0.0
  %1490 = vmatprep.subr.mxu0 0.0
  %1491 = vmatpush1.msra.mxu0 0.0
  %1492 = vmatprep.subr.mxu0 0.0
  %1493 = vmatpush1.msra.mxu0 0.0
  %1494 = vmatprep.subr.mxu0 0.0
  %1495 = vmatpush1.msra.mxu0 0.0
  %1496 = vmatprep.subr.mxu0 0.0
  %1497 = vmatpush1.msra.mxu0 0.0
  %1498 = vmatprep.subr.mxu0 0.0
  %1499 = vmatpush1.msra.mxu0 0.0
  %1500 = vmatprep.subr.mxu0 0.0
  %1501 = vmatpush1.msra.mxu0 0.0
  %1502 = vmatprep.subr.mxu0 0.0
  %1503 = vmatpush1.msra.mxu0 0.0
  %1504 = vmatprep.subr.mxu0 0.0
  %1505 = vmatpush1.msra.mxu0 0.0
  %1506 = vmatprep.subr.mxu0 0.0
  %1507 = vmatpush1.msra.mxu0 0.0
  %1508 = vmatprep.subr.mxu0 0.0
  %1509 = vmatpush1.msra.mxu0 0.0
  %1510 = vmatprep.mubr.f32.mxu0 0.0
  %1511 = vmatmul.mubr.f32.gmra.mrb[0].mxu0 %v1444
  %v1512 = vpop.f32.mrb[0].mxu0
  %v1513 = vadd.f32 0.0, %v1512
  %v1514 = vpop.f32.mrb[0].mxu0
  %1515 = vdwg.mxu0
  %v1516 = vadd.f32 %v1443, %v1513
  %v1517 = vxor.u32 %v1516, 2147483648
  %v1518 = vmul.f32 %v1517, 1.442695
  %v1519 = vpow.pop %v1518
  %v1520 = vadd.f32 %v1519, 1.0
  %v1521 = vrcp.pop %v1520
  %v1522 = vmul.f32 1.0, %v1521
  %v1523 = vtanh.pop %v1516
  %v1524 = vmul.f32 %v1522, %v1324
  %1526 = vrot.lane.b32.xlu0 %v1523, 80
  %v1527 = vpop.permute.xlu0 %1526
  %v1529 = vmul.f32 %v1522, %v1527
  %1531 = vrot.lane.b32.xlu0 %v1529, 16
  %v1532 = vpop.permute.xlu0 %1531
  %v1534 = vadd.f32 %v1524, %v1532
  %v1535 = vtanh.pop %v1534
  %1537 = vrot.lane.b32.xlu0 %v1535, 16
  %v1538 = vpop.permute.xlu0 %1537
  %v1540 = vmul.f32 %v1522, %v1538
  %1542 = vrot.lane.b32.xlu0 %v1441, 96
  %v1543 = vpop.permute.xlu0 %1542
  %s1545 = scalar_lea.vmem %s3, 12
  %1546 = vst.msk [vmem:[%s1545] sm:$0x3] %vm285, %v1543
  %1548 = vrot.lane.b32.xlu0 %v1540, 96
  %v1549 = vpop.permute.xlu0 %1548
  %s1551 = scalar_lea.vmem %s52, 18
  %1552 = vst.msk [vmem:[%s1551] sm:$0x3] %vm285, %v1549
  %s1553 = scalar_lea.vmem %s0, 14
  %v1554 = vld [vmem:[%s1553] sm:$0x3]
  %v1555 = vsel %vm74, %v1543, 0
  %1557 = vmatprep.subr.mxu0 0.0
  %1558 = vmatpush1.msra.mxu0 %v64
  %1559 = vmatprep.subr.mxu0 0.0
  %1560 = vmatpush1.msra.mxu0 %v65
  %1561 = vmatprep.subr.mxu0 0.0
  %1562 = vmatpush1.msra.mxu0 0.0
  %1563 = vmatprep.subr.mxu0 0.0
  %1564 = vmatpush1.msra.mxu0 0.0
  %1565 = vmatprep.subr.mxu0 0.0
  %1566 = vmatpush1.msra.mxu0 0.0
  %1567 = vmatprep.subr.mxu0 0.0
  %1568 = vmatpush1.msra.mxu0 0.0
  %1569 = vmatprep.subr.mxu0 0.0
  %1570 = vmatpush1.msra.mxu0 0.0
  %1571 = vmatprep.subr.mxu0 0.0
  %1572 = vmatpush1.msra.mxu0 0.0
  %1573 = vmatprep.subr.mxu0 0.0
  %1574 = vmatpush1.msra.mxu0 0.0
  %1575 = vmatprep.subr.mxu0 0.0
  %1576 = vmatpush1.msra.mxu0 0.0
  %1577 = vmatprep.subr.mxu0 0.0
  %1578 = vmatpush1.msra.mxu0 0.0
  %1579 = vmatprep.subr.mxu0 0.0
  %1580 = vmatpush1.msra.mxu0 0.0
  %1581 = vmatprep.subr.mxu0 0.0
  %1582 = vmatpush1.msra.mxu0 0.0
  %1583 = vmatprep.subr.mxu0 0.0
  %1584 = vmatpush1.msra.mxu0 0.0
  %1585 = vmatprep.subr.mxu0 0.0
  %1586 = vmatpush1.msra.mxu0 0.0
  %1587 = vmatprep.subr.mxu0 0.0
  %1588 = vmatpush1.msra.mxu0 0.0
  %1589 = vmatprep.subr.mxu0 0.0
  %1590 = vmatpush1.msra.mxu0 0.0
  %1591 = vmatprep.subr.mxu0 0.0
  %1592 = vmatpush1.msra.mxu0 0.0
  %1593 = vmatprep.subr.mxu0 0.0
  %1594 = vmatpush1.msra.mxu0 0.0
  %1595 = vmatprep.subr.mxu0 0.0
  %1596 = vmatpush1.msra.mxu0 0.0
  %1597 = vmatprep.subr.mxu0 0.0
  %1598 = vmatpush1.msra.mxu0 0.0
  %1599 = vmatprep.subr.mxu0 0.0
  %1600 = vmatpush1.msra.mxu0 0.0
  %1601 = vmatprep.subr.mxu0 0.0
  %1602 = vmatpush1.msra.mxu0 0.0
  %1603 = vmatprep.subr.mxu0 0.0
  %1604 = vmatpush1.msra.mxu0 0.0
  %1605 = vmatprep.subr.mxu0 0.0
  %1606 = vmatpush1.msra.mxu0 0.0
  %1607 = vmatprep.subr.mxu0 0.0
  %1608 = vmatpush1.msra.mxu0 0.0
  %1609 = vmatprep.subr.mxu0 0.0
  %1610 = vmatpush1.msra.mxu0 0.0
  %1611 = vmatprep.subr.mxu0 0.0
  %1612 = vmatpush1.msra.mxu0 0.0
  %1613 = vmatprep.subr.mxu0 0.0
  %1614 = vmatpush1.msra.mxu0 0.0
  %1615 = vmatprep.subr.mxu0 0.0
  %1616 = vmatpush1.msra.mxu0 0.0
  %1617 = vmatprep.subr.mxu0 0.0
  %1618 = vmatpush1.msra.mxu0 0.0
  %1619 = vmatprep.subr.mxu0 0.0
  %1620 = vmatpush1.msra.mxu0 0.0
  %1621 = vmatprep.mubr.f32.mxu0 0.0
  %1622 = vmatmul.mubr.f32.gmra.mrb[0].mxu0 %v1555
  %v1623 = vpop.f32.mrb[0].mxu0
  %v1624 = vadd.f32 0.0, %v1623
  %v1625 = vpop.f32.mrb[0].mxu0
  %1626 = vdwg.mxu0
  %v1627 = vadd.f32 %v1554, %v1624
  %v1628 = vxor.u32 %v1627, 2147483648
  %v1629 = vmul.f32 %v1628, 1.442695
  %v1630 = vpow.pop %v1629
  %v1631 = vadd.f32 %v1630, 1.0
  %v1632 = vrcp.pop %v1631
  %v1633 = vmul.f32 1.0, %v1632
  %v1634 = vtanh.pop %v1627
  %v1635 = vmul.f32 %v1633, %v1435
  %1637 = vrot.lane.b32.xlu0 %v1634, 80
  %v1638 = vpop.permute.xlu0 %1637
  %v1640 = vmul.f32 %v1633, %v1638
  %1642 = vrot.lane.b32.xlu0 %v1640, 16
  %v1643 = vpop.permute.xlu0 %1642
  %v1645 = vadd.f32 %v1635, %v1643
  %v1646 = vtanh.pop %v1645
  %1648 = vrot.lane.b32.xlu0 %v1646, 16
  %v1649 = vpop.permute.xlu0 %1648
  %v1651 = vmul.f32 %v1633, %v1649
  %s1652 = scalar_lea.vmem %s44, 16
  %v1653 = vld [vmem:[%s1652] sm:$0x3]
  %v1654 = vsel %vm74, %v1549, 0
  %1656 = vmatprep.subr.mxu0 0.0
  %1657 = vmatpush1.msra.mxu0 %v67
  %1658 = vmatprep.subr.mxu0 0.0
  %1659 = vmatpush1.msra.mxu0 %v68
  %1660 = vmatprep.subr.mxu0 0.0
  %1661 = vmatpush1.msra.mxu0 0.0
  %1662 = vmatprep.subr.mxu0 0.0
  %1663 = vmatpush1.msra.mxu0 0.0
  %1664 = vmatprep.subr.mxu0 0.0
  %1665 = vmatpush1.msra.mxu0 0.0
  %1666 = vmatprep.subr.mxu0 0.0
  %1667 = vmatpush1.msra.mxu0 0.0
  %1668 = vmatprep.subr.mxu0 0.0
  %1669 = vmatpush1.msra.mxu0 0.0
  %1670 = vmatprep.subr.mxu0 0.0
  %1671 = vmatpush1.msra.mxu0 0.0
  %1672 = vmatprep.subr.mxu0 0.0
  %1673 = vmatpush1.msra.mxu0 0.0
  %1674 = vmatprep.subr.mxu0 0.0
  %1675 = vmatpush1.msra.mxu0 0.0
  %1676 = vmatprep.subr.mxu0 0.0
  %1677 = vmatpush1.msra.mxu0 0.0
  %1678 = vmatprep.subr.mxu0 0.0
  %1679 = vmatpush1.msra.mxu0 0.0
  %1680 = vmatprep.subr.mxu0 0.0
  %1681 = vmatpush1.msra.mxu0 0.0
  %1682 = vmatprep.subr.mxu0 0.0
  %1683 = vmatpush1.msra.mxu0 0.0
  %1684 = vmatprep.subr.mxu0 0.0
  %1685 = vmatpush1.msra.mxu0 0.0
  %1686 = vmatprep.subr.mxu0 0.0
  %1687 = vmatpush1.msra.mxu0 0.0
  %1688 = vmatprep.subr.mxu0 0.0
  %1689 = vmatpush1.msra.mxu0 0.0
  %1690 = vmatprep.subr.mxu0 0.0
  %1691 = vmatpush1.msra.mxu0 0.0
  %1692 = vmatprep.subr.mxu0 0.0
  %1693 = vmatpush1.msra.mxu0 0.0
  %1694 = vmatprep.subr.mxu0 0.0
  %1695 = vmatpush1.msra.mxu0 0.0
  %1696 = vmatprep.subr.mxu0 0.0
  %1697 = vmatpush1.msra.mxu0 0.0
  %1698 = vmatprep.subr.mxu0 0.0
  %1699 = vmatpush1.msra.mxu0 0.0
  %1700 = vmatprep.subr.mxu0 0.0
  %1701 = vmatpush1.msra.mxu0 0.0
  %1702 = vmatprep.subr.mxu0 0.0
  %1703 = vmatpush1.msra.mxu0 0.0
  %1704 = vmatprep.subr.mxu0 0.0
  %1705 = vmatpush1.msra.mxu0 0.0
  %1706 = vmatprep.subr.mxu0 0.0
  %1707 = vmatpush1.msra.mxu0 0.0
  %1708 = vmatprep.subr.mxu0 0.0
  %1709 = vmatpush1.msra.mxu0 0.0
  %1710 = vmatprep.subr.mxu0 0.0
  %1711 = vmatpush1.msra.mxu0 0.0
  %1712 = vmatprep.subr.mxu0 0.0
  %1713 = vmatpush1.msra.mxu0 0.0
  %1714 = vmatprep.subr.mxu0 0.0
  %1715 = vmatpush1.msra.mxu0 0.0
  %1716 = vmatprep.subr.mxu0 0.0
  %1717 = vmatpush1.msra.mxu0 0.0
  %1718 = vmatprep.subr.mxu0 0.0
  %1719 = vmatpush1.msra.mxu0 0.0
  %1720 = vmatprep.mubr.f32.mxu0 0.0
  %1721 = vmatmul.mubr.f32.gmra.mrb[0].mxu0 %v1654
  %v1722 = vpop.f32.mrb[0].mxu0
  %v1723 = vadd.f32 0.0, %v1722
  %v1724 = vpop.f32.mrb[0].mxu0
  %1725 = vdwg.mxu0
  %v1726 = vadd.f32 %v1653, %v1723
  %v1727 = vxor.u32 %v1726, 2147483648
  %v1728 = vmul.f32 %v1727, 1.442695
  %v1729 = vpow.pop %v1728
  %v1730 = vadd.f32 %v1729, 1.0
  %v1731 = vrcp.pop %v1730
  %v1732 = vmul.f32 1.0, %v1731
  %v1733 = vtanh.pop %v1726
  %v1734 = vmul.f32 %v1732, %v1534
  %1736 = vrot.lane.b32.xlu0 %v1733, 80
  %v1737 = vpop.permute.xlu0 %1736
  %v1739 = vmul.f32 %v1732, %v1737
  %1741 = vrot.lane.b32.xlu0 %v1739, 16
  %v1742 = vpop.permute.xlu0 %1741
  %v1744 = vadd.f32 %v1734, %v1742
  %v1745 = vtanh.pop %v1744
  %1747 = vrot.lane.b32.xlu0 %v1745, 16
  %v1748 = vpop.permute.xlu0 %1747
  %v1750 = vmul.f32 %v1732, %v1748
  %1752 = vrot.lane.b32.xlu0 %v1651, 96
  %v1753 = vpop.permute.xlu0 %1752
  %s1755 = scalar_lea.vmem %s3, 14
  %1756 = vst.msk [vmem:[%s1755] sm:$0x3] %vm285, %v1753
  %1758 = vrot.lane.b32.xlu0 %v1750, 96
  %v1759 = vpop.permute.xlu0 %1758
  %s1761 = scalar_lea.vmem %s52, 16
  %1762 = vst.msk [vmem:[%s1761] sm:$0x3] %vm285, %v1759
  %s1763 = scalar_lea.vmem %s0, 16
  %v1764 = vld [vmem:[%s1763] sm:$0x3]
  %v1765 = vsel %vm74, %v1753, 0
  %1767 = vmatprep.subr.mxu0 0.0
  %1768 = vmatpush1.msra.mxu0 %v64
  %1769 = vmatprep.subr.mxu0 0.0
  %1770 = vmatpush1.msra.mxu0 %v65
  %1771 = vmatprep.subr.mxu0 0.0
  %1772 = vmatpush1.msra.mxu0 0.0
  %1773 = vmatprep.subr.mxu0 0.0
  %1774 = vmatpush1.msra.mxu0 0.0
  %1775 = vmatprep.subr.mxu0 0.0
  %1776 = vmatpush1.msra.mxu0 0.0
  %1777 = vmatprep.subr.mxu0 0.0
  %1778 = vmatpush1.msra.mxu0 0.0
  %1779 = vmatprep.subr.mxu0 0.0
  %1780 = vmatpush1.msra.mxu0 0.0
  %1781 = vmatprep.subr.mxu0 0.0
  %1782 = vmatpush1.msra.mxu0 0.0
  %1783 = vmatprep.subr.mxu0 0.0
  %1784 = vmatpush1.msra.mxu0 0.0
  %1785 = vmatprep.subr.mxu0 0.0
  %1786 = vmatpush1.msra.mxu0 0.0
  %1787 = vmatprep.subr.mxu0 0.0
  %1788 = vmatpush1.msra.mxu0 0.0
  %1789 = vmatprep.subr.mxu0 0.0
  %1790 = vmatpush1.msra.mxu0 0.0
  %1791 = vmatprep.subr.mxu0 0.0
  %1792 = vmatpush1.msra.mxu0 0.0
  %1793 = vmatprep.subr.mxu0 0.0
  %1794 = vmatpush1.msra.mxu0 0.0
  %1795 = vmatprep.subr.mxu0 0.0
  %1796 = vmatpush1.msra.mxu0 0.0
  %1797 = vmatprep.subr.mxu0 0.0
  %1798 = vmatpush1.msra.mxu0 0.0
  %1799 = vmatprep.subr.mxu0 0.0
  %1800 = vmatpush1.msra.mxu0 0.0
  %1801 = vmatprep.subr.mxu0 0.0
  %1802 = vmatpush1.msra.mxu0 0.0
  %1803 = vmatprep.subr.mxu0 0.0
  %1804 = vmatpush1.msra.mxu0 0.0
  %1805 = vmatprep.subr.mxu0 0.0
  %1806 = vmatpush1.msra.mxu0 0.0
  %1807 = vmatprep.subr.mxu0 0.0
  %1808 = vmatpush1.msra.mxu0 0.0
  %1809 = vmatprep.subr.mxu0 0.0
  %1810 = vmatpush1.msra.mxu0 0.0
  %1811 = vmatprep.subr.mxu0 0.0
  %1812 = vmatpush1.msra.mxu0 0.0
  %1813 = vmatprep.subr.mxu0 0.0
  %1814 = vmatpush1.msra.mxu0 0.0
  %1815 = vmatprep.subr.mxu0 0.0
  %1816 = vmatpush1.msra.mxu0 0.0
  %1817 = vmatprep.subr.mxu0 0.0
  %1818 = vmatpush1.msra.mxu0 0.0
  %1819 = vmatprep.subr.mxu0 0.0
  %1820 = vmatpush1.msra.mxu0 0.0
  %1821 = vmatprep.subr.mxu0 0.0
  %1822 = vmatpush1.msra.mxu0 0.0
  %1823 = vmatprep.subr.mxu0 0.0
  %1824 = vmatpush1.msra.mxu0 0.0
  %1825 = vmatprep.subr.mxu0 0.0
  %1826 = vmatpush1.msra.mxu0 0.0
  %1827 = vmatprep.subr.mxu0 0.0
  %1828 = vmatpush1.msra.mxu0 0.0
  %1829 = vmatprep.subr.mxu0 0.0
  %1830 = vmatpush1.msra.mxu0 0.0
  %1831 = vmatprep.mubr.f32.mxu0 0.0
  %1832 = vmatmul.mubr.f32.gmra.mrb[0].mxu0 %v1765
  %v1833 = vpop.f32.mrb[0].mxu0
  %v1834 = vadd.f32 0.0, %v1833
  %v1835 = vpop.f32.mrb[0].mxu0
  %1836 = vdwg.mxu0
  %v1837 = vadd.f32 %v1764, %v1834
  %v1838 = vxor.u32 %v1837, 2147483648
  %v1839 = vmul.f32 %v1838, 1.442695
  %v1840 = vpow.pop %v1839
  %v1841 = vadd.f32 %v1840, 1.0
  %v1842 = vrcp.pop %v1841
  %v1843 = vmul.f32 1.0, %v1842
  %v1844 = vtanh.pop %v1837
  %v1845 = vmul.f32 %v1843, %v1645
  %1847 = vrot.lane.b32.xlu0 %v1844, 80
  %v1848 = vpop.permute.xlu0 %1847
  %v1850 = vmul.f32 %v1843, %v1848
  %1852 = vrot.lane.b32.xlu0 %v1850, 16
  %v1853 = vpop.permute.xlu0 %1852
  %v1855 = vadd.f32 %v1845, %v1853
  %v1856 = vtanh.pop %v1855
  %1858 = vrot.lane.b32.xlu0 %v1856, 16
  %v1859 = vpop.permute.xlu0 %1858
  %v1861 = vmul.f32 %v1843, %v1859
  %s1862 = scalar_lea.vmem %s44, 14
  %v1863 = vld [vmem:[%s1862] sm:$0x3]
  %v1864 = vsel %vm74, %v1759, 0
  %1866 = vmatprep.subr.mxu0 0.0
  %1867 = vmatpush1.msra.mxu0 %v67
  %1868 = vmatprep.subr.mxu0 0.0
  %1869 = vmatpush1.msra.mxu0 %v68
  %1870 = vmatprep.subr.mxu0 0.0
  %1871 = vmatpush1.msra.mxu0 0.0
  %1872 = vmatprep.subr.mxu0 0.0
  %1873 = vmatpush1.msra.mxu0 0.0
  %1874 = vmatprep.subr.mxu0 0.0
  %1875 = vmatpush1.msra.mxu0 0.0
  %1876 = vmatprep.subr.mxu0 0.0
  %1877 = vmatpush1.msra.mxu0 0.0
  %1878 = vmatprep.subr.mxu0 0.0
  %1879 = vmatpush1.msra.mxu0 0.0
  %1880 = vmatprep.subr.mxu0 0.0
  %1881 = vmatpush1.msra.mxu0 0.0
  %1882 = vmatprep.subr.mxu0 0.0
  %1883 = vmatpush1.msra.mxu0 0.0
  %1884 = vmatprep.subr.mxu0 0.0
  %1885 = vmatpush1.msra.mxu0 0.0
  %1886 = vmatprep.subr.mxu0 0.0
  %1887 = vmatpush1.msra.mxu0 0.0
  %1888 = vmatprep.subr.mxu0 0.0
  %1889 = vmatpush1.msra.mxu0 0.0
  %1890 = vmatprep.subr.mxu0 0.0
  %1891 = vmatpush1.msra.mxu0 0.0
  %1892 = vmatprep.subr.mxu0 0.0
  %1893 = vmatpush1.msra.mxu0 0.0
  %1894 = vmatprep.subr.mxu0 0.0
  %1895 = vmatpush1.msra.mxu0 0.0
  %1896 = vmatprep.subr.mxu0 0.0
  %1897 = vmatpush1.msra.mxu0 0.0
  %1898 = vmatprep.subr.mxu0 0.0
  %1899 = vmatpush1.msra.mxu0 0.0
  %1900 = vmatprep.subr.mxu0 0.0
  %1901 = vmatpush1.msra.mxu0 0.0
  %1902 = vmatprep.subr.mxu0 0.0
  %1903 = vmatpush1.msra.mxu0 0.0
  %1904 = vmatprep.subr.mxu0 0.0
  %1905 = vmatpush1.msra.mxu0 0.0
  %1906 = vmatprep.subr.mxu0 0.0
  %1907 = vmatpush1.msra.mxu0 0.0
  %1908 = vmatprep.subr.mxu0 0.0
  %1909 = vmatpush1.msra.mxu0 0.0
  %1910 = vmatprep.subr.mxu0 0.0
  %1911 = vmatpush1.msra.mxu0 0.0
  %1912 = vmatprep.subr.mxu0 0.0
  %1913 = vmatpush1.msra.mxu0 0.0
  %1914 = vmatprep.subr.mxu0 0.0
  %1915 = vmatpush1.msra.mxu0 0.0
  %1916 = vmatprep.subr.mxu0 0.0
  %1917 = vmatpush1.msra.mxu0 0.0
  %1918 = vmatprep.subr.mxu0 0.0
  %1919 = vmatpush1.msra.mxu0 0.0
  %1920 = vmatprep.subr.mxu0 0.0
  %1921 = vmatpush1.msra.mxu0 0.0
  %1922 = vmatprep.subr.mxu0 0.0
  %1923 = vmatpush1.msra.mxu0 0.0
  %1924 = vmatprep.subr.mxu0 0.0
  %1925 = vmatpush1.msra.mxu0 0.0
  %1926 = vmatprep.subr.mxu0 0.0
  %1927 = vmatpush1.msra.mxu0 0.0
  %1928 = vmatprep.subr.mxu0 0.0
  %1929 = vmatpush1.msra.mxu0 0.0
  %1930 = vmatprep.mubr.f32.mxu0 0.0
  %1931 = vmatmul.mubr.f32.gmra.mrb[0].mxu0 %v1864
  %v1932 = vpop.f32.mrb[0].mxu0
  %v1933 = vadd.f32 0.0, %v1932
  %v1934 = vpop.f32.mrb[0].mxu0
  %1935 = vdwg.mxu0
  %v1936 = vadd.f32 %v1863, %v1933
  %v1937 = vxor.u32 %v1936, 2147483648
  %v1938 = vmul.f32 %v1937, 1.442695
  %v1939 = vpow.pop %v1938
  %v1940 = vadd.f32 %v1939, 1.0
  %v1941 = vrcp.pop %v1940
  %v1942 = vmul.f32 1.0, %v1941
  %v1943 = vtanh.pop %v1936
  %v1944 = vmul.f32 %v1942, %v1744
  %1946 = vrot.lane.b32.xlu0 %v1943, 80
  %v1947 = vpop.permute.xlu0 %1946
  %v1949 = vmul.f32 %v1942, %v1947
  %1951 = vrot.lane.b32.xlu0 %v1949, 16
  %v1952 = vpop.permute.xlu0 %1951
  %v1954 = vadd.f32 %v1944, %v1952
  %v1955 = vtanh.pop %v1954
  %1957 = vrot.lane.b32.xlu0 %v1955, 16
  %v1958 = vpop.permute.xlu0 %1957
  %v1960 = vmul.f32 %v1942, %v1958
  %1962 = vrot.lane.b32.xlu0 %v1861, 96
  %v1963 = vpop.permute.xlu0 %1962
  %s1965 = scalar_lea.vmem %s3, 16
  %1966 = vst.msk [vmem:[%s1965] sm:$0x3] %vm285, %v1963
  %1968 = vrot.lane.b32.xlu0 %v1960, 96
  %v1969 = vpop.permute.xlu0 %1968
  %s1971 = scalar_lea.vmem %s52, 14
  %1972 = vst.msk [vmem:[%s1971] sm:$0x3] %vm285, %v1969
  %s1973 = scalar_lea.vmem %s0, 18
  %v1974 = vld [vmem:[%s1973] sm:$0x3]
  %v1975 = vsel %vm74, %v1963, 0
  %1977 = vmatprep.subr.mxu0 0.0
  %1978 = vmatpush1.msra.mxu0 %v64
  %1979 = vmatprep.subr.mxu0 0.0
  %1980 = vmatpush1.msra.mxu0 %v65
  %1981 = vmatprep.subr.mxu0 0.0
  %1982 = vmatpush1.msra.mxu0 0.0
  %1983 = vmatprep.subr.mxu0 0.0
  %1984 = vmatpush1.msra.mxu0 0.0
  %1985 = vmatprep.subr.mxu0 0.0
  %1986 = vmatpush1.msra.mxu0 0.0
  %1987 = vmatprep.subr.mxu0 0.0
  %1988 = vmatpush1.msra.mxu0 0.0
  %1989 = vmatprep.subr.mxu0 0.0
  %1990 = vmatpush1.msra.mxu0 0.0
  %1991 = vmatprep.subr.mxu0 0.0
  %1992 = vmatpush1.msra.mxu0 0.0
  %1993 = vmatprep.subr.mxu0 0.0
  %1994 = vmatpush1.msra.mxu0 0.0
  %1995 = vmatprep.subr.mxu0 0.0
  %1996 = vmatpush1.msra.mxu0 0.0
  %1997 = vmatprep.subr.mxu0 0.0
  %1998 = vmatpush1.msra.mxu0 0.0
  %1999 = vmatprep.subr.mxu0 0.0
  %2000 = vmatpush1.msra.mxu0 0.0
  %2001 = vmatprep.subr.mxu0 0.0
  %2002 = vmatpush1.msra.mxu0 0.0
  %2003 = vmatprep.subr.mxu0 0.0
  %2004 = vmatpush1.msra.mxu0 0.0
  %2005 = vmatprep.subr.mxu0 0.0
  %2006 = vmatpush1.msra.mxu0 0.0
  %2007 = vmatprep.subr.mxu0 0.0
  %2008 = vmatpush1.msra.mxu0 0.0
  %2009 = vmatprep.subr.mxu0 0.0
  %2010 = vmatpush1.msra.mxu0 0.0
  %2011 = vmatprep.subr.mxu0 0.0
  %2012 = vmatpush1.msra.mxu0 0.0
  %2013 = vmatprep.subr.mxu0 0.0
  %2014 = vmatpush1.msra.mxu0 0.0
  %2015 = vmatprep.subr.mxu0 0.0
  %2016 = vmatpush1.msra.mxu0 0.0
  %2017 = vmatprep.subr.mxu0 0.0
  %2018 = vmatpush1.msra.mxu0 0.0
  %2019 = vmatprep.subr.mxu0 0.0
  %2020 = vmatpush1.msra.mxu0 0.0
  %2021 = vmatprep.subr.mxu0 0.0
  %2022 = vmatpush1.msra.mxu0 0.0
  %2023 = vmatprep.subr.mxu0 0.0
  %2024 = vmatpush1.msra.mxu0 0.0
  %2025 = vmatprep.subr.mxu0 0.0
  %2026 = vmatpush1.msra.mxu0 0.0
  %2027 = vmatprep.subr.mxu0 0.0
  %2028 = vmatpush1.msra.mxu0 0.0
  %2029 = vmatprep.subr.mxu0 0.0
  %2030 = vmatpush1.msra.mxu0 0.0
  %2031 = vmatprep.subr.mxu0 0.0
  %2032 = vmatpush1.msra.mxu0 0.0
  %2033 = vmatprep.subr.mxu0 0.0
  %2034 = vmatpush1.msra.mxu0 0.0
  %2035 = vmatprep.subr.mxu0 0.0
  %2036 = vmatpush1.msra.mxu0 0.0
  %2037 = vmatprep.subr.mxu0 0.0
  %2038 = vmatpush1.msra.mxu0 0.0
  %2039 = vmatprep.subr.mxu0 0.0
  %2040 = vmatpush1.msra.mxu0 0.0
  %2041 = vmatprep.mubr.f32.mxu0 0.0
  %2042 = vmatmul.mubr.f32.gmra.mrb[0].mxu0 %v1975
  %v2043 = vpop.f32.mrb[0].mxu0
  %v2044 = vadd.f32 0.0, %v2043
  %v2045 = vpop.f32.mrb[0].mxu0
  %2046 = vdwg.mxu0
  %v2047 = vadd.f32 %v1974, %v2044
  %v2048 = vxor.u32 %v2047, 2147483648
  %v2049 = vmul.f32 %v2048, 1.442695
  %v2050 = vpow.pop %v2049
  %v2051 = vadd.f32 %v2050, 1.0
  %v2052 = vrcp.pop %v2051
  %v2053 = vmul.f32 1.0, %v2052
  %v2054 = vtanh.pop %v2047
  %v2055 = vmul.f32 %v2053, %v1855
  %2057 = vrot.lane.b32.xlu0 %v2054, 80
  %v2058 = vpop.permute.xlu0 %2057
  %v2060 = vmul.f32 %v2053, %v2058
  %2062 = vrot.lane.b32.xlu0 %v2060, 16
  %v2063 = vpop.permute.xlu0 %2062
  %v2065 = vadd.f32 %v2055, %v2063
  %v2066 = vtanh.pop %v2065
  %2068 = vrot.lane.b32.xlu0 %v2066, 16
  %v2069 = vpop.permute.xlu0 %2068
  %v2071 = vmul.f32 %v2053, %v2069
  %s2072 = scalar_lea.vmem %s44, 12
  %v2073 = vld [vmem:[%s2072] sm:$0x3]
  %v2074 = vsel %vm74, %v1969, 0
  %2076 = vmatprep.subr.mxu0 0.0
  %2077 = vmatpush1.msra.mxu0 %v67
  %2078 = vmatprep.subr.mxu0 0.0
  %2079 = vmatpush1.msra.mxu0 %v68
  %2080 = vmatprep.subr.mxu0 0.0
  %2081 = vmatpush1.msra.mxu0 0.0
  %2082 = vmatprep.subr.mxu0 0.0
  %2083 = vmatpush1.msra.mxu0 0.0
  %2084 = vmatprep.subr.mxu0 0.0
  %2085 = vmatpush1.msra.mxu0 0.0
  %2086 = vmatprep.subr.mxu0 0.0
  %2087 = vmatpush1.msra.mxu0 0.0
  %2088 = vmatprep.subr.mxu0 0.0
  %2089 = vmatpush1.msra.mxu0 0.0
  %2090 = vmatprep.subr.mxu0 0.0
  %2091 = vmatpush1.msra.mxu0 0.0
  %2092 = vmatprep.subr.mxu0 0.0
  %2093 = vmatpush1.msra.mxu0 0.0
  %2094 = vmatprep.subr.mxu0 0.0
  %2095 = vmatpush1.msra.mxu0 0.0
  %2096 = vmatprep.subr.mxu0 0.0
  %2097 = vmatpush1.msra.mxu0 0.0
  %2098 = vmatprep.subr.mxu0 0.0
  %2099 = vmatpush1.msra.mxu0 0.0
  %2100 = vmatprep.subr.mxu0 0.0
  %2101 = vmatpush1.msra.mxu0 0.0
  %2102 = vmatprep.subr.mxu0 0.0
  %2103 = vmatpush1.msra.mxu0 0.0
  %2104 = vmatprep.subr.mxu0 0.0
  %2105 = vmatpush1.msra.mxu0 0.0
  %2106 = vmatprep.subr.mxu0 0.0
  %2107 = vmatpush1.msra.mxu0 0.0
  %2108 = vmatprep.subr.mxu0 0.0
  %2109 = vmatpush1.msra.mxu0 0.0
  %2110 = vmatprep.subr.mxu0 0.0
  %2111 = vmatpush1.msra.mxu0 0.0
  %2112 = vmatprep.subr.mxu0 0.0
  %2113 = vmatpush1.msra.mxu0 0.0
  %2114 = vmatprep.subr.mxu0 0.0
  %2115 = vmatpush1.msra.mxu0 0.0
  %2116 = vmatprep.subr.mxu0 0.0
  %2117 = vmatpush1.msra.mxu0 0.0
  %2118 = vmatprep.subr.mxu0 0.0
  %2119 = vmatpush1.msra.mxu0 0.0
  %2120 = vmatprep.subr.mxu0 0.0
  %2121 = vmatpush1.msra.mxu0 0.0
  %2122 = vmatprep.subr.mxu0 0.0
  %2123 = vmatpush1.msra.mxu0 0.0
  %2124 = vmatprep.subr.mxu0 0.0
  %2125 = vmatpush1.msra.mxu0 0.0
  %2126 = vmatprep.subr.mxu0 0.0
  %2127 = vmatpush1.msra.mxu0 0.0
  %2128 = vmatprep.subr.mxu0 0.0
  %2129 = vmatpush1.msra.mxu0 0.0
  %2130 = vmatprep.subr.mxu0 0.0
  %2131 = vmatpush1.msra.mxu0 0.0
  %2132 = vmatprep.subr.mxu0 0.0
  %2133 = vmatpush1.msra.mxu0 0.0
  %2134 = vmatprep.subr.mxu0 0.0
  %2135 = vmatpush1.msra.mxu0 0.0
  %2136 = vmatprep.subr.mxu0 0.0
  %2137 = vmatpush1.msra.mxu0 0.0
  %2138 = vmatprep.subr.mxu0 0.0
  %2139 = vmatpush1.msra.mxu0 0.0
  %2140 = vmatprep.mubr.f32.mxu0 0.0
  %2141 = vmatmul.mubr.f32.gmra.mrb[0].mxu0 %v2074
  %v2142 = vpop.f32.mrb[0].mxu0
  %v2143 = vadd.f32 0.0, %v2142
  %v2144 = vpop.f32.mrb[0].mxu0
  %2145 = vdwg.mxu0
  %v2146 = vadd.f32 %v2073, %v2143
  %v2147 = vxor.u32 %v2146, 2147483648
  %v2148 = vmul.f32 %v2147, 1.442695
  %v2149 = vpow.pop %v2148
  %v2150 = vadd.f32 %v2149, 1.0
  %v2151 = vrcp.pop %v2150
  %v2152 = vmul.f32 1.0, %v2151
  %v2153 = vtanh.pop %v2146
  %v2154 = vmul.f32 %v2152, %v1954
  %2156 = vrot.lane.b32.xlu0 %v2153, 80
  %v2157 = vpop.permute.xlu0 %2156
  %v2159 = vmul.f32 %v2152, %v2157
  %2161 = vrot.lane.b32.xlu0 %v2159, 16
  %v2162 = vpop.permute.xlu0 %2161
  %v2164 = vadd.f32 %v2154, %v2162
  %v2165 = vtanh.pop %v2164
  %2167 = vrot.lane.b32.xlu0 %v2165, 16
  %v2168 = vpop.permute.xlu0 %2167
  %v2170 = vmul.f32 %v2152, %v2168
  %2172 = vrot.lane.b32.xlu0 %v2071, 96
  %v2173 = vpop.permute.xlu0 %2172
  %s2175 = scalar_lea.vmem %s3, 18
  %2176 = vst.msk [vmem:[%s2175] sm:$0x3] %vm285, %v2173
  %2178 = vrot.lane.b32.xlu0 %v2170, 96
  %v2179 = vpop.permute.xlu0 %2178
  %s2181 = scalar_lea.vmem %s52, 12
  %2182 = vst.msk [vmem:[%s2181] sm:$0x3] %vm285, %v2179
  %s2183 = scalar_lea.vmem %s0, 20
  %v2184 = vld [vmem:[%s2183] sm:$0x3]
  %v2185 = vsel %vm74, %v2173, 0
  %2187 = vmatprep.subr.mxu0 0.0
  %2188 = vmatpush1.msra.mxu0 %v64
  %2189 = vmatprep.subr.mxu0 0.0
  %2190 = vmatpush1.msra.mxu0 %v65
  %2191 = vmatprep.subr.mxu0 0.0
  %2192 = vmatpush1.msra.mxu0 0.0
  %2193 = vmatprep.subr.mxu0 0.0
  %2194 = vmatpush1.msra.mxu0 0.0
  %2195 = vmatprep.subr.mxu0 0.0
  %2196 = vmatpush1.msra.mxu0 0.0
  %2197 = vmatprep.subr.mxu0 0.0
  %2198 = vmatpush1.msra.mxu0 0.0
  %2199 = vmatprep.subr.mxu0 0.0
  %2200 = vmatpush1.msra.mxu0 0.0
  %2201 = vmatprep.subr.mxu0 0.0
  %2202 = vmatpush1.msra.mxu0 0.0
  %2203 = vmatprep.subr.mxu0 0.0
  %2204 = vmatpush1.msra.mxu0 0.0
  %2205 = vmatprep.subr.mxu0 0.0
  %2206 = vmatpush1.msra.mxu0 0.0
  %2207 = vmatprep.subr.mxu0 0.0
  %2208 = vmatpush1.msra.mxu0 0.0
  %2209 = vmatprep.subr.mxu0 0.0
  %2210 = vmatpush1.msra.mxu0 0.0
  %2211 = vmatprep.subr.mxu0 0.0
  %2212 = vmatpush1.msra.mxu0 0.0
  %2213 = vmatprep.subr.mxu0 0.0
  %2214 = vmatpush1.msra.mxu0 0.0
  %2215 = vmatprep.subr.mxu0 0.0
  %2216 = vmatpush1.msra.mxu0 0.0
  %2217 = vmatprep.subr.mxu0 0.0
  %2218 = vmatpush1.msra.mxu0 0.0
  %2219 = vmatprep.subr.mxu0 0.0
  %2220 = vmatpush1.msra.mxu0 0.0
  %2221 = vmatprep.subr.mxu0 0.0
  %2222 = vmatpush1.msra.mxu0 0.0
  %2223 = vmatprep.subr.mxu0 0.0
  %2224 = vmatpush1.msra.mxu0 0.0
  %2225 = vmatprep.subr.mxu0 0.0
  %2226 = vmatpush1.msra.mxu0 0.0
  %2227 = vmatprep.subr.mxu0 0.0
  %2228 = vmatpush1.msra.mxu0 0.0
  %2229 = vmatprep.subr.mxu0 0.0
  %2230 = vmatpush1.msra.mxu0 0.0
  %2231 = vmatprep.subr.mxu0 0.0
  %2232 = vmatpush1.msra.mxu0 0.0
  %2233 = vmatprep.subr.mxu0 0.0
  %2234 = vmatpush1.msra.mxu0 0.0
  %2235 = vmatprep.subr.mxu0 0.0
  %2236 = vmatpush1.msra.mxu0 0.0
  %2237 = vmatprep.subr.mxu0 0.0
  %2238 = vmatpush1.msra.mxu0 0.0
  %2239 = vmatprep.subr.mxu0 0.0
  %2240 = vmatpush1.msra.mxu0 0.0
  %2241 = vmatprep.subr.mxu0 0.0
  %2242 = vmatpush1.msra.mxu0 0.0
  %2243 = vmatprep.subr.mxu0 0.0
  %2244 = vmatpush1.msra.mxu0 0.0
  %2245 = vmatprep.subr.mxu0 0.0
  %2246 = vmatpush1.msra.mxu0 0.0
  %2247 = vmatprep.subr.mxu0 0.0
  %2248 = vmatpush1.msra.mxu0 0.0
  %2249 = vmatprep.subr.mxu0 0.0
  %2250 = vmatpush1.msra.mxu0 0.0
  %2251 = vmatprep.mubr.f32.mxu0 0.0
  %2252 = vmatmul.mubr.f32.gmra.mrb[0].mxu0 %v2185
  %v2253 = vpop.f32.mrb[0].mxu0
  %v2254 = vadd.f32 0.0, %v2253
  %v2255 = vpop.f32.mrb[0].mxu0
  %2256 = vdwg.mxu0
  %v2257 = vadd.f32 %v2184, %v2254
  %v2258 = vxor.u32 %v2257, 2147483648
  %v2259 = vmul.f32 %v2258, 1.442695
  %v2260 = vpow.pop %v2259
  %v2261 = vadd.f32 %v2260, 1.0
  %v2262 = vrcp.pop %v2261
  %v2263 = vmul.f32 1.0, %v2262
  %v2264 = vtanh.pop %v2257
  %v2265 = vmul.f32 %v2263, %v2065
  %2267 = vrot.lane.b32.xlu0 %v2264, 80
  %v2268 = vpop.permute.xlu0 %2267
  %v2270 = vmul.f32 %v2263, %v2268
  %2272 = vrot.lane.b32.xlu0 %v2270, 16
  %v2273 = vpop.permute.xlu0 %2272
  %v2275 = vadd.f32 %v2265, %v2273
  %v2276 = vtanh.pop %v2275
  %2278 = vrot.lane.b32.xlu0 %v2276, 16
  %v2279 = vpop.permute.xlu0 %2278
  %v2281 = vmul.f32 %v2263, %v2279
  %s2282 = scalar_lea.vmem %s44, 10
  %v2283 = vld [vmem:[%s2282] sm:$0x3]
  %v2284 = vsel %vm74, %v2179, 0
  %2286 = vmatprep.subr.mxu0 0.0
  %2287 = vmatpush1.msra.mxu0 %v67
  %2288 = vmatprep.subr.mxu0 0.0
  %2289 = vmatpush1.msra.mxu0 %v68
  %2290 = vmatprep.subr.mxu0 0.0
  %2291 = vmatpush1.msra.mxu0 0.0
  %2292 = vmatprep.subr.mxu0 0.0
  %2293 = vmatpush1.msra.mxu0 0.0
  %2294 = vmatprep.subr.mxu0 0.0
  %2295 = vmatpush1.msra.mxu0 0.0
  %2296 = vmatprep.subr.mxu0 0.0
  %2297 = vmatpush1.msra.mxu0 0.0
  %2298 = vmatprep.subr.mxu0 0.0
  %2299 = vmatpush1.msra.mxu0 0.0
  %2300 = vmatprep.subr.mxu0 0.0
  %2301 = vmatpush1.msra.mxu0 0.0
  %2302 = vmatprep.subr.mxu0 0.0
  %2303 = vmatpush1.msra.mxu0 0.0
  %2304 = vmatprep.subr.mxu0 0.0
  %2305 = vmatpush1.msra.mxu0 0.0
  %2306 = vmatprep.subr.mxu0 0.0
  %2307 = vmatpush1.msra.mxu0 0.0
  %2308 = vmatprep.subr.mxu0 0.0
  %2309 = vmatpush1.msra.mxu0 0.0
  %2310 = vmatprep.subr.mxu0 0.0
  %2311 = vmatpush1.msra.mxu0 0.0
  %2312 = vmatprep.subr.mxu0 0.0
  %2313 = vmatpush1.msra.mxu0 0.0
  %2314 = vmatprep.subr.mxu0 0.0
  %2315 = vmatpush1.msra.mxu0 0.0
  %2316 = vmatprep.subr.mxu0 0.0
  %2317 = vmatpush1.msra.mxu0 0.0
  %2318 = vmatprep.subr.mxu0 0.0
  %2319 = vmatpush1.msra.mxu0 0.0
  %2320 = vmatprep.subr.mxu0 0.0
  %2321 = vmatpush1.msra.mxu0 0.0
  %2322 = vmatprep.subr.mxu0 0.0
  %2323 = vmatpush1.msra.mxu0 0.0
  %2324 = vmatprep.subr.mxu0 0.0
  %2325 = vmatpush1.msra.mxu0 0.0
  %2326 = vmatprep.subr.mxu0 0.0
  %2327 = vmatpush1.msra.mxu0 0.0
  %2328 = vmatprep.subr.mxu0 0.0
  %2329 = vmatpush1.msra.mxu0 0.0
  %2330 = vmatprep.subr.mxu0 0.0
  %2331 = vmatpush1.msra.mxu0 0.0
  %2332 = vmatprep.subr.mxu0 0.0
  %2333 = vmatpush1.msra.mxu0 0.0
  %2334 = vmatprep.subr.mxu0 0.0
  %2335 = vmatpush1.msra.mxu0 0.0
  %2336 = vmatprep.subr.mxu0 0.0
  %2337 = vmatpush1.msra.mxu0 0.0
  %2338 = vmatprep.subr.mxu0 0.0
  %2339 = vmatpush1.msra.mxu0 0.0
  %2340 = vmatprep.subr.mxu0 0.0
  %2341 = vmatpush1.msra.mxu0 0.0
  %2342 = vmatprep.subr.mxu0 0.0
  %2343 = vmatpush1.msra.mxu0 0.0
  %2344 = vmatprep.subr.mxu0 0.0
  %2345 = vmatpush1.msra.mxu0 0.0
  %2346 = vmatprep.subr.mxu0 0.0
  %2347 = vmatpush1.msra.mxu0 0.0
  %2348 = vmatprep.subr.mxu0 0.0
  %2349 = vmatpush1.msra.mxu0 0.0
  %2350 = vmatprep.mubr.f32.mxu0 0.0
  %2351 = vmatmul.mubr.f32.gmra.mrb[0].mxu0 %v2284
  %v2352 = vpop.f32.mrb[0].mxu0
  %v2353 = vadd.f32 0.0, %v2352
  %v2354 = vpop.f32.mrb[0].mxu0
  %2355 = vdwg.mxu0
  %v2356 = vadd.f32 %v2283, %v2353
  %v2357 = vxor.u32 %v2356, 2147483648
  %v2358 = vmul.f32 %v2357, 1.442695
  %v2359 = vpow.pop %v2358
  %v2360 = vadd.f32 %v2359, 1.0
  %v2361 = vrcp.pop %v2360
  %v2362 = vmul.f32 1.0, %v2361
  %v2363 = vtanh.pop %v2356
  %v2364 = vmul.f32 %v2362, %v2164
  %2366 = vrot.lane.b32.xlu0 %v2363, 80
  %v2367 = vpop.permute.xlu0 %2366
  %v2369 = vmul.f32 %v2362, %v2367
  %2371 = vrot.lane.b32.xlu0 %v2369, 16
  %v2372 = vpop.permute.xlu0 %2371
  %v2374 = vadd.f32 %v2364, %v2372
  %v2375 = vtanh.pop %v2374
  %2377 = vrot.lane.b32.xlu0 %v2375, 16
  %v2378 = vpop.permute.xlu0 %2377
  %v2380 = vmul.f32 %v2362, %v2378
  %2382 = vrot.lane.b32.xlu0 %v2281, 96
  %v2383 = vpop.permute.xlu0 %2382
  %s2385 = scalar_lea.vmem %s3, 20
  %2386 = vst.msk [vmem:[%s2385] sm:$0x3] %vm285, %v2383
  %2388 = vrot.lane.b32.xlu0 %v2380, 96
  %v2389 = vpop.permute.xlu0 %2388
  %s2391 = scalar_lea.vmem %s52, 10
  %2392 = vst.msk [vmem:[%s2391] sm:$0x3] %vm285, %v2389
  %s2393 = scalar_lea.vmem %s0, 22
  %v2394 = vld [vmem:[%s2393] sm:$0x3]
  %v2395 = vsel %vm74, %v2383, 0
  %2397 = vmatprep.subr.mxu0 0.0
  %2398 = vmatpush1.msra.mxu0 %v64
  %2399 = vmatprep.subr.mxu0 0.0
  %2400 = vmatpush1.msra.mxu0 %v65
  %2401 = vmatprep.subr.mxu0 0.0
  %2402 = vmatpush1.msra.mxu0 0.0
  %2403 = vmatprep.subr.mxu0 0.0
  %2404 = vmatpush1.msra.mxu0 0.0
  %2405 = vmatprep.subr.mxu0 0.0
  %2406 = vmatpush1.msra.mxu0 0.0
  %2407 = vmatprep.subr.mxu0 0.0
  %2408 = vmatpush1.msra.mxu0 0.0
  %2409 = vmatprep.subr.mxu0 0.0
  %2410 = vmatpush1.msra.mxu0 0.0
  %2411 = vmatprep.subr.mxu0 0.0
  %2412 = vmatpush1.msra.mxu0 0.0
  %2413 = vmatprep.subr.mxu0 0.0
  %2414 = vmatpush1.msra.mxu0 0.0
  %2415 = vmatprep.subr.mxu0 0.0
  %2416 = vmatpush1.msra.mxu0 0.0
  %2417 = vmatprep.subr.mxu0 0.0
  %2418 = vmatpush1.msra.mxu0 0.0
  %2419 = vmatprep.subr.mxu0 0.0
  %2420 = vmatpush1.msra.mxu0 0.0
  %2421 = vmatprep.subr.mxu0 0.0
  %2422 = vmatpush1.msra.mxu0 0.0
  %2423 = vmatprep.subr.mxu0 0.0
  %2424 = vmatpush1.msra.mxu0 0.0
  %2425 = vmatprep.subr.mxu0 0.0
  %2426 = vmatpush1.msra.mxu0 0.0
  %2427 = vmatprep.subr.mxu0 0.0
  %2428 = vmatpush1.msra.mxu0 0.0
  %2429 = vmatprep.subr.mxu0 0.0
  %2430 = vmatpush1.msra.mxu0 0.0
  %2431 = vmatprep.subr.mxu0 0.0
  %2432 = vmatpush1.msra.mxu0 0.0
  %2433 = vmatprep.subr.mxu0 0.0
  %2434 = vmatpush1.msra.mxu0 0.0
  %2435 = vmatprep.subr.mxu0 0.0
  %2436 = vmatpush1.msra.mxu0 0.0
  %2437 = vmatprep.subr.mxu0 0.0
  %2438 = vmatpush1.msra.mxu0 0.0
  %2439 = vmatprep.subr.mxu0 0.0
  %2440 = vmatpush1.msra.mxu0 0.0
  %2441 = vmatprep.subr.mxu0 0.0
  %2442 = vmatpush1.msra.mxu0 0.0
  %2443 = vmatprep.subr.mxu0 0.0
  %2444 = vmatpush1.msra.mxu0 0.0
  %2445 = vmatprep.subr.mxu0 0.0
  %2446 = vmatpush1.msra.mxu0 0.0
  %2447 = vmatprep.subr.mxu0 0.0
  %2448 = vmatpush1.msra.mxu0 0.0
  %2449 = vmatprep.subr.mxu0 0.0
  %2450 = vmatpush1.msra.mxu0 0.0
  %2451 = vmatprep.subr.mxu0 0.0
  %2452 = vmatpush1.msra.mxu0 0.0
  %2453 = vmatprep.subr.mxu0 0.0
  %2454 = vmatpush1.msra.mxu0 0.0
  %2455 = vmatprep.subr.mxu0 0.0
  %2456 = vmatpush1.msra.mxu0 0.0
  %2457 = vmatprep.subr.mxu0 0.0
  %2458 = vmatpush1.msra.mxu0 0.0
  %2459 = vmatprep.subr.mxu0 0.0
  %2460 = vmatpush1.msra.mxu0 0.0
  %2461 = vmatprep.mubr.f32.mxu0 0.0
  %2462 = vmatmul.mubr.f32.gmra.mrb[0].mxu0 %v2395
  %v2463 = vpop.f32.mrb[0].mxu0
  %v2464 = vadd.f32 0.0, %v2463
  %v2465 = vpop.f32.mrb[0].mxu0
  %2466 = vdwg.mxu0
  %v2467 = vadd.f32 %v2394, %v2464
  %v2468 = vxor.u32 %v2467, 2147483648
  %v2469 = vmul.f32 %v2468, 1.442695
  %v2470 = vpow.pop %v2469
  %v2471 = vadd.f32 %v2470, 1.0
  %v2472 = vrcp.pop %v2471
  %v2473 = vmul.f32 1.0, %v2472
  %v2474 = vtanh.pop %v2467
  %v2475 = vmul.f32 %v2473, %v2275
  %2477 = vrot.lane.b32.xlu0 %v2474, 80
  %v2478 = vpop.permute.xlu0 %2477
  %v2480 = vmul.f32 %v2473, %v2478
  %2482 = vrot.lane.b32.xlu0 %v2480, 16
  %v2483 = vpop.permute.xlu0 %2482
  %v2485 = vadd.f32 %v2475, %v2483
  %v2486 = vtanh.pop %v2485
  %2488 = vrot.lane.b32.xlu0 %v2486, 16
  %v2489 = vpop.permute.xlu0 %2488
  %v2491 = vmul.f32 %v2473, %v2489
  %s2492 = scalar_lea.vmem %s44, 8
  %v2493 = vld [vmem:[%s2492] sm:$0x3]
  %v2494 = vsel %vm74, %v2389, 0
  %2496 = vmatprep.subr.mxu0 0.0
  %2497 = vmatpush1.msra.mxu0 %v67
  %2498 = vmatprep.subr.mxu0 0.0
  %2499 = vmatpush1.msra.mxu0 %v68
  %2500 = vmatprep.subr.mxu0 0.0
  %2501 = vmatpush1.msra.mxu0 0.0
  %2502 = vmatprep.subr.mxu0 0.0
  %2503 = vmatpush1.msra.mxu0 0.0
  %2504 = vmatprep.subr.mxu0 0.0
  %2505 = vmatpush1.msra.mxu0 0.0
  %2506 = vmatprep.subr.mxu0 0.0
  %2507 = vmatpush1.msra.mxu0 0.0
  %2508 = vmatprep.subr.mxu0 0.0
  %2509 = vmatpush1.msra.mxu0 0.0
  %2510 = vmatprep.subr.mxu0 0.0
  %2511 = vmatpush1.msra.mxu0 0.0
  %2512 = vmatprep.subr.mxu0 0.0
  %2513 = vmatpush1.msra.mxu0 0.0
  %2514 = vmatprep.subr.mxu0 0.0
  %2515 = vmatpush1.msra.mxu0 0.0
  %2516 = vmatprep.subr.mxu0 0.0
  %2517 = vmatpush1.msra.mxu0 0.0
  %2518 = vmatprep.subr.mxu0 0.0
  %2519 = vmatpush1.msra.mxu0 0.0
  %2520 = vmatprep.subr.mxu0 0.0
  %2521 = vmatpush1.msra.mxu0 0.0
  %2522 = vmatprep.subr.mxu0 0.0
  %2523 = vmatpush1.msra.mxu0 0.0
  %2524 = vmatprep.subr.mxu0 0.0
  %2525 = vmatpush1.msra.mxu0 0.0
  %2526 = vmatprep.subr.mxu0 0.0
  %2527 = vmatpush1.msra.mxu0 0.0
  %2528 = vmatprep.subr.mxu0 0.0
  %2529 = vmatpush1.msra.mxu0 0.0
  %2530 = vmatprep.subr.mxu0 0.0
  %2531 = vmatpush1.msra.mxu0 0.0
  %2532 = vmatprep.subr.mxu0 0.0
  %2533 = vmatpush1.msra.mxu0 0.0
  %2534 = vmatprep.subr.mxu0 0.0
  %2535 = vmatpush1.msra.mxu0 0.0
  %2536 = vmatprep.subr.mxu0 0.0
  %2537 = vmatpush1.msra.mxu0 0.0
  %2538 = vmatprep.subr.mxu0 0.0
  %2539 = vmatpush1.msra.mxu0 0.0
  %2540 = vmatprep.subr.mxu0 0.0
  %2541 = vmatpush1.msra.mxu0 0.0
  %2542 = vmatprep.subr.mxu0 0.0
  %2543 = vmatpush1.msra.mxu0 0.0
  %2544 = vmatprep.subr.mxu0 0.0
  %2545 = vmatpush1.msra.mxu0 0.0
  %2546 = vmatprep.subr.mxu0 0.0
  %2547 = vmatpush1.msra.mxu0 0.0
  %2548 = vmatprep.subr.mxu0 0.0
  %2549 = vmatpush1.msra.mxu0 0.0
  %2550 = vmatprep.subr.mxu0 0.0
  %2551 = vmatpush1.msra.mxu0 0.0
  %2552 = vmatprep.subr.mxu0 0.0
  %2553 = vmatpush1.msra.mxu0 0.0
  %2554 = vmatprep.subr.mxu0 0.0
  %2555 = vmatpush1.msra.mxu0 0.0
  %2556 = vmatprep.subr.mxu0 0.0
  %2557 = vmatpush1.msra.mxu0 0.0
  %2558 = vmatprep.subr.mxu0 0.0
  %2559 = vmatpush1.msra.mxu0 0.0
  %2560 = vmatprep.mubr.f32.mxu0 0.0
  %2561 = vmatmul.mubr.f32.gmra.mrb[0].mxu0 %v2494
  %v2562 = vpop.f32.mrb[0].mxu0
  %v2563 = vadd.f32 0.0, %v2562
  %v2564 = vpop.f32.mrb[0].mxu0
  %2565 = vdwg.mxu0
  %v2566 = vadd.f32 %v2493, %v2563
  %v2567 = vxor.u32 %v2566, 2147483648
  %v2568 = vmul.f32 %v2567, 1.442695
  %v2569 = vpow.pop %v2568
  %v2570 = vadd.f32 %v2569, 1.0
  %v2571 = vrcp.pop %v2570
  %v2572 = vmul.f32 1.0, %v2571
  %v2573 = vtanh.pop %v2566
  %v2574 = vmul.f32 %v2572, %v2374
  %2576 = vrot.lane.b32.xlu0 %v2573, 80
  %v2577 = vpop.permute.xlu0 %2576
  %v2579 = vmul.f32 %v2572, %v2577
  %2581 = vrot.lane.b32.xlu0 %v2579, 16
  %v2582 = vpop.permute.xlu0 %2581
  %v2584 = vadd.f32 %v2574, %v2582
  %v2585 = vtanh.pop %v2584
  %2587 = vrot.lane.b32.xlu0 %v2585, 16
  %v2588 = vpop.permute.xlu0 %2587
  %v2590 = vmul.f32 %v2572, %v2588
  %2592 = vrot.lane.b32.xlu0 %v2491, 96
  %v2593 = vpop.permute.xlu0 %2592
  %s2595 = scalar_lea.vmem %s3, 22
  %2596 = vst.msk [vmem:[%s2595] sm:$0x3] %vm285, %v2593
  %2598 = vrot.lane.b32.xlu0 %v2590, 96
  %v2599 = vpop.permute.xlu0 %2598
  %s2601 = scalar_lea.vmem %s52, 8
  %2602 = vst.msk [vmem:[%s2601] sm:$0x3] %vm285, %v2599
  %s2603 = scalar_lea.vmem %s0, 24
  %v2604 = vld [vmem:[%s2603] sm:$0x3]
  %v2605 = vsel %vm74, %v2593, 0
  %2607 = vmatprep.subr.mxu0 0.0
  %2608 = vmatpush1.msra.mxu0 %v64
  %2609 = vmatprep.subr.mxu0 0.0
  %2610 = vmatpush1.msra.mxu0 %v65
  %2611 = vmatprep.subr.mxu0 0.0
  %2612 = vmatpush1.msra.mxu0 0.0
  %2613 = vmatprep.subr.mxu0 0.0
  %2614 = vmatpush1.msra.mxu0 0.0
  %2615 = vmatprep.subr.mxu0 0.0
  %2616 = vmatpush1.msra.mxu0 0.0
  %2617 = vmatprep.subr.mxu0 0.0
  %2618 = vmatpush1.msra.mxu0 0.0
  %2619 = vmatprep.subr.mxu0 0.0
  %2620 = vmatpush1.msra.mxu0 0.0
  %2621 = vmatprep.subr.mxu0 0.0
  %2622 = vmatpush1.msra.mxu0 0.0
  %2623 = vmatprep.subr.mxu0 0.0
  %2624 = vmatpush1.msra.mxu0 0.0
  %2625 = vmatprep.subr.mxu0 0.0
  %2626 = vmatpush1.msra.mxu0 0.0
  %2627 = vmatprep.subr.mxu0 0.0
  %2628 = vmatpush1.msra.mxu0 0.0
  %2629 = vmatprep.subr.mxu0 0.0
  %2630 = vmatpush1.msra.mxu0 0.0
  %2631 = vmatprep.subr.mxu0 0.0
  %2632 = vmatpush1.msra.mxu0 0.0
  %2633 = vmatprep.subr.mxu0 0.0
  %2634 = vmatpush1.msra.mxu0 0.0
  %2635 = vmatprep.subr.mxu0 0.0
  %2636 = vmatpush1.msra.mxu0 0.0
  %2637 = vmatprep.subr.mxu0 0.0
  %2638 = vmatpush1.msra.mxu0 0.0
  %2639 = vmatprep.subr.mxu0 0.0
  %2640 = vmatpush1.msra.mxu0 0.0
  %2641 = vmatprep.subr.mxu0 0.0
  %2642 = vmatpush1.msra.mxu0 0.0
  %2643 = vmatprep.subr.mxu0 0.0
  %2644 = vmatpush1.msra.mxu0 0.0
  %2645 = vmatprep.subr.mxu0 0.0
  %2646 = vmatpush1.msra.mxu0 0.0
  %2647 = vmatprep.subr.mxu0 0.0
  %2648 = vmatpush1.msra.mxu0 0.0
  %2649 = vmatprep.subr.mxu0 0.0
  %2650 = vmatpush1.msra.mxu0 0.0
  %2651 = vmatprep.subr.mxu0 0.0
  %2652 = vmatpush1.msra.mxu0 0.0
  %2653 = vmatprep.subr.mxu0 0.0
  %2654 = vmatpush1.msra.mxu0 0.0
  %2655 = vmatprep.subr.mxu0 0.0
  %2656 = vmatpush1.msra.mxu0 0.0
  %2657 = vmatprep.subr.mxu0 0.0
  %2658 = vmatpush1.msra.mxu0 0.0
  %2659 = vmatprep.subr.mxu0 0.0
  %2660 = vmatpush1.msra.mxu0 0.0
  %2661 = vmatprep.subr.mxu0 0.0
  %2662 = vmatpush1.msra.mxu0 0.0
  %2663 = vmatprep.subr.mxu0 0.0
  %2664 = vmatpush1.msra.mxu0 0.0
  %2665 = vmatprep.subr.mxu0 0.0
  %2666 = vmatpush1.msra.mxu0 0.0
  %2667 = vmatprep.subr.mxu0 0.0
  %2668 = vmatpush1.msra.mxu0 0.0
  %2669 = vmatprep.subr.mxu0 0.0
  %2670 = vmatpush1.msra.mxu0 0.0
  %2671 = vmatprep.mubr.f32.mxu0 0.0
  %2672 = vmatmul.mubr.f32.gmra.mrb[0].mxu0 %v2605
  %v2673 = vpop.f32.mrb[0].mxu0
  %v2674 = vadd.f32 0.0, %v2673
  %v2675 = vpop.f32.mrb[0].mxu0
  %2676 = vdwg.mxu0
  %v2677 = vadd.f32 %v2604, %v2674
  %v2678 = vxor.u32 %v2677, 2147483648
  %v2679 = vmul.f32 %v2678, 1.442695
  %v2680 = vpow.pop %v2679
  %v2681 = vadd.f32 %v2680, 1.0
  %v2682 = vrcp.pop %v2681
  %v2683 = vmul.f32 1.0, %v2682
  %v2684 = vtanh.pop %v2677
  %v2685 = vmul.f32 %v2683, %v2485
  %2687 = vrot.lane.b32.xlu0 %v2684, 80
  %v2688 = vpop.permute.xlu0 %2687
  %v2690 = vmul.f32 %v2683, %v2688
  %2692 = vrot.lane.b32.xlu0 %v2690, 16
  %v2693 = vpop.permute.xlu0 %2692
  %v2695 = vadd.f32 %v2685, %v2693
  %v2696 = vtanh.pop %v2695
  %2698 = vrot.lane.b32.xlu0 %v2696, 16
  %v2699 = vpop.permute.xlu0 %2698
  %v2701 = vmul.f32 %v2683, %v2699
  %s2702 = scalar_lea.vmem %s44, 6
  %v2703 = vld [vmem:[%s2702] sm:$0x3]
  %v2704 = vsel %vm74, %v2599, 0
  %2706 = vmatprep.subr.mxu0 0.0
  %2707 = vmatpush1.msra.mxu0 %v67
  %2708 = vmatprep.subr.mxu0 0.0
  %2709 = vmatpush1.msra.mxu0 %v68
  %2710 = vmatprep.subr.mxu0 0.0
  %2711 = vmatpush1.msra.mxu0 0.0
  %2712 = vmatprep.subr.mxu0 0.0
  %2713 = vmatpush1.msra.mxu0 0.0
  %2714 = vmatprep.subr.mxu0 0.0
  %2715 = vmatpush1.msra.mxu0 0.0
  %2716 = vmatprep.subr.mxu0 0.0
  %2717 = vmatpush1.msra.mxu0 0.0
  %2718 = vmatprep.subr.mxu0 0.0
  %2719 = vmatpush1.msra.mxu0 0.0
  %2720 = vmatprep.subr.mxu0 0.0
  %2721 = vmatpush1.msra.mxu0 0.0
  %2722 = vmatprep.subr.mxu0 0.0
  %2723 = vmatpush1.msra.mxu0 0.0
  %2724 = vmatprep.subr.mxu0 0.0
  %2725 = vmatpush1.msra.mxu0 0.0
  %2726 = vmatprep.subr.mxu0 0.0
  %2727 = vmatpush1.msra.mxu0 0.0
  %2728 = vmatprep.subr.mxu0 0.0
  %2729 = vmatpush1.msra.mxu0 0.0
  %2730 = vmatprep.subr.mxu0 0.0
  %2731 = vmatpush1.msra.mxu0 0.0
  %2732 = vmatprep.subr.mxu0 0.0
  %2733 = vmatpush1.msra.mxu0 0.0
  %2734 = vmatprep.subr.mxu0 0.0
  %2735 = vmatpush1.msra.mxu0 0.0
  %2736 = vmatprep.subr.mxu0 0.0
  %2737 = vmatpush1.msra.mxu0 0.0
  %2738 = vmatprep.subr.mxu0 0.0
  %2739 = vmatpush1.msra.mxu0 0.0
  %2740 = vmatprep.subr.mxu0 0.0
  %2741 = vmatpush1.msra.mxu0 0.0
  %2742 = vmatprep.subr.mxu0 0.0
  %2743 = vmatpush1.msra.mxu0 0.0
  %2744 = vmatprep.subr.mxu0 0.0
  %2745 = vmatpush1.msra.mxu0 0.0
  %2746 = vmatprep.subr.mxu0 0.0
  %2747 = vmatpush1.msra.mxu0 0.0
  %2748 = vmatprep.subr.mxu0 0.0
  %2749 = vmatpush1.msra.mxu0 0.0
  %2750 = vmatprep.subr.mxu0 0.0
  %2751 = vmatpush1.msra.mxu0 0.0
  %2752 = vmatprep.subr.mxu0 0.0
  %2753 = vmatpush1.msra.mxu0 0.0
  %2754 = vmatprep.subr.mxu0 0.0
  %2755 = vmatpush1.msra.mxu0 0.0
  %2756 = vmatprep.subr.mxu0 0.0
  %2757 = vmatpush1.msra.mxu0 0.0
  %2758 = vmatprep.subr.mxu0 0.0
  %2759 = vmatpush1.msra.mxu0 0.0
  %2760 = vmatprep.subr.mxu0 0.0
  %2761 = vmatpush1.msra.mxu0 0.0
  %2762 = vmatprep.subr.mxu0 0.0
  %2763 = vmatpush1.msra.mxu0 0.0
  %2764 = vmatprep.subr.mxu0 0.0
  %2765 = vmatpush1.msra.mxu0 0.0
  %2766 = vmatprep.subr.mxu0 0.0
  %2767 = vmatpush1.msra.mxu0 0.0
  %2768 = vmatprep.subr.mxu0 0.0
  %2769 = vmatpush1.msra.mxu0 0.0
  %2770 = vmatprep.mubr.f32.mxu0 0.0
  %2771 = vmatmul.mubr.f32.gmra.mrb[0].mxu0 %v2704
  %v2772 = vpop.f32.mrb[0].mxu0
  %v2773 = vadd.f32 0.0, %v2772
  %v2774 = vpop.f32.mrb[0].mxu0
  %2775 = vdwg.mxu0
  %v2776 = vadd.f32 %v2703, %v2773
  %v2777 = vxor.u32 %v2776, 2147483648
  %v2778 = vmul.f32 %v2777, 1.442695
  %v2779 = vpow.pop %v2778
  %v2780 = vadd.f32 %v2779, 1.0
  %v2781 = vrcp.pop %v2780
  %v2782 = vmul.f32 1.0, %v2781
  %v2783 = vtanh.pop %v2776
  %v2784 = vmul.f32 %v2782, %v2584
  %2786 = vrot.lane.b32.xlu0 %v2783, 80
  %v2787 = vpop.permute.xlu0 %2786
  %v2789 = vmul.f32 %v2782, %v2787
  %2791 = vrot.lane.b32.xlu0 %v2789, 16
  %v2792 = vpop.permute.xlu0 %2791
  %v2794 = vadd.f32 %v2784, %v2792
  %v2795 = vtanh.pop %v2794
  %2797 = vrot.lane.b32.xlu0 %v2795, 16
  %v2798 = vpop.permute.xlu0 %2797
  %v2800 = vmul.f32 %v2782, %v2798
  %2802 = vrot.lane.b32.xlu0 %v2701, 96
  %v2803 = vpop.permute.xlu0 %2802
  %s2805 = scalar_lea.vmem %s3, 24
  %2806 = vst.msk [vmem:[%s2805] sm:$0x3] %vm285, %v2803
  %2808 = vrot.lane.b32.xlu0 %v2800, 96
  %v2809 = vpop.permute.xlu0 %2808
  %s2811 = scalar_lea.vmem %s52, 6
  %2812 = vst.msk [vmem:[%s2811] sm:$0x3] %vm285, %v2809
  %s2813 = scalar_lea.vmem %s0, 26
  %v2814 = vld [vmem:[%s2813] sm:$0x3]
  %v2815 = vsel %vm74, %v2803, 0
  %2817 = vmatprep.subr.mxu0 0.0
  %2818 = vmatpush1.msra.mxu0 %v64
  %2819 = vmatprep.subr.mxu0 0.0
  %2820 = vmatpush1.msra.mxu0 %v65
  %2821 = vmatprep.subr.mxu0 0.0
  %2822 = vmatpush1.msra.mxu0 0.0
  %2823 = vmatprep.subr.mxu0 0.0
  %2824 = vmatpush1.msra.mxu0 0.0
  %2825 = vmatprep.subr.mxu0 0.0
  %2826 = vmatpush1.msra.mxu0 0.0
  %2827 = vmatprep.subr.mxu0 0.0
  %2828 = vmatpush1.msra.mxu0 0.0
  %2829 = vmatprep.subr.mxu0 0.0
  %2830 = vmatpush1.msra.mxu0 0.0
  %2831 = vmatprep.subr.mxu0 0.0
  %2832 = vmatpush1.msra.mxu0 0.0
  %2833 = vmatprep.subr.mxu0 0.0
  %2834 = vmatpush1.msra.mxu0 0.0
  %2835 = vmatprep.subr.mxu0 0.0
  %2836 = vmatpush1.msra.mxu0 0.0
  %2837 = vmatprep.subr.mxu0 0.0
  %2838 = vmatpush1.msra.mxu0 0.0
  %2839 = vmatprep.subr.mxu0 0.0
  %2840 = vmatpush1.msra.mxu0 0.0
  %2841 = vmatprep.subr.mxu0 0.0
  %2842 = vmatpush1.msra.mxu0 0.0
  %2843 = vmatprep.subr.mxu0 0.0
  %2844 = vmatpush1.msra.mxu0 0.0
  %2845 = vmatprep.subr.mxu0 0.0
  %2846 = vmatpush1.msra.mxu0 0.0
  %2847 = vmatprep.subr.mxu0 0.0
  %2848 = vmatpush1.msra.mxu0 0.0
  %2849 = vmatprep.subr.mxu0 0.0
  %2850 = vmatpush1.msra.mxu0 0.0
  %2851 = vmatprep.subr.mxu0 0.0
  %2852 = vmatpush1.msra.mxu0 0.0
  %2853 = vmatprep.subr.mxu0 0.0
  %2854 = vmatpush1.msra.mxu0 0.0
  %2855 = vmatprep.subr.mxu0 0.0
  %2856 = vmatpush1.msra.mxu0 0.0
  %2857 = vmatprep.subr.mxu0 0.0
  %2858 = vmatpush1.msra.mxu0 0.0
  %2859 = vmatprep.subr.mxu0 0.0
  %2860 = vmatpush1.msra.mxu0 0.0
  %2861 = vmatprep.subr.mxu0 0.0
  %2862 = vmatpush1.msra.mxu0 0.0
  %2863 = vmatprep.subr.mxu0 0.0
  %2864 = vmatpush1.msra.mxu0 0.0
  %2865 = vmatprep.subr.mxu0 0.0
  %2866 = vmatpush1.msra.mxu0 0.0
  %2867 = vmatprep.subr.mxu0 0.0
  %2868 = vmatpush1.msra.mxu0 0.0
  %2869 = vmatprep.subr.mxu0 0.0
  %2870 = vmatpush1.msra.mxu0 0.0
  %2871 = vmatprep.subr.mxu0 0.0
  %2872 = vmatpush1.msra.mxu0 0.0
  %2873 = vmatprep.subr.mxu0 0.0
  %2874 = vmatpush1.msra.mxu0 0.0
  %2875 = vmatprep.subr.mxu0 0.0
  %2876 = vmatpush1.msra.mxu0 0.0
  %2877 = vmatprep.subr.mxu0 0.0
  %2878 = vmatpush1.msra.mxu0 0.0
  %2879 = vmatprep.subr.mxu0 0.0
  %2880 = vmatpush1.msra.mxu0 0.0
  %2881 = vmatprep.mubr.f32.mxu0 0.0
  %2882 = vmatmul.mubr.f32.gmra.mrb[0].mxu0 %v2815
  %v2883 = vpop.f32.mrb[0].mxu0
  %v2884 = vadd.f32 0.0, %v2883
  %v2885 = vpop.f32.mrb[0].mxu0
  %2886 = vdwg.mxu0
  %v2887 = vadd.f32 %v2814, %v2884
  %v2888 = vxor.u32 %v2887, 2147483648
  %v2889 = vmul.f32 %v2888, 1.442695
  %v2890 = vpow.pop %v2889
  %v2891 = vadd.f32 %v2890, 1.0
  %v2892 = vrcp.pop %v2891
  %v2893 = vmul.f32 1.0, %v2892
  %v2894 = vtanh.pop %v2887
  %v2895 = vmul.f32 %v2893, %v2695
  %2897 = vrot.lane.b32.xlu0 %v2894, 80
  %v2898 = vpop.permute.xlu0 %2897
  %v2900 = vmul.f32 %v2893, %v2898
  %2902 = vrot.lane.b32.xlu0 %v2900, 16
  %v2903 = vpop.permute.xlu0 %2902
  %v2905 = vadd.f32 %v2895, %v2903
  %v2906 = vtanh.pop %v2905
  %2908 = vrot.lane.b32.xlu0 %v2906, 16
  %v2909 = vpop.permute.xlu0 %2908
  %v2911 = vmul.f32 %v2893, %v2909
  %s2912 = scalar_lea.vmem %s44, 4
  %v2913 = vld [vmem:[%s2912] sm:$0x3]
  %v2914 = vsel %vm74, %v2809, 0
  %2916 = vmatprep.subr.mxu0 0.0
  %2917 = vmatpush1.msra.mxu0 %v67
  %2918 = vmatprep.subr.mxu0 0.0
  %2919 = vmatpush1.msra.mxu0 %v68
  %2920 = vmatprep.subr.mxu0 0.0
  %2921 = vmatpush1.msra.mxu0 0.0
  %2922 = vmatprep.subr.mxu0 0.0
  %2923 = vmatpush1.msra.mxu0 0.0
  %2924 = vmatprep.subr.mxu0 0.0
  %2925 = vmatpush1.msra.mxu0 0.0
  %2926 = vmatprep.subr.mxu0 0.0
  %2927 = vmatpush1.msra.mxu0 0.0
  %2928 = vmatprep.subr.mxu0 0.0
  %2929 = vmatpush1.msra.mxu0 0.0
  %2930 = vmatprep.subr.mxu0 0.0
  %2931 = vmatpush1.msra.mxu0 0.0
  %2932 = vmatprep.subr.mxu0 0.0
  %2933 = vmatpush1.msra.mxu0 0.0
  %2934 = vmatprep.subr.mxu0 0.0
  %2935 = vmatpush1.msra.mxu0 0.0
  %2936 = vmatprep.subr.mxu0 0.0
  %2937 = vmatpush1.msra.mxu0 0.0
  %2938 = vmatprep.subr.mxu0 0.0
  %2939 = vmatpush1.msra.mxu0 0.0
  %2940 = vmatprep.subr.mxu0 0.0
  %2941 = vmatpush1.msra.mxu0 0.0
  %2942 = vmatprep.subr.mxu0 0.0
  %2943 = vmatpush1.msra.mxu0 0.0
  %2944 = vmatprep.subr.mxu0 0.0
  %2945 = vmatpush1.msra.mxu0 0.0
  %2946 = vmatprep.subr.mxu0 0.0
  %2947 = vmatpush1.msra.mxu0 0.0
  %2948 = vmatprep.subr.mxu0 0.0
  %2949 = vmatpush1.msra.mxu0 0.0
  %2950 = vmatprep.subr.mxu0 0.0
  %2951 = vmatpush1.msra.mxu0 0.0
  %2952 = vmatprep.subr.mxu0 0.0
  %2953 = vmatpush1.msra.mxu0 0.0
  %2954 = vmatprep.subr.mxu0 0.0
  %2955 = vmatpush1.msra.mxu0 0.0
  %2956 = vmatprep.subr.mxu0 0.0
  %2957 = vmatpush1.msra.mxu0 0.0
  %2958 = vmatprep.subr.mxu0 0.0
  %2959 = vmatpush1.msra.mxu0 0.0
  %2960 = vmatprep.subr.mxu0 0.0
  %2961 = vmatpush1.msra.mxu0 0.0
  %2962 = vmatprep.subr.mxu0 0.0
  %2963 = vmatpush1.msra.mxu0 0.0
  %2964 = vmatprep.subr.mxu0 0.0
  %2965 = vmatpush1.msra.mxu0 0.0
  %2966 = vmatprep.subr.mxu0 0.0
  %2967 = vmatpush1.msra.mxu0 0.0
  %2968 = vmatprep.subr.mxu0 0.0
  %2969 = vmatpush1.msra.mxu0 0.0
  %2970 = vmatprep.subr.mxu0 0.0
  %2971 = vmatpush1.msra.mxu0 0.0
  %2972 = vmatprep.subr.mxu0 0.0
  %2973 = vmatpush1.msra.mxu0 0.0
  %2974 = vmatprep.subr.mxu0 0.0
  %2975 = vmatpush1.msra.mxu0 0.0
  %2976 = vmatprep.subr.mxu0 0.0
  %2977 = vmatpush1.msra.mxu0 0.0
  %2978 = vmatprep.subr.mxu0 0.0
  %2979 = vmatpush1.msra.mxu0 0.0
  %2980 = vmatprep.mubr.f32.mxu0 0.0
  %2981 = vmatmul.mubr.f32.gmra.mrb[0].mxu0 %v2914
  %v2982 = vpop.f32.mrb[0].mxu0
  %v2983 = vadd.f32 0.0, %v2982
  %v2984 = vpop.f32.mrb[0].mxu0
  %2985 = vdwg.mxu0
  %v2986 = vadd.f32 %v2913, %v2983
  %v2987 = vxor.u32 %v2986, 2147483648
  %v2988 = vmul.f32 %v2987, 1.442695
  %v2989 = vpow.pop %v2988
  %v2990 = vadd.f32 %v2989, 1.0
  %v2991 = vrcp.pop %v2990
  %v2992 = vmul.f32 1.0, %v2991
  %v2993 = vtanh.pop %v2986
  %v2994 = vmul.f32 %v2992, %v2794
  %2996 = vrot.lane.b32.xlu0 %v2993, 80
  %v2997 = vpop.permute.xlu0 %2996
  %v2999 = vmul.f32 %v2992, %v2997
  %3001 = vrot.lane.b32.xlu0 %v2999, 16
  %v3002 = vpop.permute.xlu0 %3001
  %v3004 = vadd.f32 %v2994, %v3002
  %v3005 = vtanh.pop %v3004
  %3007 = vrot.lane.b32.xlu0 %v3005, 16
  %v3008 = vpop.permute.xlu0 %3007
  %v3010 = vmul.f32 %v2992, %v3008
  %3012 = vrot.lane.b32.xlu0 %v2911, 96
  %v3013 = vpop.permute.xlu0 %3012
  %s3015 = scalar_lea.vmem %s3, 26
  %3016 = vst.msk [vmem:[%s3015] sm:$0x3] %vm285, %v3013
  %3018 = vrot.lane.b32.xlu0 %v3010, 96
  %v3019 = vpop.permute.xlu0 %3018
  %s3021 = scalar_lea.vmem %s52, 4
  %3022 = vst.msk [vmem:[%s3021] sm:$0x3] %vm285, %v3019
  %s3023 = scalar_lea.vmem %s0, 28
  %v3024 = vld [vmem:[%s3023] sm:$0x3]
  %v3025 = vsel %vm74, %v3013, 0
  %3027 = vmatprep.subr.mxu0 0.0
  %3028 = vmatpush1.msra.mxu0 %v64
  %3029 = vmatprep.subr.mxu0 0.0
  %3030 = vmatpush1.msra.mxu0 %v65
  %3031 = vmatprep.subr.mxu0 0.0
  %3032 = vmatpush1.msra.mxu0 0.0
  %3033 = vmatprep.subr.mxu0 0.0
  %3034 = vmatpush1.msra.mxu0 0.0
  %3035 = vmatprep.subr.mxu0 0.0
  %3036 = vmatpush1.msra.mxu0 0.0
  %3037 = vmatprep.subr.mxu0 0.0
  %3038 = vmatpush1.msra.mxu0 0.0
  %3039 = vmatprep.subr.mxu0 0.0
  %3040 = vmatpush1.msra.mxu0 0.0
  %3041 = vmatprep.subr.mxu0 0.0
  %3042 = vmatpush1.msra.mxu0 0.0
  %3043 = vmatprep.subr.mxu0 0.0
  %3044 = vmatpush1.msra.mxu0 0.0
  %3045 = vmatprep.subr.mxu0 0.0
  %3046 = vmatpush1.msra.mxu0 0.0
  %3047 = vmatprep.subr.mxu0 0.0
  %3048 = vmatpush1.msra.mxu0 0.0
  %3049 = vmatprep.subr.mxu0 0.0
  %3050 = vmatpush1.msra.mxu0 0.0
  %3051 = vmatprep.subr.mxu0 0.0
  %3052 = vmatpush1.msra.mxu0 0.0
  %3053 = vmatprep.subr.mxu0 0.0
  %3054 = vmatpush1.msra.mxu0 0.0
  %3055 = vmatprep.subr.mxu0 0.0
  %3056 = vmatpush1.msra.mxu0 0.0
  %3057 = vmatprep.subr.mxu0 0.0
  %3058 = vmatpush1.msra.mxu0 0.0
  %3059 = vmatprep.subr.mxu0 0.0
  %3060 = vmatpush1.msra.mxu0 0.0
  %3061 = vmatprep.subr.mxu0 0.0
  %3062 = vmatpush1.msra.mxu0 0.0
  %3063 = vmatprep.subr.mxu0 0.0
  %3064 = vmatpush1.msra.mxu0 0.0
  %3065 = vmatprep.subr.mxu0 0.0
  %3066 = vmatpush1.msra.mxu0 0.0
  %3067 = vmatprep.subr.mxu0 0.0
  %3068 = vmatpush1.msra.mxu0 0.0
  %3069 = vmatprep.subr.mxu0 0.0
  %3070 = vmatpush1.msra.mxu0 0.0
  %3071 = vmatprep.subr.mxu0 0.0
  %3072 = vmatpush1.msra.mxu0 0.0
  %3073 = vmatprep.subr.mxu0 0.0
  %3074 = vmatpush1.msra.mxu0 0.0
  %3075 = vmatprep.subr.mxu0 0.0
  %3076 = vmatpush1.msra.mxu0 0.0
  %3077 = vmatprep.subr.mxu0 0.0
  %3078 = vmatpush1.msra.mxu0 0.0
  %3079 = vmatprep.subr.mxu0 0.0
  %3080 = vmatpush1.msra.mxu0 0.0
  %3081 = vmatprep.subr.mxu0 0.0
  %3082 = vmatpush1.msra.mxu0 0.0
  %3083 = vmatprep.subr.mxu0 0.0
  %3084 = vmatpush1.msra.mxu0 0.0
  %3085 = vmatprep.subr.mxu0 0.0
  %3086 = vmatpush1.msra.mxu0 0.0
  %3087 = vmatprep.subr.mxu0 0.0
  %3088 = vmatpush1.msra.mxu0 0.0
  %3089 = vmatprep.subr.mxu0 0.0
  %3090 = vmatpush1.msra.mxu0 0.0
  %3091 = vmatprep.mubr.f32.mxu0 0.0
  %3092 = vmatmul.mubr.f32.gmra.mrb[0].mxu0 %v3025
  %v3093 = vpop.f32.mrb[0].mxu0
  %v3094 = vadd.f32 0.0, %v3093
  %v3095 = vpop.f32.mrb[0].mxu0
  %3096 = vdwg.mxu0
  %v3097 = vadd.f32 %v3024, %v3094
  %v3098 = vxor.u32 %v3097, 2147483648
  %v3099 = vmul.f32 %v3098, 1.442695
  %v3100 = vpow.pop %v3099
  %v3101 = vadd.f32 %v3100, 1.0
  %v3102 = vrcp.pop %v3101
  %v3103 = vmul.f32 1.0, %v3102
  %v3104 = vtanh.pop %v3097
  %v3105 = vmul.f32 %v3103, %v2905
  %3107 = vrot.lane.b32.xlu0 %v3104, 80
  %v3108 = vpop.permute.xlu0 %3107
  %v3110 = vmul.f32 %v3103, %v3108
  %3112 = vrot.lane.b32.xlu0 %v3110, 16
  %v3113 = vpop.permute.xlu0 %3112
  %v3115 = vadd.f32 %v3105, %v3113
  %v3116 = vtanh.pop %v3115
  %3118 = vrot.lane.b32.xlu0 %v3116, 16
  %v3119 = vpop.permute.xlu0 %3118
  %v3121 = vmul.f32 %v3103, %v3119
  %s3122 = scalar_lea.vmem %s44, 2
  %v3123 = vld [vmem:[%s3122] sm:$0x3]
  %v3124 = vsel %vm74, %v3019, 0
  %3126 = vmatprep.subr.mxu0 0.0
  %3127 = vmatpush1.msra.mxu0 %v67
  %3128 = vmatprep.subr.mxu0 0.0
  %3129 = vmatpush1.msra.mxu0 %v68
  %3130 = vmatprep.subr.mxu0 0.0
  %3131 = vmatpush1.msra.mxu0 0.0
  %3132 = vmatprep.subr.mxu0 0.0
  %3133 = vmatpush1.msra.mxu0 0.0
  %3134 = vmatprep.subr.mxu0 0.0
  %3135 = vmatpush1.msra.mxu0 0.0
  %3136 = vmatprep.subr.mxu0 0.0
  %3137 = vmatpush1.msra.mxu0 0.0
  %3138 = vmatprep.subr.mxu0 0.0
  %3139 = vmatpush1.msra.mxu0 0.0
  %3140 = vmatprep.subr.mxu0 0.0
  %3141 = vmatpush1.msra.mxu0 0.0
  %3142 = vmatprep.subr.mxu0 0.0
  %3143 = vmatpush1.msra.mxu0 0.0
  %3144 = vmatprep.subr.mxu0 0.0
  %3145 = vmatpush1.msra.mxu0 0.0
  %3146 = vmatprep.subr.mxu0 0.0
  %3147 = vmatpush1.msra.mxu0 0.0
  %3148 = vmatprep.subr.mxu0 0.0
  %3149 = vmatpush1.msra.mxu0 0.0
  %3150 = vmatprep.subr.mxu0 0.0
  %3151 = vmatpush1.msra.mxu0 0.0
  %3152 = vmatprep.subr.mxu0 0.0
  %3153 = vmatpush1.msra.mxu0 0.0
  %3154 = vmatprep.subr.mxu0 0.0
  %3155 = vmatpush1.msra.mxu0 0.0
  %3156 = vmatprep.subr.mxu0 0.0
  %3157 = vmatpush1.msra.mxu0 0.0
  %3158 = vmatprep.subr.mxu0 0.0
  %3159 = vmatpush1.msra.mxu0 0.0
  %3160 = vmatprep.subr.mxu0 0.0
  %3161 = vmatpush1.msra.mxu0 0.0
  %3162 = vmatprep.subr.mxu0 0.0
  %3163 = vmatpush1.msra.mxu0 0.0
  %3164 = vmatprep.subr.mxu0 0.0
  %3165 = vmatpush1.msra.mxu0 0.0
  %3166 = vmatprep.subr.mxu0 0.0
  %3167 = vmatpush1.msra.mxu0 0.0
  %3168 = vmatprep.subr.mxu0 0.0
  %3169 = vmatpush1.msra.mxu0 0.0
  %3170 = vmatprep.subr.mxu0 0.0
  %3171 = vmatpush1.msra.mxu0 0.0
  %3172 = vmatprep.subr.mxu0 0.0
  %3173 = vmatpush1.msra.mxu0 0.0
  %3174 = vmatprep.subr.mxu0 0.0
  %3175 = vmatpush1.msra.mxu0 0.0
  %3176 = vmatprep.subr.mxu0 0.0
  %3177 = vmatpush1.msra.mxu0 0.0
  %3178 = vmatprep.subr.mxu0 0.0
  %3179 = vmatpush1.msra.mxu0 0.0
  %3180 = vmatprep.subr.mxu0 0.0
  %3181 = vmatpush1.msra.mxu0 0.0
  %3182 = vmatprep.subr.mxu0 0.0
  %3183 = vmatpush1.msra.mxu0 0.0
  %3184 = vmatprep.subr.mxu0 0.0
  %3185 = vmatpush1.msra.mxu0 0.0
  %3186 = vmatprep.subr.mxu0 0.0
  %3187 = vmatpush1.msra.mxu0 0.0
  %3188 = vmatprep.subr.mxu0 0.0
  %3189 = vmatpush1.msra.mxu0 0.0
  %3190 = vmatprep.mubr.f32.mxu0 0.0
  %3191 = vmatmul.mubr.f32.gmra.mrb[0].mxu0 %v3124
  %v3192 = vpop.f32.mrb[0].mxu0
  %v3193 = vadd.f32 0.0, %v3192
  %v3194 = vpop.f32.mrb[0].mxu0
  %3195 = vdwg.mxu0
  %v3196 = vadd.f32 %v3123, %v3193
  %v3197 = vxor.u32 %v3196, 2147483648
  %v3198 = vmul.f32 %v3197, 1.442695
  %v3199 = vpow.pop %v3198
  %v3200 = vadd.f32 %v3199, 1.0
  %v3201 = vrcp.pop %v3200
  %v3202 = vmul.f32 1.0, %v3201
  %v3203 = vtanh.pop %v3196
  %v3204 = vmul.f32 %v3202, %v3004
  %3206 = vrot.lane.b32.xlu0 %v3203, 80
  %v3207 = vpop.permute.xlu0 %3206
  %v3209 = vmul.f32 %v3202, %v3207
  %3211 = vrot.lane.b32.xlu0 %v3209, 16
  %v3212 = vpop.permute.xlu0 %3211
  %v3214 = vadd.f32 %v3204, %v3212
  %v3215 = vtanh.pop %v3214
  %3217 = vrot.lane.b32.xlu0 %v3215, 16
  %v3218 = vpop.permute.xlu0 %3217
  %v3220 = vmul.f32 %v3202, %v3218
  %3222 = vrot.lane.b32.xlu0 %v3121, 96
  %v3223 = vpop.permute.xlu0 %3222
  %s3225 = scalar_lea.vmem %s3, 28
  %3226 = vst.msk [vmem:[%s3225] sm:$0x3] %vm285, %v3223
  %3228 = vrot.lane.b32.xlu0 %v3220, 96
  %v3229 = vpop.permute.xlu0 %3228
  %s3231 = scalar_lea.vmem %s52, 2
  %3232 = vst.msk [vmem:[%s3231] sm:$0x3] %vm285, %v3229
  %s3233 = scalar_lea.vmem %s0, 30
  %v3234 = vld [vmem:[%s3233] sm:$0x3]
  %v3235 = vsel %vm74, %v3223, 0
  %3237 = vmatprep.subr.mxu0 0.0
  %3238 = vmatpush1.msra.mxu0 %v64
  %3239 = vmatprep.subr.mxu0 0.0
  %3240 = vmatpush1.msra.mxu0 %v65
  %3241 = vmatprep.subr.mxu0 0.0
  %3242 = vmatpush1.msra.mxu0 0.0
  %3243 = vmatprep.subr.mxu0 0.0
  %3244 = vmatpush1.msra.mxu0 0.0
  %3245 = vmatprep.subr.mxu0 0.0
  %3246 = vmatpush1.msra.mxu0 0.0
  %3247 = vmatprep.subr.mxu0 0.0
  %3248 = vmatpush1.msra.mxu0 0.0
  %3249 = vmatprep.subr.mxu0 0.0
  %3250 = vmatpush1.msra.mxu0 0.0
  %3251 = vmatprep.subr.mxu0 0.0
  %3252 = vmatpush1.msra.mxu0 0.0
  %3253 = vmatprep.subr.mxu0 0.0
  %3254 = vmatpush1.msra.mxu0 0.0
  %3255 = vmatprep.subr.mxu0 0.0
  %3256 = vmatpush1.msra.mxu0 0.0
  %3257 = vmatprep.subr.mxu0 0.0
  %3258 = vmatpush1.msra.mxu0 0.0
  %3259 = vmatprep.subr.mxu0 0.0
  %3260 = vmatpush1.msra.mxu0 0.0
  %3261 = vmatprep.subr.mxu0 0.0
  %3262 = vmatpush1.msra.mxu0 0.0
  %3263 = vmatprep.subr.mxu0 0.0
  %3264 = vmatpush1.msra.mxu0 0.0
  %3265 = vmatprep.subr.mxu0 0.0
  %3266 = vmatpush1.msra.mxu0 0.0
  %3267 = vmatprep.subr.mxu0 0.0
  %3268 = vmatpush1.msra.mxu0 0.0
  %3269 = vmatprep.subr.mxu0 0.0
  %3270 = vmatpush1.msra.mxu0 0.0
  %3271 = vmatprep.subr.mxu0 0.0
  %3272 = vmatpush1.msra.mxu0 0.0
  %3273 = vmatprep.subr.mxu0 0.0
  %3274 = vmatpush1.msra.mxu0 0.0
  %3275 = vmatprep.subr.mxu0 0.0
  %3276 = vmatpush1.msra.mxu0 0.0
  %3277 = vmatprep.subr.mxu0 0.0
  %3278 = vmatpush1.msra.mxu0 0.0
  %3279 = vmatprep.subr.mxu0 0.0
  %3280 = vmatpush1.msra.mxu0 0.0
  %3281 = vmatprep.subr.mxu0 0.0
  %3282 = vmatpush1.msra.mxu0 0.0
  %3283 = vmatprep.subr.mxu0 0.0
  %3284 = vmatpush1.msra.mxu0 0.0
  %3285 = vmatprep.subr.mxu0 0.0
  %3286 = vmatpush1.msra.mxu0 0.0
  %3287 = vmatprep.subr.mxu0 0.0
  %3288 = vmatpush1.msra.mxu0 0.0
  %3289 = vmatprep.subr.mxu0 0.0
  %3290 = vmatpush1.msra.mxu0 0.0
  %3291 = vmatprep.subr.mxu0 0.0
  %3292 = vmatpush1.msra.mxu0 0.0
  %3293 = vmatprep.subr.mxu0 0.0
  %3294 = vmatpush1.msra.mxu0 0.0
  %3295 = vmatprep.subr.mxu0 0.0
  %3296 = vmatpush1.msra.mxu0 0.0
  %3297 = vmatprep.subr.mxu0 0.0
  %3298 = vmatpush1.msra.mxu0 0.0
  %3299 = vmatprep.subr.mxu0 0.0
  %3300 = vmatpush1.msra.mxu0 0.0
  %3301 = vmatprep.mubr.f32.mxu0 0.0
  %3302 = vmatmul.mubr.f32.gmra.mrb[0].mxu0 %v3235
  %v3303 = vpop.f32.mrb[0].mxu0
  %v3304 = vadd.f32 0.0, %v3303
  %v3305 = vpop.f32.mrb[0].mxu0
  %3306 = vdwg.mxu0
  %v3307 = vadd.f32 %v3234, %v3304
  %v3308 = vxor.u32 %v3307, 2147483648
  %v3309 = vmul.f32 %v3308, 1.442695
  %v3310 = vpow.pop %v3309
  %v3311 = vadd.f32 %v3310, 1.0
  %v3312 = vrcp.pop %v3311
  %v3313 = vmul.f32 1.0, %v3312
  %v3314 = vtanh.pop %v3307
  %v3315 = vmul.f32 %v3313, %v3115
  %3317 = vrot.lane.b32.xlu0 %v3314, 80
  %v3318 = vpop.permute.xlu0 %3317
  %v3320 = vmul.f32 %v3313, %v3318
  %3322 = vrot.lane.b32.xlu0 %v3320, 16
  %v3323 = vpop.permute.xlu0 %3322
  %v3325 = vadd.f32 %v3315, %v3323
  %v3326 = vtanh.pop %v3325
  %3328 = vrot.lane.b32.xlu0 %v3326, 16
  %v3329 = vpop.permute.xlu0 %3328
  %v3331 = vmul.f32 %v3313, %v3329
  %v3332 = vld [vmem:[%s44] sm:$0x3]
  %v3333 = vsel %vm74, %v3229, 0
  %3335 = vmatprep.subr.mxu0 0.0
  %3336 = vmatpush1.msra.mxu0 %v67
  %3337 = vmatprep.subr.mxu0 0.0
  %3338 = vmatpush1.msra.mxu0 %v68
  %3339 = vmatprep.subr.mxu0 0.0
  %3340 = vmatpush1.msra.mxu0 0.0
  %3341 = vmatprep.subr.mxu0 0.0
  %3342 = vmatpush1.msra.mxu0 0.0
  %3343 = vmatprep.subr.mxu0 0.0
  %3344 = vmatpush1.msra.mxu0 0.0
  %3345 = vmatprep.subr.mxu0 0.0
  %3346 = vmatpush1.msra.mxu0 0.0
  %3347 = vmatprep.subr.mxu0 0.0
  %3348 = vmatpush1.msra.mxu0 0.0
  %3349 = vmatprep.subr.mxu0 0.0
  %3350 = vmatpush1.msra.mxu0 0.0
  %3351 = vmatprep.subr.mxu0 0.0
  %3352 = vmatpush1.msra.mxu0 0.0
  %3353 = vmatprep.subr.mxu0 0.0
  %3354 = vmatpush1.msra.mxu0 0.0
  %3355 = vmatprep.subr.mxu0 0.0
  %3356 = vmatpush1.msra.mxu0 0.0
  %3357 = vmatprep.subr.mxu0 0.0
  %3358 = vmatpush1.msra.mxu0 0.0
  %3359 = vmatprep.subr.mxu0 0.0
  %3360 = vmatpush1.msra.mxu0 0.0
  %3361 = vmatprep.subr.mxu0 0.0
  %3362 = vmatpush1.msra.mxu0 0.0
  %3363 = vmatprep.subr.mxu0 0.0
  %3364 = vmatpush1.msra.mxu0 0.0
  %3365 = vmatprep.subr.mxu0 0.0
  %3366 = vmatpush1.msra.mxu0 0.0
  %3367 = vmatprep.subr.mxu0 0.0
  %3368 = vmatpush1.msra.mxu0 0.0
  %3369 = vmatprep.subr.mxu0 0.0
  %3370 = vmatpush1.msra.mxu0 0.0
  %3371 = vmatprep.subr.mxu0 0.0
  %3372 = vmatpush1.msra.mxu0 0.0
  %3373 = vmatprep.subr.mxu0 0.0
  %3374 = vmatpush1.msra.mxu0 0.0
  %3375 = vmatprep.subr.mxu0 0.0
  %3376 = vmatpush1.msra.mxu0 0.0
  %3377 = vmatprep.subr.mxu0 0.0
  %3378 = vmatpush1.msra.mxu0 0.0
  %3379 = vmatprep.subr.mxu0 0.0
  %3380 = vmatpush1.msra.mxu0 0.0
  %3381 = vmatprep.subr.mxu0 0.0
  %3382 = vmatpush1.msra.mxu0 0.0
  %3383 = vmatprep.subr.mxu0 0.0
  %3384 = vmatpush1.msra.mxu0 0.0
  %3385 = vmatprep.subr.mxu0 0.0
  %3386 = vmatpush1.msra.mxu0 0.0
  %3387 = vmatprep.subr.mxu0 0.0
  %3388 = vmatpush1.msra.mxu0 0.0
  %3389 = vmatprep.subr.mxu0 0.0
  %3390 = vmatpush1.msra.mxu0 0.0
  %3391 = vmatprep.subr.mxu0 0.0
  %3392 = vmatpush1.msra.mxu0 0.0
  %3393 = vmatprep.subr.mxu0 0.0
  %3394 = vmatpush1.msra.mxu0 0.0
  %3395 = vmatprep.subr.mxu0 0.0
  %3396 = vmatpush1.msra.mxu0 0.0
  %3397 = vmatprep.subr.mxu0 0.0
  %3398 = vmatpush1.msra.mxu0 0.0
  %3399 = vmatprep.mubr.f32.mxu0 0.0
  %3400 = vmatmul.mubr.f32.gmra.mrb[0].mxu0 %v3333
  %v3401 = vpop.f32.mrb[0].mxu0
  %v3402 = vadd.f32 0.0, %v3401
  %v3403 = vpop.f32.mrb[0].mxu0
  %3404 = vdwg.mxu0
  %v3405 = vadd.f32 %v3332, %v3402
  %v3406 = vxor.u32 %v3405, 2147483648
  %v3407 = vmul.f32 %v3406, 1.442695
  %v3408 = vpow.pop %v3407
  %v3409 = vadd.f32 %v3408, 1.0
  %v3410 = vrcp.pop %v3409
  %v3411 = vmul.f32 1.0, %v3410
  %v3412 = vtanh.pop %v3405
  %v3413 = vmul.f32 %v3411, %v3214
  %3415 = vrot.lane.b32.xlu0 %v3412, 80
  %v3416 = vpop.permute.xlu0 %3415
  %v3418 = vmul.f32 %v3411, %v3416
  %3420 = vrot.lane.b32.xlu0 %v3418, 16
  %v3421 = vpop.permute.xlu0 %3420
  %v3423 = vadd.f32 %v3413, %v3421
  %v3424 = vtanh.pop %v3423
  %3426 = vrot.lane.b32.xlu0 %v3424, 16
  %v3427 = vpop.permute.xlu0 %3426
  %v3429 = vmul.f32 %v3411, %v3427
  %3431 = vrot.lane.b32.xlu0 %v3331, 96
  %v3432 = vpop.permute.xlu0 %3431
  %s3434 = scalar_lea.vmem %s3, 30
  %3435 = vst.msk [vmem:[%s3434] sm:$0x3] %vm285, %v3432
  %3437 = vrot.lane.b32.xlu0 %v3429, 96
  %v3438 = vpop.permute.xlu0 %3437
  %3440 = vst.msk [vmem:[%s52] sm:$0x3] %vm285, %v3438
  %3441 = vst.msk [vmem:[#allocation2] sm:$0x3] %vm285, %v3432
  %3443 = vrot.lane.b32.xlu0 %v3325, 112
  %v3444 = vpop.permute.xlu0 %3443
  %3446 = vst.msk [vmem:[#allocation3] sm:$0x3] %vm285, %v3444
  %3447 = vst.msk [vmem:[#allocation4] sm:$0x3] %vm285, %v3438
  %3449 = vrot.lane.b32.xlu0 %v3423, 112
  %v3450 = vpop.permute.xlu0 %3449
  %3452 = vst.msk [vmem:[#allocation5] sm:$0x3] %vm285, %v3450
  %s3453 = ssub.s32 0, 0
  %s3454 = smul.u32 16, %s3453
  %p3455 = scmp.lt.s32.totalorder %s3454, 15
  %s3456 = scalar_select %p3455, %s3454, 15
  %s3457 = smul.addr %s3456, 2
  %s3458 = scalar_lea.vmem %s4, %s3457
  // Predicated region
  $region18: #{separator_apply.6} parent=0 // pred_check
    _
  $region19: #{separator_apply.6} parent=0 // pred_check_branch
    %3460 = sbr.rel (0) target = $region21
  $region20: #{separator_apply.6} parent=0 // pred_region
    _
  $region21: #{separator_apply.6} parent=0 // pred_fallthru
    _
  // Predicated region
  $region22: #{separator_apply.6} parent=0 // pred_check
    _
  $region23: #{separator_apply.6} parent=0 // pred_check_branch
    %3462 = sbr.rel (0) target = $region25
  $region24: #{separator_apply.6} parent=0 // pred_region
    %s3463 = ssub.s32 0, 0
    %s3464 = smul.u32 16, %s3463
  $region25: #{separator_apply.6} parent=0 // pred_fallthru
    _
  // Predicated region
  $region26: #{separator_apply.6} parent=0 // pred_check
    _
  $region27: #{separator_apply.6} parent=0 // pred_check_branch
    %3466 = sbr.rel (0) target = $region29
  $region28: #{separator_apply.6} parent=0 // pred_region
    _
  $region29: #{separator_apply.6} parent=0 // pred_fallthru
    _
  // Predicated region
  $region30: #{separator_apply.6} parent=0 // pred_check
    _
  $region31: #{separator_apply.6} parent=0 // pred_check_branch
    %3468 = sbr.rel (0) target = $region33
  $region32: #{separator_apply.6} parent=0 // pred_region
    %s3469 = ssub.s32 0, 0
    %s3470 = smul.u32 16, %s3469
    %p3471 = scmp.lt.s32.totalorder %s3470, 15
    %s3472 = scalar_select %p3471, %s3470, 15
    %s3473 = smul.addr %s3472, 2
    %s3474 = scalar_lea.vmem %s4, %s3473
  $region33: #{separator_apply.6} parent=0 // pred_fallthru
    _

</llo_original>
